<compile_context>
chip_gen: v5e
topology: v5e:2x2
jax: 0.10.0
libtpu: 0.0.40
codegen_flags: <defaults>
</compile_context>

<pallas_src>
import jax
import jax.numpy as jnp
from jax import lax
from jax.experimental import pallas as pl
from jax.experimental.pallas import tpu as pltpu

# Static sizes implied by the module (16x16 RGB input).
H1 = W1 = 16
HW1 = H1 * W1          # 256
H2 = W2 = 8
HW2 = H2 * W2          # 64
H3 = W3 = 4
HW3 = H3 * W3          # 16
C0, C1, C2 = 3, 16, 4  # input / conv1 / conv2 (== encoded) channels
D1C, D2C = 16, 3       # deconv1 / deconv2 output channels
PAD1 = W1 + 1          # zero-halo rows (top+bottom) for conv1 tap shifts
PAD2 = W2 + 1          # zero-halo rows for conv2 tap shifts


# ---------------------------------------------------------------------------
# In-kernel helpers (operate on VMEM refs holding flattened (H*W, C) images)
# ---------------------------------------------------------------------------
def _conv3x3_relu(xpad_ref, w_ref, b_ref, *, W, HW, Cin, Cout, pad):
    """3x3 'same' conv + bias + ReLU on a flattened image with a zero halo.

    xpad_ref : (pad + H*W + pad, Cin) VMEM ref; rows [pad, pad+HW) hold the image.
    w_ref    : (9, Cin, Cout) ref, taps (ky, kx) row-major, matching PyTorch weights.
    b_ref    : (1, Cout) ref.
    Returns an (HW, Cout) f32 value.
    """
    # x-coordinate of every flattened pixel (W is a power of two here).
    xcoord = lax.broadcasted_iota(jnp.int32, (HW, Cin), 0) & (W - 1)
    not_left = xcoord != 0            # reading x-1 is valid
    not_right = xcoord != (W - 1)     # reading x+1 is valid

    acc = jnp.zeros((HW, Cout), jnp.float32)
    for ky in range(3):
        for kx in range(3):
            off = (ky - 1) * W + (kx - 1)
            tap = xpad_ref[pl.ds(pad + off, HW), :]          # shifted view, zero halo
            if kx == 0:
                tap = jnp.where(not_left, tap, 0.0)
            elif kx == 2:
                tap = jnp.where(not_right, tap, 0.0)
            acc = acc + jnp.dot(tap, w_ref[ky * 3 + kx],
                                preferred_element_type=jnp.float32)
    return jnp.maximum(acc + b_ref[...], 0.0)


def _maxpool2x2_row(src_ref, i, W):
    """Pooled row i of a 2x2/stride-2 max-pool of a flattened (H*W, C) VMEM image."""
    Wo = W // 2
    r0 = (2 * i) * W
    r1 = (2 * i + 1) * W
    a = src_ref[pl.ds(r0, Wo, 2), :]        # row 2i,   even x
    b = src_ref[pl.ds(r0 + 1, Wo, 2), :]    # row 2i,   odd x
    c = src_ref[pl.ds(r1, Wo, 2), :]        # row 2i+1, even x
    d = src_ref[pl.ds(r1 + 1, Wo, 2), :]    # row 2i+1, odd x
    return jnp.maximum(jnp.maximum(a, b), jnp.maximum(c, d))


# ---------------------------------------------------------------------------
# Fused autoencoder kernel: one grid step == one image
# ---------------------------------------------------------------------------
def _autoencoder_kernel(x_ref, w1_ref, b1_ref, w2_ref, b2_ref,
                        wd1_ref, bd1_ref, wd2_ref, bd2_ref,
                        enc_ref, dec_ref,
                        xpad1, y1, p1pad, y2, d1pix):
    # ----------------- encoder -----------------
    # conv1 3x3 (pad 1) + ReLU : 16x16x3 -> 16x16x16
    zero1 = jnp.zeros((PAD1, C0), jnp.float32)
    xpad1[pl.ds(0, PAD1), :] = zero1                 # top halo
    xpad1[pl.ds(PAD1 + HW1, PAD1), :] = zero1        # bottom halo
    xpad1[pl.ds(PAD1, HW1), :] = x_ref[0]            # image body (fully overwritten)
    y1[...] = _conv3x3_relu(xpad1, w1_ref, b1_ref,
                            W=W1, HW=HW1, Cin=C0, Cout=C1, pad=PAD1)

    # maxpool 2x2 -> 8x8x16, written straight into conv2's zero-haloed input buffer
    zero2 = jnp.zeros((PAD2, C1), jnp.float32)
    p1pad[pl.ds(0, PAD2), :] = zero2
    p1pad[pl.ds(PAD2 + HW2, PAD2), :] = zero2
    for i in range(H2):
        p1pad[pl.ds(PAD2 + i * W2, W2), :] = _maxpool2x2_row(y1, i, W1)

    # conv2 3x3 (pad 1) + ReLU : 8x8x16 -> 8x8x4
    y2[...] = _conv3x3_relu(p1pad, w2_ref, b2_ref,
                            W=W2, HW=HW2, Cin=C1, Cout=C2, pad=PAD2)

    # maxpool 2x2 -> 4x4x4 == encoded; pooled rows go directly into the output block
    for i in range(H3):
        enc_ref[0, pl.ds(i * W3, W3), :] = _maxpool2x2_row(y2, i, W2)

    # ----------------- decoder (kernel=2, stride=2 => purely per-pixel) -----------------
    e = enc_ref[0]                           # (16, 4) encoded pixels, row-major

    # deconv1 + ReLU: each encoded pixel -> 2x2 block of 16-channel pixels.
    # d1pix rows are ordered (ky1, kx1, i, j).
    for t in range(4):                       # t = ky1*2 + kx1
        d1pix[pl.ds(t * HW3, HW3), :] = jnp.maximum(
            jnp.dot(e, wd1_ref[t], preferred_element_type=jnp.float32) + bd1_ref[...],
            0.0)

    # deconv2 + Sigmoid fused into ONE matmul: weights for all 4 taps concatenated on
    # the output (lane) dim -> (64,16) x (16,12), one sigmoid, one store.
    z = jnp.dot(d1pix[...], wd2_ref[...], preferred_element_type=jnp.float32) + bd2_ref[...]
    dec_ref[0] = 1.0 / (1.0 + jnp.exp(-z))   # exact sigmoid in f32


# ---------------------------------------------------------------------------
# Host-side wrapper
# ---------------------------------------------------------------------------
def _prep_inputs(x_nchw, params):
    n = x_nchw.shape[0]
    x_flat = jnp.transpose(x_nchw, (0, 2, 3, 1)).reshape(n, HW1, C0)
    w1 = jnp.transpose(params["w1"], (2, 3, 1, 0)).reshape(9, C0, C1)     # (ky,kx,ci,co)
    w2 = jnp.transpose(params["w2"], (2, 3, 1, 0)).reshape(9, C1, C2)
    wd1 = jnp.transpose(params["dw1"], (2, 3, 0, 1)).reshape(4, C2, D1C)  # (ky,kx,ci,co)
    # deconv2 weights: (ci, ky, kx, co) flattened to (16, 12): columns = (ky2, kx2, co)
    wd2 = jnp.transpose(params["dw2"], (0, 2, 3, 1)).reshape(D1C, 4 * D2C)
    b1 = params["b1"].reshape(1, C1)
    b2 = params["b2"].reshape(1, C2)
    bd1 = params["db1"].reshape(1, D1C)
    bd2 = jnp.tile(params["db2"], 4).reshape(1, 4 * D2C)
    return x_flat, w1, b1, w2, b2, wd1, bd1, wd2, bd2


@jax.jit
def autoencoder_forward(x_nchw, params):
    n = x_nchw.shape[0]
    args = _prep_inputs(x_nchw, params)

    in_specs = [
        pl.BlockSpec((1, HW1, C0), lambda b: (b, 0, 0)),        # x (per image)
        pl.BlockSpec((9, C0, C1), lambda b: (0, 0, 0)),         # conv1 weights
        pl.BlockSpec((1, C1), lambda b: (0, 0)),                # conv1 bias
        pl.BlockSpec((9, C1, C2), lambda b: (0, 0, 0)),         # conv2 weights
        pl.BlockSpec((1, C2), lambda b: (0, 0)),                # conv2 bias
        pl.BlockSpec((4, C2, D1C), lambda b: (0, 0, 0)),        # deconv1 weights
        pl.BlockSpec((1, D1C), lambda b: (0, 0)),               # deconv1 bias
        pl.BlockSpec((D1C, 4 * D2C), lambda b: (0, 0)),         # deconv2 weights (cat)
        pl.BlockSpec((1, 4 * D2C), lambda b: (0, 0)),           # deconv2 bias   (cat)
    ]
    out_specs = (
        pl.BlockSpec((1, HW3, C2), lambda b: (b, 0, 0)),            # encoded (flat NHWC)
        pl.BlockSpec((1, 4 * HW3, 4 * D2C), lambda b: (b, 0, 0)),   # decoded (blocked)
    )
    out_shape = (
        jax.ShapeDtypeStruct((n, HW3, C2), jnp.float32),
        jax.ShapeDtypeStruct((n, 4 * HW3, 4 * D2C), jnp.float32),
    )
    scratch_shapes = [
        pltpu.VMEM((HW1 + 2 * PAD1, C0), jnp.float32),   # conv1 input + zero halo
        pltpu.VMEM((HW1, C1), jnp.float32),              # conv1 output
        pltpu.VMEM((HW2 + 2 * PAD2, C1), jnp.float32),   # pool1 output + zero halo
        pltpu.VMEM((HW2, C2), jnp.float32),              # conv2 output
        pltpu.VMEM((4 * HW3, D1C), jnp.float32),         # deconv1 output (per-pixel form)
    ]

    enc_raw, dec_raw = pl.pallas_call(
        _autoencoder_kernel,
        grid=(n,),
        in_specs=in_specs,
        out_specs=out_specs,
        out_shape=out_shape,
        scratch_shapes=scratch_shapes,
        compiler_params=pltpu.CompilerParams(
            dimension_semantics=("parallel",),        # shard batch across TCs (v7x)
            vmem_limit_bytes=32 * 1024 * 1024,
        ),
    )(*args)

    # Tiny layout fix-ups (few KB) done once in XLA to present PyTorch's NCHW outputs.
    encoded = jnp.transpose(enc_raw.reshape(n, H3, W3, C2), (0, 3, 1, 2))
    # dec_raw dims: (N, rows=(ky1,kx1,i,j), cols=(ky2,kx2,c));
    # output pixel = (y, x) = (4i + 2*ky1 + ky2, 4j + 2*kx1 + kx2).
    dec = dec_raw.reshape(n, 2, 2, H3, W3, 2, 2, D2C)   # (n, ky1, kx1, i, j, ky2, kx2, c)
    decoded = jnp.transpose(dec, (0, 7, 3, 1, 5, 4, 2, 6)).reshape(n, D2C, H1, W1)
    return encoded, decoded


# ---------------------------------------------------------------------------
# Parameters + pure-JAX reference (for a correctness sanity check)
# ---------------------------------------------------------------------------
def init_params(key):
    ks = jax.random.split(key, 8)
    scale = 0.1
    return {
        "w1": jax.random.normal(ks[0], (16, 3, 3, 3), jnp.float32) * scale,
        "b1": jax.random.normal(ks[1], (16,), jnp.float32) * scale,
        "w2": jax.random.normal(ks[2], (4, 16, 3, 3), jnp.float32) * scale,
        "b2": jax.random.normal(ks[3], (4,), jnp.float32) * scale,
        "dw1": jax.random.normal(ks[4], (4, 16, 2, 2), jnp.float32) * scale,
        "db1": jax.random.normal(ks[5], (16,), jnp.float32) * scale,
        "dw2": jax.random.normal(ks[6], (16, 3, 2, 2), jnp.float32) * scale,
        "db2": jax.random.normal(ks[7], (3,), jnp.float32) * scale,
    }


def _reference_forward(x_nchw, params):
    def conv(x, w, b):
        y = lax.conv_general_dilated(x, w, (1, 1), ((1, 1), (1, 1)),
                                     dimension_numbers=("NCHW", "OIHW", "NCHW"))
        return jnp.maximum(y + b[None, :, None, None], 0.0)

    def pool(x):
        return lax.reduce_window(x, -jnp.inf, lax.max,
                                 (1, 1, 2, 2), (1, 1, 2, 2), "VALID")

    def deconv(x, w, b):
        # ConvTranspose2d(k=2, s=2): out[n,o,2i+ky,2j+kx] = sum_c x[n,c,i,j] * w[c,o,ky,kx] + b
        nb, _, h, wd = x.shape
        cout = w.shape[1]
        y = jnp.einsum("ncij,cokl->noikjl", x, w)
        return y.reshape(nb, cout, 2 * h, 2 * wd) + b[None, :, None, None]

    h = pool(conv(x_nchw, params["w1"], params["b1"]))
    enc = pool(conv(h, params["w2"], params["b2"]))
    d = jnp.maximum(deconv(enc, params["dw1"], params["db1"]), 0.0)
    dec = jax.nn.sigmoid(deconv(d, params["dw2"], params["db2"]))
    return enc, dec


if __name__ == "__main__":
    key = jax.random.PRNGKey(0)
    pkey, xkey = jax.random.split(key)
    params = init_params(pkey)

    # NCHW input consistent with the module: batch=2, 3 channels, 16x16 spatial.
    x = jax.random.uniform(xkey, (2, 3, 16, 16), jnp.float32)

    encoded, decoded = autoencoder_forward(x, params)
    jax.block_until_ready((encoded, decoded))

    assert encoded.shape == (2, 4, 4, 4), encoded.shape
    assert decoded.shape == (2, 3, 16, 16), decoded.shape
    assert bool(jnp.all(jnp.isfinite(encoded))) and bool(jnp.all(jnp.isfinite(decoded)))

    # Sanity check against a pure-JAX/XLA implementation of the same PyTorch module
    # (loose tolerance to absorb MXU f32 precision-path differences).
    enc_expect, dec_expect = _reference_forward(x, params)
    assert jnp.allclose(encoded, enc_expect, rtol=1e-2, atol=1e-2), \
        float(jnp.max(jnp.abs(encoded - enc_expect)))
    assert jnp.allclose(decoded, dec_expect, rtol=1e-2, atol=1e-2), \
        float(jnp.max(jnp.abs(decoded - dec_expect)))

    print("KERNEL_OK")
</pallas_src>

<mosaic_0001>
module attributes {stable_mosaic.version = 11 : i64} {
  func.func @_autoencoder_kernel(%arg0: i32, %arg1: memref<1x256x3xf32, #tpu.memory_space<vmem>>, %arg2: memref<9x3x16xf32, #tpu.memory_space<vmem>>, %arg3: memref<1x16xf32, #tpu.memory_space<vmem>>, %arg4: memref<9x16x4xf32, #tpu.memory_space<vmem>>, %arg5: memref<1x4xf32, #tpu.memory_space<vmem>>, %arg6: memref<4x4x16xf32, #tpu.memory_space<vmem>>, %arg7: memref<1x16xf32, #tpu.memory_space<vmem>>, %arg8: memref<16x12xf32, #tpu.memory_space<vmem>>, %arg9: memref<1x12xf32, #tpu.memory_space<vmem>>, %arg10: memref<1x16x4xf32, #tpu.memory_space<vmem>>, %arg11: memref<1x64x12xf32, #tpu.memory_space<vmem>>, %arg12: memref<290x3xf32, #tpu.memory_space<vmem>>, %arg13: memref<256x16xf32, #tpu.memory_space<vmem>>, %arg14: memref<82x16xf32, #tpu.memory_space<vmem>>, %arg15: memref<64x4xf32, #tpu.memory_space<vmem>>, %arg16: memref<64x16xf32, #tpu.memory_space<vmem>>) attributes {dimension_semantics = [#tpu.dimension_semantics<parallel>], iteration_bounds = array<i64: 2>, scalar_prefetch = 0 : i64, scratch_operands = 5 : i64, tpu.core_type = #tpu.core_type<tc>, window_params = [{transform_indices = @transform_0, window_bounds = array<i64: 1, 256, 3>}, {pipeline_mode = #tpu.pipeline_mode<synchronous>, transform_indices = @transform_1, window_bounds = array<i64: 9, 3, 16>}, {pipeline_mode = #tpu.pipeline_mode<synchronous>, transform_indices = @transform_2, window_bounds = array<i64: 1, 16>}, {pipeline_mode = #tpu.pipeline_mode<synchronous>, transform_indices = @transform_3, window_bounds = array<i64: 9, 16, 4>}, {pipeline_mode = #tpu.pipeline_mode<synchronous>, transform_indices = @transform_4, window_bounds = array<i64: 1, 4>}, {pipeline_mode = #tpu.pipeline_mode<synchronous>, transform_indices = @transform_5, window_bounds = array<i64: 4, 4, 16>}, {pipeline_mode = #tpu.pipeline_mode<synchronous>, transform_indices = @transform_6, window_bounds = array<i64: 1, 16>}, {pipeline_mode = #tpu.pipeline_mode<synchronous>, transform_indices = @transform_7, window_bounds = array<i64: 16, 12>}, {pipeline_mode = #tpu.pipeline_mode<synchronous>, transform_indices = @transform_8, window_bounds = array<i64: 1, 12>}, {transform_indices = @transform_9, window_bounds = array<i64: 1, 16, 4>}, {transform_indices = @transform_10, window_bounds = array<i64: 1, 64, 12>}]} {
    %cst = arith.constant 0.000000e+00 : f32
    %0 = vector.broadcast %cst : f32 to vector<17x3xf32>
    %c0 = arith.constant 0 : index
    %c0_0 = arith.constant 0 : index
    %1 = vector.load %arg12[%c0, %c0_0] : memref<290x3xf32, #tpu.memory_space<vmem>>, vector<17x3xf32>
    tpu.vector_store %arg12[%c0, %c0_0], %0 {strides = array<i32>} : memref<290x3xf32, #tpu.memory_space<vmem>>, vector<17x3xf32>,
    %c273 = arith.constant 273 : index
    %c0_1 = arith.constant 0 : index
    %2 = vector.load %arg12[%c273, %c0_1] : memref<290x3xf32, #tpu.memory_space<vmem>>, vector<17x3xf32>
    tpu.vector_store %arg12[%c273, %c0_1], %0 {strides = array<i32>} : memref<290x3xf32, #tpu.memory_space<vmem>>, vector<17x3xf32>,
    %c0_2 = arith.constant 0 : index
    %c0_3 = arith.constant 0 : index
    %c0_4 = arith.constant 0 : index
    %3 = vector.load %arg1[%c0_2, %c0_3, %c0_4] : memref<1x256x3xf32, #tpu.memory_space<vmem>>, vector<1x256x3xf32>
    %4 = vector.shape_cast %3 : vector<1x256x3xf32> to vector<256x3xf32>
    %c17 = arith.constant 17 : index
    %c0_5 = arith.constant 0 : index
    %5 = vector.load %arg12[%c17, %c0_5] : memref<290x3xf32, #tpu.memory_space<vmem>>, vector<256x3xf32>
    tpu.vector_store %arg12[%c17, %c0_5], %4 {strides = array<i32>} : memref<290x3xf32, #tpu.memory_space<vmem>>, vector<256x3xf32>,
    %6 = tpu.iota {dimensions = array<i32: 0>} : vector<256x3xi32>
    %c15_i32 = arith.constant 15 : i32
    %7 = vector.broadcast %c15_i32 : i32 to vector<256x3xi32>
    %8 = arith.andi %6, %7 : vector<256x3xi32>
    %c0_i32 = arith.constant 0 : i32
    %9 = vector.broadcast %c0_i32 : i32 to vector<256x3xi32>
    %10 = arith.cmpi ne, %8, %9 : vector<256x3xi32>
    %c15_i32_6 = arith.constant 15 : i32
    %11 = vector.broadcast %c15_i32_6 : i32 to vector<256x3xi32>
    %12 = arith.cmpi ne, %8, %11 : vector<256x3xi32>
    %cst_7 = arith.constant 0.000000e+00 : f32
    %13 = vector.broadcast %cst_7 : f32 to vector<256x16xf32>
    %c0_8 = arith.constant 0 : index
    %c0_9 = arith.constant 0 : index
    %14 = vector.load %arg12[%c0_8, %c0_9] : memref<290x3xf32, #tpu.memory_space<vmem>>, vector<256x3xf32>
    %cst_10 = arith.constant 0.000000e+00 : f32
    %15 = vector.broadcast %cst_10 : f32 to vector<256x3xf32>
    %16 = arith.select %10, %14, %15 : vector<256x3xi1>, vector<256x3xf32>
    %c0_11 = arith.constant 0 : index
    %c0_12 = arith.constant 0 : index
    %c0_13 = arith.constant 0 : index
    %17 = vector.load %arg2[%c0_11, %c0_12, %c0_13] : memref<9x3x16xf32, #tpu.memory_space<vmem>>, vector<1x3x16xf32>
    %18 = vector.shape_cast %17 : vector<1x3x16xf32> to vector<3x16xf32>
    %cst_14 = arith.constant dense<0.000000e+00> : vector<256x16xf32>
    %19 = tpu.matmul %16, %18, %cst_14 {dimension_numbers = #tpu.dot_dimension_numbers<[1], [0], [0], [1], [0, 0, 1, 1], [], []>} : vector<256x3xf32>, vector<3x16xf32>, vector<256x16xf32> -> vector<256x16xf32>
    %20 = arith.addf %13, %19 : vector<256x16xf32>
    %c1 = arith.constant 1 : index
    %c0_15 = arith.constant 0 : index
    %21 = vector.load %arg12[%c1, %c0_15] : memref<290x3xf32, #tpu.memory_space<vmem>>, vector<256x3xf32>
    %c1_16 = arith.constant 1 : index
    %c0_17 = arith.constant 0 : index
    %c0_18 = arith.constant 0 : index
    %22 = vector.load %arg2[%c1_16, %c0_17, %c0_18] : memref<9x3x16xf32, #tpu.memory_space<vmem>>, vector<1x3x16xf32>
    %23 = vector.shape_cast %22 : vector<1x3x16xf32> to vector<3x16xf32>
    %cst_19 = arith.constant dense<0.000000e+00> : vector<256x16xf32>
    %24 = tpu.matmul %21, %23, %cst_19 {dimension_numbers = #tpu.dot_dimension_numbers<[1], [0], [0], [1], [0, 0, 1, 1], [], []>} : vector<256x3xf32>, vector<3x16xf32>, vector<256x16xf32> -> vector<256x16xf32>
    %25 = arith.addf %20, %24 : vector<256x16xf32>
    %c2 = arith.constant 2 : index
    %c0_20 = arith.constant 0 : index
    %26 = vector.load %arg12[%c2, %c0_20] : memref<290x3xf32, #tpu.memory_space<vmem>>, vector<256x3xf32>
    %cst_21 = arith.constant 0.000000e+00 : f32
    %27 = vector.broadcast %cst_21 : f32 to vector<256x3xf32>
    %28 = arith.select %12, %26, %27 : vector<256x3xi1>, vector<256x3xf32>
    %c2_22 = arith.constant 2 : index
    %c0_23 = arith.constant 0 : index
    %c0_24 = arith.constant 0 : index
    %29 = vector.load %arg2[%c2_22, %c0_23, %c0_24] : memref<9x3x16xf32, #tpu.memory_space<vmem>>, vector<1x3x16xf32>
    %30 = vector.shape_cast %29 : vector<1x3x16xf32> to vector<3x16xf32>
    %cst_25 = arith.constant dense<0.000000e+00> : vector<256x16xf32>
    %31 = tpu.matmul %28, %30, %cst_25 {dimension_numbers = #tpu.dot_dimension_numbers<[1], [0], [0], [1], [0, 0, 1, 1], [], []>} : vector<256x3xf32>, vector<3x16xf32>, vector<256x16xf32> -> vector<256x16xf32>
    %32 = arith.addf %25, %31 : vector<256x16xf32>
    %c16 = arith.constant 16 : index
    %c0_26 = arith.constant 0 : index
    %33 = vector.load %arg12[%c16, %c0_26] : memref<290x3xf32, #tpu.memory_space<vmem>>, vector<256x3xf32>
    %cst_27 = arith.constant 0.000000e+00 : f32
    %34 = vector.broadcast %cst_27 : f32 to vector<256x3xf32>
    %35 = arith.select %10, %33, %34 : vector<256x3xi1>, vector<256x3xf32>
    %c3 = arith.constant 3 : index
    %c0_28 = arith.constant 0 : index
    %c0_29 = arith.constant 0 : index
    %36 = vector.load %arg2[%c3, %c0_28, %c0_29] : memref<9x3x16xf32, #tpu.memory_space<vmem>>, vector<1x3x16xf32>
    %37 = vector.shape_cast %36 : vector<1x3x16xf32> to vector<3x16xf32>
    %cst_30 = arith.constant dense<0.000000e+00> : vector<256x16xf32>
    %38 = tpu.matmul %35, %37, %cst_30 {dimension_numbers = #tpu.dot_dimension_numbers<[1], [0], [0], [1], [0, 0, 1, 1], [], []>} : vector<256x3xf32>, vector<3x16xf32>, vector<256x16xf32> -> vector<256x16xf32>
    %39 = arith.addf %32, %38 : vector<256x16xf32>
    %c17_31 = arith.constant 17 : index
    %c0_32 = arith.constant 0 : index
    %40 = vector.load %arg12[%c17_31, %c0_32] : memref<290x3xf32, #tpu.memory_space<vmem>>, vector<256x3xf32>
    %c4 = arith.constant 4 : index
    %c0_33 = arith.constant 0 : index
    %c0_34 = arith.constant 0 : index
    %41 = vector.load %arg2[%c4, %c0_33, %c0_34] : memref<9x3x16xf32, #tpu.memory_space<vmem>>, vector<1x3x16xf32>
    %42 = vector.shape_cast %41 : vector<1x3x16xf32> to vector<3x16xf32>
    %cst_35 = arith.constant dense<0.000000e+00> : vector<256x16xf32>
    %43 = tpu.matmul %40, %42, %cst_35 {dimension_numbers = #tpu.dot_dimension_numbers<[1], [0], [0], [1], [0, 0, 1, 1], [], []>} : vector<256x3xf32>, vector<3x16xf32>, vector<256x16xf32> -> vector<256x16xf32>
    %44 = arith.addf %39, %43 : vector<256x16xf32>
    %c18 = arith.constant 18 : index
    %c0_36 = arith.constant 0 : index
    %45 = vector.load %arg12[%c18, %c0_36] : memref<290x3xf32, #tpu.memory_space<vmem>>, vector<256x3xf32>
    %cst_37 = arith.constant 0.000000e+00 : f32
    %46 = vector.broadcast %cst_37 : f32 to vector<256x3xf32>
    %47 = arith.select %12, %45, %46 : vector<256x3xi1>, vector<256x3xf32>
    %c5 = arith.constant 5 : index
    %c0_38 = arith.constant 0 : index
    %c0_39 = arith.constant 0 : index
    %48 = vector.load %arg2[%c5, %c0_38, %c0_39] : memref<9x3x16xf32, #tpu.memory_space<vmem>>, vector<1x3x16xf32>
    %49 = vector.shape_cast %48 : vector<1x3x16xf32> to vector<3x16xf32>
    %cst_40 = arith.constant dense<0.000000e+00> : vector<256x16xf32>
    %50 = tpu.matmul %47, %49, %cst_40 {dimension_numbers = #tpu.dot_dimension_numbers<[1], [0], [0], [1], [0, 0, 1, 1], [], []>} : vector<256x3xf32>, vector<3x16xf32>, vector<256x16xf32> -> vector<256x16xf32>
    %51 = arith.addf %44, %50 : vector<256x16xf32>
    %c32 = arith.constant 32 : index
    %c0_41 = arith.constant 0 : index
    %52 = vector.load %arg12[%c32, %c0_41] : memref<290x3xf32, #tpu.memory_space<vmem>>, vector<256x3xf32>
    %cst_42 = arith.constant 0.000000e+00 : f32
    %53 = vector.broadcast %cst_42 : f32 to vector<256x3xf32>
    %54 = arith.select %10, %52, %53 : vector<256x3xi1>, vector<256x3xf32>
    %c6 = arith.constant 6 : index
    %c0_43 = arith.constant 0 : index
    %c0_44 = arith.constant 0 : index
    %55 = vector.load %arg2[%c6, %c0_43, %c0_44] : memref<9x3x16xf32, #tpu.memory_space<vmem>>, vector<1x3x16xf32>
    %56 = vector.shape_cast %55 : vector<1x3x16xf32> to vector<3x16xf32>
    %cst_45 = arith.constant dense<0.000000e+00> : vector<256x16xf32>
    %57 = tpu.matmul %54, %56, %cst_45 {dimension_numbers = #tpu.dot_dimension_numbers<[1], [0], [0], [1], [0, 0, 1, 1], [], []>} : vector<256x3xf32>, vector<3x16xf32>, vector<256x16xf32> -> vector<256x16xf32>
    %58 = arith.addf %51, %57 : vector<256x16xf32>
    %c33 = arith.constant 33 : index
    %c0_46 = arith.constant 0 : index
    %59 = vector.load %arg12[%c33, %c0_46] : memref<290x3xf32, #tpu.memory_space<vmem>>, vector<256x3xf32>
    %c7 = arith.constant 7 : index
    %c0_47 = arith.constant 0 : index
    %c0_48 = arith.constant 0 : index
    %60 = vector.load %arg2[%c7, %c0_47, %c0_48] : memref<9x3x16xf32, #tpu.memory_space<vmem>>, vector<1x3x16xf32>
    %61 = vector.shape_cast %60 : vector<1x3x16xf32> to vector<3x16xf32>
    %cst_49 = arith.constant dense<0.000000e+00> : vector<256x16xf32>
    %62 = tpu.matmul %59, %61, %cst_49 {dimension_numbers = #tpu.dot_dimension_numbers<[1], [0], [0], [1], [0, 0, 1, 1], [], []>} : vector<256x3xf32>, vector<3x16xf32>, vector<256x16xf32> -> vector<256x16xf32>
    %63 = arith.addf %58, %62 : vector<256x16xf32>
    %c34 = arith.constant 34 : index
    %c0_50 = arith.constant 0 : index
    %64 = vector.load %arg12[%c34, %c0_50] : memref<290x3xf32, #tpu.memory_space<vmem>>, vector<256x3xf32>
    %cst_51 = arith.constant 0.000000e+00 : f32
    %65 = vector.broadcast %cst_51 : f32 to vector<256x3xf32>
    %66 = arith.select %12, %64, %65 : vector<256x3xi1>, vector<256x3xf32>
    %c8 = arith.constant 8 : index
    %c0_52 = arith.constant 0 : index
    %c0_53 = arith.constant 0 : index
    %67 = vector.load %arg2[%c8, %c0_52, %c0_53] : memref<9x3x16xf32, #tpu.memory_space<vmem>>, vector<1x3x16xf32>
    %68 = vector.shape_cast %67 : vector<1x3x16xf32> to vector<3x16xf32>
    %cst_54 = arith.constant dense<0.000000e+00> : vector<256x16xf32>
    %69 = tpu.matmul %66, %68, %cst_54 {dimension_numbers = #tpu.dot_dimension_numbers<[1], [0], [0], [1], [0, 0, 1, 1], [], []>} : vector<256x3xf32>, vector<3x16xf32>, vector<256x16xf32> -> vector<256x16xf32>
    %70 = arith.addf %63, %69 : vector<256x16xf32>
    %c0_55 = arith.constant 0 : index
    %c0_56 = arith.constant 0 : index
    %71 = vector.load %arg3[%c0_55, %c0_56] : memref<1x16xf32, #tpu.memory_space<vmem>>, vector<1x16xf32>
    %72 = vector.broadcast %71 : vector<1x16xf32> to vector<256x16xf32>
    %73 = arith.addf %70, %72 : vector<256x16xf32>
    %cst_57 = arith.constant 0.000000e+00 : f32
    %74 = vector.broadcast %cst_57 : f32 to vector<256x16xf32>
    %75 = arith.maximumf %73, %74 : vector<256x16xf32>
    %c0_58 = arith.constant 0 : index
    %c0_59 = arith.constant 0 : index
    %76 = vector.load %arg13[%c0_58, %c0_59] : memref<256x16xf32, #tpu.memory_space<vmem>>, vector<256x16xf32>
    tpu.vector_store %arg13[%c0_58, %c0_59], %75 {strides = array<i32>} : memref<256x16xf32, #tpu.memory_space<vmem>>, vector<256x16xf32>,
    %cst_60 = arith.constant 0.000000e+00 : f32
    %77 = vector.broadcast %cst_60 : f32 to vector<9x16xf32>
    %c0_61 = arith.constant 0 : index
    %c0_62 = arith.constant 0 : index
    %78 = vector.load %arg14[%c0_61, %c0_62] : memref<82x16xf32, #tpu.memory_space<vmem>>, vector<9x16xf32>
    tpu.vector_store %arg14[%c0_61, %c0_62], %77 {strides = array<i32>} : memref<82x16xf32, #tpu.memory_space<vmem>>, vector<9x16xf32>,
    %c73 = arith.constant 73 : index
    %c0_63 = arith.constant 0 : index
    %79 = vector.load %arg14[%c73, %c0_63] : memref<82x16xf32, #tpu.memory_space<vmem>>, vector<9x16xf32>
    tpu.vector_store %arg14[%c73, %c0_63], %77 {strides = array<i32>} : memref<82x16xf32, #tpu.memory_space<vmem>>, vector<9x16xf32>,
    %c0_64 = arith.constant 0 : index
    %c0_65 = arith.constant 0 : index
    %80 = tpu.strided_load %arg13[%c0_64, %c0_65] {strides = array<i32: 2, 1>} : memref<256x16xf32, #tpu.memory_space<vmem>>, vector<8x16xf32>
    %c1_66 = arith.constant 1 : index
    %c0_67 = arith.constant 0 : index
    %81 = tpu.strided_load %arg13[%c1_66, %c0_67] {strides = array<i32: 2, 1>} : memref<256x16xf32, #tpu.memory_space<vmem>>, vector<8x16xf32>
    %c16_68 = arith.constant 16 : index
    %c0_69 = arith.constant 0 : index
    %82 = tpu.strided_load %arg13[%c16_68, %c0_69] {strides = array<i32: 2, 1>} : memref<256x16xf32, #tpu.memory_space<vmem>>, vector<8x16xf32>
    %c17_70 = arith.constant 17 : index
    %c0_71 = arith.constant 0 : index
    %83 = tpu.strided_load %arg13[%c17_70, %c0_71] {strides = array<i32: 2, 1>} : memref<256x16xf32, #tpu.memory_space<vmem>>, vector<8x16xf32>
    %84 = arith.maximumf %80, %81 : vector<8x16xf32>
    %85 = arith.maximumf %82, %83 : vector<8x16xf32>
    %86 = arith.maximumf %84, %85 : vector<8x16xf32>
    %c9 = arith.constant 9 : index
    %c0_72 = arith.constant 0 : index
    %87 = vector.load %arg14[%c9, %c0_72] : memref<82x16xf32, #tpu.memory_space<vmem>>, vector<8x16xf32>
    tpu.vector_store %arg14[%c9, %c0_72], %86 {strides = array<i32>} : memref<82x16xf32, #tpu.memory_space<vmem>>, vector<8x16xf32>,
    %c32_73 = arith.constant 32 : index
    %c0_74 = arith.constant 0 : index
    %88 = tpu.strided_load %arg13[%c32_73, %c0_74] {strides = array<i32: 2, 1>} : memref<256x16xf32, #tpu.memory_space<vmem>>, vector<8x16xf32>
    %c33_75 = arith.constant 33 : index
    %c0_76 = arith.constant 0 : index
    %89 = tpu.strided_load %arg13[%c33_75, %c0_76] {strides = array<i32: 2, 1>} : memref<256x16xf32, #tpu.memory_space<vmem>>, vector<8x16xf32>
    %c48 = arith.constant 48 : index
    %c0_77 = arith.constant 0 : index
    %90 = tpu.strided_load %arg13[%c48, %c0_77] {strides = array<i32: 2, 1>} : memref<256x16xf32, #tpu.memory_space<vmem>>, vector<8x16xf32>
    %c49 = arith.constant 49 : index
    %c0_78 = arith.constant 0 : index
    %91 = tpu.strided_load %arg13[%c49, %c0_78] {strides = array<i32: 2, 1>} : memref<256x16xf32, #tpu.memory_space<vmem>>, vector<8x16xf32>
    %92 = arith.maximumf %88, %89 : vector<8x16xf32>
    %93 = arith.maximumf %90, %91 : vector<8x16xf32>
    %94 = arith.maximumf %92, %93 : vector<8x16xf32>
    %c17_79 = arith.constant 17 : index
    %c0_80 = arith.constant 0 : index
    %95 = vector.load %arg14[%c17_79, %c0_80] : memref<82x16xf32, #tpu.memory_space<vmem>>, vector<8x16xf32>
    tpu.vector_store %arg14[%c17_79, %c0_80], %94 {strides = array<i32>} : memref<82x16xf32, #tpu.memory_space<vmem>>, vector<8x16xf32>,
    %c64 = arith.constant 64 : index
    %c0_81 = arith.constant 0 : index
    %96 = tpu.strided_load %arg13[%c64, %c0_81] {strides = array<i32: 2, 1>} : memref<256x16xf32, #tpu.memory_space<vmem>>, vector<8x16xf32>
    %c65 = arith.constant 65 : index
    %c0_82 = arith.constant 0 : index
    %97 = tpu.strided_load %arg13[%c65, %c0_82] {strides = array<i32: 2, 1>} : memref<256x16xf32, #tpu.memory_space<vmem>>, vector<8x16xf32>
    %c80 = arith.constant 80 : index
    %c0_83 = arith.constant 0 : index
    %98 = tpu.strided_load %arg13[%c80, %c0_83] {strides = array<i32: 2, 1>} : memref<256x16xf32, #tpu.memory_space<vmem>>, vector<8x16xf32>
    %c81 = arith.constant 81 : index
    %c0_84 = arith.constant 0 : index
    %99 = tpu.strided_load %arg13[%c81, %c0_84] {strides = array<i32: 2, 1>} : memref<256x16xf32, #tpu.memory_space<vmem>>, vector<8x16xf32>
    %100 = arith.maximumf %96, %97 : vector<8x16xf32>
    %101 = arith.maximumf %98, %99 : vector<8x16xf32>
    %102 = arith.maximumf %100, %101 : vector<8x16xf32>
    %c25 = arith.constant 25 : index
    %c0_85 = arith.constant 0 : index
    %103 = vector.load %arg14[%c25, %c0_85] : memref<82x16xf32, #tpu.memory_space<vmem>>, vector<8x16xf32>
    tpu.vector_store %arg14[%c25, %c0_85], %102 {strides = array<i32>} : memref<82x16xf32, #tpu.memory_space<vmem>>, vector<8x16xf32>,
    %c96 = arith.constant 96 : index
    %c0_86 = arith.constant 0 : index
    %104 = tpu.strided_load %arg13[%c96, %c0_86] {strides = array<i32: 2, 1>} : memref<256x16xf32, #tpu.memory_space<vmem>>, vector<8x16xf32>
    %c97 = arith.constant 97 : index
    %c0_87 = arith.constant 0 : index
    %105 = tpu.strided_load %arg13[%c97, %c0_87] {strides = array<i32: 2, 1>} : memref<256x16xf32, #tpu.memory_space<vmem>>, vector<8x16xf32>
    %c112 = arith.constant 112 : index
    %c0_88 = arith.constant 0 : index
    %106 = tpu.strided_load %arg13[%c112, %c0_88] {strides = array<i32: 2, 1>} : memref<256x16xf32, #tpu.memory_space<vmem>>, vector<8x16xf32>
    %c113 = arith.constant 113 : index
    %c0_89 = arith.constant 0 : index
    %107 = tpu.strided_load %arg13[%c113, %c0_89] {strides = array<i32: 2, 1>} : memref<256x16xf32, #tpu.memory_space<vmem>>, vector<8x16xf32>
    %108 = arith.maximumf %104, %105 : vector<8x16xf32>
    %109 = arith.maximumf %106, %107 : vector<8x16xf32>
    %110 = arith.maximumf %108, %109 : vector<8x16xf32>
    %c33_90 = arith.constant 33 : index
    %c0_91 = arith.constant 0 : index
    %111 = vector.load %arg14[%c33_90, %c0_91] : memref<82x16xf32, #tpu.memory_space<vmem>>, vector<8x16xf32>
    tpu.vector_store %arg14[%c33_90, %c0_91], %110 {strides = array<i32>} : memref<82x16xf32, #tpu.memory_space<vmem>>, vector<8x16xf32>,
    %c128 = arith.constant 128 : index
    %c0_92 = arith.constant 0 : index
    %112 = tpu.strided_load %arg13[%c128, %c0_92] {strides = array<i32: 2, 1>} : memref<256x16xf32, #tpu.memory_space<vmem>>, vector<8x16xf32>
    %c129 = arith.constant 129 : index
    %c0_93 = arith.constant 0 : index
    %113 = tpu.strided_load %arg13[%c129, %c0_93] {strides = array<i32: 2, 1>} : memref<256x16xf32, #tpu.memory_space<vmem>>, vector<8x16xf32>
    %c144 = arith.constant 144 : index
    %c0_94 = arith.constant 0 : index
    %114 = tpu.strided_load %arg13[%c144, %c0_94] {strides = array<i32: 2, 1>} : memref<256x16xf32, #tpu.memory_space<vmem>>, vector<8x16xf32>
    %c145 = arith.constant 145 : index
    %c0_95 = arith.constant 0 : index
    %115 = tpu.strided_load %arg13[%c145, %c0_95] {strides = array<i32: 2, 1>} : memref<256x16xf32, #tpu.memory_space<vmem>>, vector<8x16xf32>
    %116 = arith.maximumf %112, %113 : vector<8x16xf32>
    %117 = arith.maximumf %114, %115 : vector<8x16xf32>
    %118 = arith.maximumf %116, %117 : vector<8x16xf32>
    %c41 = arith.constant 41 : index
    %c0_96 = arith.constant 0 : index
    %119 = vector.load %arg14[%c41, %c0_96] : memref<82x16xf32, #tpu.memory_space<vmem>>, vector<8x16xf32>
    tpu.vector_store %arg14[%c41, %c0_96], %118 {strides = array<i32>} : memref<82x16xf32, #tpu.memory_space<vmem>>, vector<8x16xf32>,
    %c160 = arith.constant 160 : index
    %c0_97 = arith.constant 0 : index
    %120 = tpu.strided_load %arg13[%c160, %c0_97] {strides = array<i32: 2, 1>} : memref<256x16xf32, #tpu.memory_space<vmem>>, vector<8x16xf32>
    %c161 = arith.constant 161 : index
    %c0_98 = arith.constant 0 : index
    %121 = tpu.strided_load %arg13[%c161, %c0_98] {strides = array<i32: 2, 1>} : memref<256x16xf32, #tpu.memory_space<vmem>>, vector<8x16xf32>
    %c176 = arith.constant 176 : index
    %c0_99 = arith.constant 0 : index
    %122 = tpu.strided_load %arg13[%c176, %c0_99] {strides = array<i32: 2, 1>} : memref<256x16xf32, #tpu.memory_space<vmem>>, vector<8x16xf32>
    %c177 = arith.constant 177 : index
    %c0_100 = arith.constant 0 : index
    %123 = tpu.strided_load %arg13[%c177, %c0_100] {strides = array<i32: 2, 1>} : memref<256x16xf32, #tpu.memory_space<vmem>>, vector<8x16xf32>
    %124 = arith.maximumf %120, %121 : vector<8x16xf32>
    %125 = arith.maximumf %122, %123 : vector<8x16xf32>
    %126 = arith.maximumf %124, %125 : vector<8x16xf32>
    %c49_101 = arith.constant 49 : index
    %c0_102 = arith.constant 0 : index
    %127 = vector.load %arg14[%c49_101, %c0_102] : memref<82x16xf32, #tpu.memory_space<vmem>>, vector<8x16xf32>
    tpu.vector_store %arg14[%c49_101, %c0_102], %126 {strides = array<i32>} : memref<82x16xf32, #tpu.memory_space<vmem>>, vector<8x16xf32>,
    %c192 = arith.constant 192 : index
    %c0_103 = arith.constant 0 : index
    %128 = tpu.strided_load %arg13[%c192, %c0_103] {strides = array<i32: 2, 1>} : memref<256x16xf32, #tpu.memory_space<vmem>>, vector<8x16xf32>
    %c193 = arith.constant 193 : index
    %c0_104 = arith.constant 0 : index
    %129 = tpu.strided_load %arg13[%c193, %c0_104] {strides = array<i32: 2, 1>} : memref<256x16xf32, #tpu.memory_space<vmem>>, vector<8x16xf32>
    %c208 = arith.constant 208 : index
    %c0_105 = arith.constant 0 : index
    %130 = tpu.strided_load %arg13[%c208, %c0_105] {strides = array<i32: 2, 1>} : memref<256x16xf32, #tpu.memory_space<vmem>>, vector<8x16xf32>
    %c209 = arith.constant 209 : index
    %c0_106 = arith.constant 0 : index
    %131 = tpu.strided_load %arg13[%c209, %c0_106] {strides = array<i32: 2, 1>} : memref<256x16xf32, #tpu.memory_space<vmem>>, vector<8x16xf32>
    %132 = arith.maximumf %128, %129 : vector<8x16xf32>
    %133 = arith.maximumf %130, %131 : vector<8x16xf32>
    %134 = arith.maximumf %132, %133 : vector<8x16xf32>
    %c57 = arith.constant 57 : index
    %c0_107 = arith.constant 0 : index
    %135 = vector.load %arg14[%c57, %c0_107] : memref<82x16xf32, #tpu.memory_space<vmem>>, vector<8x16xf32>
    tpu.vector_store %arg14[%c57, %c0_107], %134 {strides = array<i32>} : memref<82x16xf32, #tpu.memory_space<vmem>>, vector<8x16xf32>,
    %c224 = arith.constant 224 : index
    %c0_108 = arith.constant 0 : index
    %136 = tpu.strided_load %arg13[%c224, %c0_108] {strides = array<i32: 2, 1>} : memref<256x16xf32, #tpu.memory_space<vmem>>, vector<8x16xf32>
    %c225 = arith.constant 225 : index
    %c0_109 = arith.constant 0 : index
    %137 = tpu.strided_load %arg13[%c225, %c0_109] {strides = array<i32: 2, 1>} : memref<256x16xf32, #tpu.memory_space<vmem>>, vector<8x16xf32>
    %c240 = arith.constant 240 : index
    %c0_110 = arith.constant 0 : index
    %138 = tpu.strided_load %arg13[%c240, %c0_110] {strides = array<i32: 2, 1>} : memref<256x16xf32, #tpu.memory_space<vmem>>, vector<8x16xf32>
    %c241 = arith.constant 241 : index
    %c0_111 = arith.constant 0 : index
    %139 = tpu.strided_load %arg13[%c241, %c0_111] {strides = array<i32: 2, 1>} : memref<256x16xf32, #tpu.memory_space<vmem>>, vector<8x16xf32>
    %140 = arith.maximumf %136, %137 : vector<8x16xf32>
    %141 = arith.maximumf %138, %139 : vector<8x16xf32>
    %142 = arith.maximumf %140, %141 : vector<8x16xf32>
    %c65_112 = arith.constant 65 : index
    %c0_113 = arith.constant 0 : index
    %143 = vector.load %arg14[%c65_112, %c0_113] : memref<82x16xf32, #tpu.memory_space<vmem>>, vector<8x16xf32>
    tpu.vector_store %arg14[%c65_112, %c0_113], %142 {strides = array<i32>} : memref<82x16xf32, #tpu.memory_space<vmem>>, vector<8x16xf32>,
    %144 = tpu.iota {dimensions = array<i32: 0>} : vector<64x16xi32>
    %c7_i32 = arith.constant 7 : i32
    %145 = vector.broadcast %c7_i32 : i32 to vector<64x16xi32>
    %146 = arith.andi %144, %145 : vector<64x16xi32>
    %c0_i32_114 = arith.constant 0 : i32
    %147 = vector.broadcast %c0_i32_114 : i32 to vector<64x16xi32>
    %148 = arith.cmpi ne, %146, %147 : vector<64x16xi32>
    %c7_i32_115 = arith.constant 7 : i32
    %149 = vector.broadcast %c7_i32_115 : i32 to vector<64x16xi32>
    %150 = arith.cmpi ne, %146, %149 : vector<64x16xi32>
    %cst_116 = arith.constant 0.000000e+00 : f32
    %151 = vector.broadcast %cst_116 : f32 to vector<64x4xf32>
    %c0_117 = arith.constant 0 : index
    %c0_118 = arith.constant 0 : index
    %152 = vector.load %arg14[%c0_117, %c0_118] : memref<82x16xf32, #tpu.memory_space<vmem>>, vector<64x16xf32>
    %cst_119 = arith.constant 0.000000e+00 : f32
    %153 = vector.broadcast %cst_119 : f32 to vector<64x16xf32>
    %154 = arith.select %148, %152, %153 : vector<64x16xi1>, vector<64x16xf32>
    %c0_120 = arith.constant 0 : index
    %c0_121 = arith.constant 0 : index
    %c0_122 = arith.constant 0 : index
    %155 = vector.load %arg4[%c0_120, %c0_121, %c0_122] : memref<9x16x4xf32, #tpu.memory_space<vmem>>, vector<1x16x4xf32>
    %156 = vector.shape_cast %155 : vector<1x16x4xf32> to vector<16x4xf32>
    %cst_123 = arith.constant dense<0.000000e+00> : vector<64x4xf32>
    %157 = tpu.matmul %154, %156, %cst_123 {dimension_numbers = #tpu.dot_dimension_numbers<[1], [0], [0], [1], [0, 0, 1, 1], [], []>} : vector<64x16xf32>, vector<16x4xf32>, vector<64x4xf32> -> vector<64x4xf32>
    %158 = arith.addf %151, %157 : vector<64x4xf32>
    %c1_124 = arith.constant 1 : index
    %c0_125 = arith.constant 0 : index
    %159 = vector.load %arg14[%c1_124, %c0_125] : memref<82x16xf32, #tpu.memory_space<vmem>>, vector<64x16xf32>
    %c1_126 = arith.constant 1 : index
    %c0_127 = arith.constant 0 : index
    %c0_128 = arith.constant 0 : index
    %160 = vector.load %arg4[%c1_126, %c0_127, %c0_128] : memref<9x16x4xf32, #tpu.memory_space<vmem>>, vector<1x16x4xf32>
    %161 = vector.shape_cast %160 : vector<1x16x4xf32> to vector<16x4xf32>
    %cst_129 = arith.constant dense<0.000000e+00> : vector<64x4xf32>
    %162 = tpu.matmul %159, %161, %cst_129 {dimension_numbers = #tpu.dot_dimension_numbers<[1], [0], [0], [1], [0, 0, 1, 1], [], []>} : vector<64x16xf32>, vector<16x4xf32>, vector<64x4xf32> -> vector<64x4xf32>
    %163 = arith.addf %158, %162 : vector<64x4xf32>
    %c2_130 = arith.constant 2 : index
    %c0_131 = arith.constant 0 : index
    %164 = vector.load %arg14[%c2_130, %c0_131] : memref<82x16xf32, #tpu.memory_space<vmem>>, vector<64x16xf32>
    %cst_132 = arith.constant 0.000000e+00 : f32
    %165 = vector.broadcast %cst_132 : f32 to vector<64x16xf32>
    %166 = arith.select %150, %164, %165 : vector<64x16xi1>, vector<64x16xf32>
    %c2_133 = arith.constant 2 : index
    %c0_134 = arith.constant 0 : index
    %c0_135 = arith.constant 0 : index
    %167 = vector.load %arg4[%c2_133, %c0_134, %c0_135] : memref<9x16x4xf32, #tpu.memory_space<vmem>>, vector<1x16x4xf32>
    %168 = vector.shape_cast %167 : vector<1x16x4xf32> to vector<16x4xf32>
    %cst_136 = arith.constant dense<0.000000e+00> : vector<64x4xf32>
    %169 = tpu.matmul %166, %168, %cst_136 {dimension_numbers = #tpu.dot_dimension_numbers<[1], [0], [0], [1], [0, 0, 1, 1], [], []>} : vector<64x16xf32>, vector<16x4xf32>, vector<64x4xf32> -> vector<64x4xf32>
    %170 = arith.addf %163, %169 : vector<64x4xf32>
    %c8_137 = arith.constant 8 : index
    %c0_138 = arith.constant 0 : index
    %171 = vector.load %arg14[%c8_137, %c0_138] : memref<82x16xf32, #tpu.memory_space<vmem>>, vector<64x16xf32>
    %cst_139 = arith.constant 0.000000e+00 : f32
    %172 = vector.broadcast %cst_139 : f32 to vector<64x16xf32>
    %173 = arith.select %148, %171, %172 : vector<64x16xi1>, vector<64x16xf32>
    %c3_140 = arith.constant 3 : index
    %c0_141 = arith.constant 0 : index
    %c0_142 = arith.constant 0 : index
    %174 = vector.load %arg4[%c3_140, %c0_141, %c0_142] : memref<9x16x4xf32, #tpu.memory_space<vmem>>, vector<1x16x4xf32>
    %175 = vector.shape_cast %174 : vector<1x16x4xf32> to vector<16x4xf32>
    %cst_143 = arith.constant dense<0.000000e+00> : vector<64x4xf32>
    %176 = tpu.matmul %173, %175, %cst_143 {dimension_numbers = #tpu.dot_dimension_numbers<[1], [0], [0], [1], [0, 0, 1, 1], [], []>} : vector<64x16xf32>, vector<16x4xf32>, vector<64x4xf32> -> vector<64x4xf32>
    %177 = arith.addf %170, %176 : vector<64x4xf32>
    %c9_144 = arith.constant 9 : index
    %c0_145 = arith.constant 0 : index
    %178 = vector.load %arg14[%c9_144, %c0_145] : memref<82x16xf32, #tpu.memory_space<vmem>>, vector<64x16xf32>
    %c4_146 = arith.constant 4 : index
    %c0_147 = arith.constant 0 : index
    %c0_148 = arith.constant 0 : index
    %179 = vector.load %arg4[%c4_146, %c0_147, %c0_148] : memref<9x16x4xf32, #tpu.memory_space<vmem>>, vector<1x16x4xf32>
    %180 = vector.shape_cast %179 : vector<1x16x4xf32> to vector<16x4xf32>
    %cst_149 = arith.constant dense<0.000000e+00> : vector<64x4xf32>
    %181 = tpu.matmul %178, %180, %cst_149 {dimension_numbers = #tpu.dot_dimension_numbers<[1], [0], [0], [1], [0, 0, 1, 1], [], []>} : vector<64x16xf32>, vector<16x4xf32>, vector<64x4xf32> -> vector<64x4xf32>
    %182 = arith.addf %177, %181 : vector<64x4xf32>
    %c10 = arith.constant 10 : index
    %c0_150 = arith.constant 0 : index
    %183 = vector.load %arg14[%c10, %c0_150] : memref<82x16xf32, #tpu.memory_space<vmem>>, vector<64x16xf32>
    %cst_151 = arith.constant 0.000000e+00 : f32
    %184 = vector.broadcast %cst_151 : f32 to vector<64x16xf32>
    %185 = arith.select %150, %183, %184 : vector<64x16xi1>, vector<64x16xf32>
    %c5_152 = arith.constant 5 : index
    %c0_153 = arith.constant 0 : index
    %c0_154 = arith.constant 0 : index
    %186 = vector.load %arg4[%c5_152, %c0_153, %c0_154] : memref<9x16x4xf32, #tpu.memory_space<vmem>>, vector<1x16x4xf32>
    %187 = vector.shape_cast %186 : vector<1x16x4xf32> to vector<16x4xf32>
    %cst_155 = arith.constant dense<0.000000e+00> : vector<64x4xf32>
    %188 = tpu.matmul %185, %187, %cst_155 {dimension_numbers = #tpu.dot_dimension_numbers<[1], [0], [0], [1], [0, 0, 1, 1], [], []>} : vector<64x16xf32>, vector<16x4xf32>, vector<64x4xf32> -> vector<64x4xf32>
    %189 = arith.addf %182, %188 : vector<64x4xf32>
    %c16_156 = arith.constant 16 : index
    %c0_157 = arith.constant 0 : index
    %190 = vector.load %arg14[%c16_156, %c0_157] : memref<82x16xf32, #tpu.memory_space<vmem>>, vector<64x16xf32>
    %cst_158 = arith.constant 0.000000e+00 : f32
    %191 = vector.broadcast %cst_158 : f32 to vector<64x16xf32>
    %192 = arith.select %148, %190, %191 : vector<64x16xi1>, vector<64x16xf32>
    %c6_159 = arith.constant 6 : index
    %c0_160 = arith.constant 0 : index
    %c0_161 = arith.constant 0 : index
    %193 = vector.load %arg4[%c6_159, %c0_160, %c0_161] : memref<9x16x4xf32, #tpu.memory_space<vmem>>, vector<1x16x4xf32>
    %194 = vector.shape_cast %193 : vector<1x16x4xf32> to vector<16x4xf32>
    %cst_162 = arith.constant dense<0.000000e+00> : vector<64x4xf32>
    %195 = tpu.matmul %192, %194, %cst_162 {dimension_numbers = #tpu.dot_dimension_numbers<[1], [0], [0], [1], [0, 0, 1, 1], [], []>} : vector<64x16xf32>, vector<16x4xf32>, vector<64x4xf32> -> vector<64x4xf32>
    %196 = arith.addf %189, %195 : vector<64x4xf32>
    %c17_163 = arith.constant 17 : index
    %c0_164 = arith.constant 0 : index
    %197 = vector.load %arg14[%c17_163, %c0_164] : memref<82x16xf32, #tpu.memory_space<vmem>>, vector<64x16xf32>
    %c7_165 = arith.constant 7 : index
    %c0_166 = arith.constant 0 : index
    %c0_167 = arith.constant 0 : index
    %198 = vector.load %arg4[%c7_165, %c0_166, %c0_167] : memref<9x16x4xf32, #tpu.memory_space<vmem>>, vector<1x16x4xf32>
    %199 = vector.shape_cast %198 : vector<1x16x4xf32> to vector<16x4xf32>
    %cst_168 = arith.constant dense<0.000000e+00> : vector<64x4xf32>
    %200 = tpu.matmul %197, %199, %cst_168 {dimension_numbers = #tpu.dot_dimension_numbers<[1], [0], [0], [1], [0, 0, 1, 1], [], []>} : vector<64x16xf32>, vector<16x4xf32>, vector<64x4xf32> -> vector<64x4xf32>
    %201 = arith.addf %196, %200 : vector<64x4xf32>
    %c18_169 = arith.constant 18 : index
    %c0_170 = arith.constant 0 : index
    %202 = vector.load %arg14[%c18_169, %c0_170] : memref<82x16xf32, #tpu.memory_space<vmem>>, vector<64x16xf32>
    %cst_171 = arith.constant 0.000000e+00 : f32
    %203 = vector.broadcast %cst_171 : f32 to vector<64x16xf32>
    %204 = arith.select %150, %202, %203 : vector<64x16xi1>, vector<64x16xf32>
    %c8_172 = arith.constant 8 : index
    %c0_173 = arith.constant 0 : index
    %c0_174 = arith.constant 0 : index
    %205 = vector.load %arg4[%c8_172, %c0_173, %c0_174] : memref<9x16x4xf32, #tpu.memory_space<vmem>>, vector<1x16x4xf32>
    %206 = vector.shape_cast %205 : vector<1x16x4xf32> to vector<16x4xf32>
    %cst_175 = arith.constant dense<0.000000e+00> : vector<64x4xf32>
    %207 = tpu.matmul %204, %206, %cst_175 {dimension_numbers = #tpu.dot_dimension_numbers<[1], [0], [0], [1], [0, 0, 1, 1], [], []>} : vector<64x16xf32>, vector<16x4xf32>, vector<64x4xf32> -> vector<64x4xf32>
    %208 = arith.addf %201, %207 : vector<64x4xf32>
    %c0_176 = arith.constant 0 : index
    %c0_177 = arith.constant 0 : index
    %209 = vector.load %arg5[%c0_176, %c0_177] : memref<1x4xf32, #tpu.memory_space<vmem>>, vector<1x4xf32>
    %210 = vector.broadcast %209 : vector<1x4xf32> to vector<64x4xf32>
    %211 = arith.addf %208, %210 : vector<64x4xf32>
    %cst_178 = arith.constant 0.000000e+00 : f32
    %212 = vector.broadcast %cst_178 : f32 to vector<64x4xf32>
    %213 = arith.maximumf %211, %212 : vector<64x4xf32>
    %c0_179 = arith.constant 0 : index
    %c0_180 = arith.constant 0 : index
    %214 = vector.load %arg15[%c0_179, %c0_180] : memref<64x4xf32, #tpu.memory_space<vmem>>, vector<64x4xf32>
    tpu.vector_store %arg15[%c0_179, %c0_180], %213 {strides = array<i32>} : memref<64x4xf32, #tpu.memory_space<vmem>>, vector<64x4xf32>,
    %c0_181 = arith.constant 0 : index
    %c0_182 = arith.constant 0 : index
    %215 = tpu.strided_load %arg15[%c0_181, %c0_182] {strides = array<i32: 2, 1>} : memref<64x4xf32, #tpu.memory_space<vmem>>, vector<4x4xf32>
    %c1_183 = arith.constant 1 : index
    %c0_184 = arith.constant 0 : index
    %216 = tpu.strided_load %arg15[%c1_183, %c0_184] {strides = array<i32: 2, 1>} : memref<64x4xf32, #tpu.memory_space<vmem>>, vector<4x4xf32>
    %c8_185 = arith.constant 8 : index
    %c0_186 = arith.constant 0 : index
    %217 = tpu.strided_load %arg15[%c8_185, %c0_186] {strides = array<i32: 2, 1>} : memref<64x4xf32, #tpu.memory_space<vmem>>, vector<4x4xf32>
    %c9_187 = arith.constant 9 : index
    %c0_188 = arith.constant 0 : index
    %218 = tpu.strided_load %arg15[%c9_187, %c0_188] {strides = array<i32: 2, 1>} : memref<64x4xf32, #tpu.memory_space<vmem>>, vector<4x4xf32>
    %219 = arith.maximumf %215, %216 : vector<4x4xf32>
    %220 = arith.maximumf %217, %218 : vector<4x4xf32>
    %221 = arith.maximumf %219, %220 : vector<4x4xf32>
    %c0_189 = arith.constant 0 : index
    %c0_190 = arith.constant 0 : index
    %c0_191 = arith.constant 0 : index
    %222 = vector.load %arg10[%c0_189, %c0_190, %c0_191] : memref<1x16x4xf32, #tpu.memory_space<vmem>>, vector<1x4x4xf32>
    %223 = vector.shape_cast %222 : vector<1x4x4xf32> to vector<4x4xf32>
    %224 = vector.shape_cast %221 : vector<4x4xf32> to vector<1x4x4xf32>
    tpu.vector_store %arg10[%c0_189, %c0_190, %c0_191], %224 {strides = array<i32>} : memref<1x16x4xf32, #tpu.memory_space<vmem>>, vector<1x4x4xf32>,
    %c16_192 = arith.constant 16 : index
    %c0_193 = arith.constant 0 : index
    %225 = tpu.strided_load %arg15[%c16_192, %c0_193] {strides = array<i32: 2, 1>} : memref<64x4xf32, #tpu.memory_space<vmem>>, vector<4x4xf32>
    %c17_194 = arith.constant 17 : index
    %c0_195 = arith.constant 0 : index
    %226 = tpu.strided_load %arg15[%c17_194, %c0_195] {strides = array<i32: 2, 1>} : memref<64x4xf32, #tpu.memory_space<vmem>>, vector<4x4xf32>
    %c24 = arith.constant 24 : index
    %c0_196 = arith.constant 0 : index
    %227 = tpu.strided_load %arg15[%c24, %c0_196] {strides = array<i32: 2, 1>} : memref<64x4xf32, #tpu.memory_space<vmem>>, vector<4x4xf32>
    %c25_197 = arith.constant 25 : index
    %c0_198 = arith.constant 0 : index
    %228 = tpu.strided_load %arg15[%c25_197, %c0_198] {strides = array<i32: 2, 1>} : memref<64x4xf32, #tpu.memory_space<vmem>>, vector<4x4xf32>
    %229 = arith.maximumf %225, %226 : vector<4x4xf32>
    %230 = arith.maximumf %227, %228 : vector<4x4xf32>
    %231 = arith.maximumf %229, %230 : vector<4x4xf32>
    %c0_199 = arith.constant 0 : index
    %c4_200 = arith.constant 4 : index
    %c0_201 = arith.constant 0 : index
    %232 = vector.load %arg10[%c0_199, %c4_200, %c0_201] : memref<1x16x4xf32, #tpu.memory_space<vmem>>, vector<1x4x4xf32>
    %233 = vector.shape_cast %232 : vector<1x4x4xf32> to vector<4x4xf32>
    %234 = vector.shape_cast %231 : vector<4x4xf32> to vector<1x4x4xf32>
    tpu.vector_store %arg10[%c0_199, %c4_200, %c0_201], %234 {strides = array<i32>} : memref<1x16x4xf32, #tpu.memory_space<vmem>>, vector<1x4x4xf32>,
    %c32_202 = arith.constant 32 : index
    %c0_203 = arith.constant 0 : index
    %235 = tpu.strided_load %arg15[%c32_202, %c0_203] {strides = array<i32: 2, 1>} : memref<64x4xf32, #tpu.memory_space<vmem>>, vector<4x4xf32>
    %c33_204 = arith.constant 33 : index
    %c0_205 = arith.constant 0 : index
    %236 = tpu.strided_load %arg15[%c33_204, %c0_205] {strides = array<i32: 2, 1>} : memref<64x4xf32, #tpu.memory_space<vmem>>, vector<4x4xf32>
    %c40 = arith.constant 40 : index
    %c0_206 = arith.constant 0 : index
    %237 = tpu.strided_load %arg15[%c40, %c0_206] {strides = array<i32: 2, 1>} : memref<64x4xf32, #tpu.memory_space<vmem>>, vector<4x4xf32>
    %c41_207 = arith.constant 41 : index
    %c0_208 = arith.constant 0 : index
    %238 = tpu.strided_load %arg15[%c41_207, %c0_208] {strides = array<i32: 2, 1>} : memref<64x4xf32, #tpu.memory_space<vmem>>, vector<4x4xf32>
    %239 = arith.maximumf %235, %236 : vector<4x4xf32>
    %240 = arith.maximumf %237, %238 : vector<4x4xf32>
    %241 = arith.maximumf %239, %240 : vector<4x4xf32>
    %c0_209 = arith.constant 0 : index
    %c8_210 = arith.constant 8 : index
    %c0_211 = arith.constant 0 : index
    %242 = vector.load %arg10[%c0_209, %c8_210, %c0_211] : memref<1x16x4xf32, #tpu.memory_space<vmem>>, vector<1x4x4xf32>
    %243 = vector.shape_cast %242 : vector<1x4x4xf32> to vector<4x4xf32>
    %244 = vector.shape_cast %241 : vector<4x4xf32> to vector<1x4x4xf32>
    tpu.vector_store %arg10[%c0_209, %c8_210, %c0_211], %244 {strides = array<i32>} : memref<1x16x4xf32, #tpu.memory_space<vmem>>, vector<1x4x4xf32>,
    %c48_212 = arith.constant 48 : index
    %c0_213 = arith.constant 0 : index
    %245 = tpu.strided_load %arg15[%c48_212, %c0_213] {strides = array<i32: 2, 1>} : memref<64x4xf32, #tpu.memory_space<vmem>>, vector<4x4xf32>
    %c49_214 = arith.constant 49 : index
    %c0_215 = arith.constant 0 : index
    %246 = tpu.strided_load %arg15[%c49_214, %c0_215] {strides = array<i32: 2, 1>} : memref<64x4xf32, #tpu.memory_space<vmem>>, vector<4x4xf32>
    %c56 = arith.constant 56 : index
    %c0_216 = arith.constant 0 : index
    %247 = tpu.strided_load %arg15[%c56, %c0_216] {strides = array<i32: 2, 1>} : memref<64x4xf32, #tpu.memory_space<vmem>>, vector<4x4xf32>
    %c57_217 = arith.constant 57 : index
    %c0_218 = arith.constant 0 : index
    %248 = tpu.strided_load %arg15[%c57_217, %c0_218] {strides = array<i32: 2, 1>} : memref<64x4xf32, #tpu.memory_space<vmem>>, vector<4x4xf32>
    %249 = arith.maximumf %245, %246 : vector<4x4xf32>
    %250 = arith.maximumf %247, %248 : vector<4x4xf32>
    %251 = arith.maximumf %249, %250 : vector<4x4xf32>
    %c0_219 = arith.constant 0 : index
    %c12 = arith.constant 12 : index
    %c0_220 = arith.constant 0 : index
    %252 = vector.load %arg10[%c0_219, %c12, %c0_220] : memref<1x16x4xf32, #tpu.memory_space<vmem>>, vector<1x4x4xf32>
    %253 = vector.shape_cast %252 : vector<1x4x4xf32> to vector<4x4xf32>
    %254 = vector.shape_cast %251 : vector<4x4xf32> to vector<1x4x4xf32>
    tpu.vector_store %arg10[%c0_219, %c12, %c0_220], %254 {strides = array<i32>} : memref<1x16x4xf32, #tpu.memory_space<vmem>>, vector<1x4x4xf32>,
    %c0_221 = arith.constant 0 : index
    %c0_222 = arith.constant 0 : index
    %c0_223 = arith.constant 0 : index
    %255 = vector.load %arg10[%c0_221, %c0_222, %c0_223] : memref<1x16x4xf32, #tpu.memory_space<vmem>>, vector<1x16x4xf32>
    %256 = vector.shape_cast %255 : vector<1x16x4xf32> to vector<16x4xf32>
    %c0_224 = arith.constant 0 : index
    %c0_225 = arith.constant 0 : index
    %c0_226 = arith.constant 0 : index
    %257 = vector.load %arg6[%c0_224, %c0_225, %c0_226] : memref<4x4x16xf32, #tpu.memory_space<vmem>>, vector<1x4x16xf32>
    %258 = vector.shape_cast %257 : vector<1x4x16xf32> to vector<4x16xf32>
    %cst_227 = arith.constant dense<0.000000e+00> : vector<16x16xf32>
    %259 = tpu.matmul %256, %258, %cst_227 {dimension_numbers = #tpu.dot_dimension_numbers<[1], [0], [0], [1], [0, 0, 1, 1], [], []>} : vector<16x4xf32>, vector<4x16xf32>, vector<16x16xf32> -> vector<16x16xf32>
    %c0_228 = arith.constant 0 : index
    %c0_229 = arith.constant 0 : index
    %260 = vector.load %arg7[%c0_228, %c0_229] : memref<1x16xf32, #tpu.memory_space<vmem>>, vector<1x16xf32>
    %261 = vector.broadcast %260 : vector<1x16xf32> to vector<16x16xf32>
    %262 = arith.addf %259, %261 : vector<16x16xf32>
    %cst_230 = arith.constant 0.000000e+00 : f32
    %263 = vector.broadcast %cst_230 : f32 to vector<16x16xf32>
    %264 = arith.maximumf %262, %263 : vector<16x16xf32>
    %c0_231 = arith.constant 0 : index
    %c0_232 = arith.constant 0 : index
    %265 = vector.load %arg16[%c0_231, %c0_232] : memref<64x16xf32, #tpu.memory_space<vmem>>, vector<16x16xf32>
    tpu.vector_store %arg16[%c0_231, %c0_232], %264 {strides = array<i32>} : memref<64x16xf32, #tpu.memory_space<vmem>>, vector<16x16xf32>,
    %c1_233 = arith.constant 1 : index
    %c0_234 = arith.constant 0 : index
    %c0_235 = arith.constant 0 : index
    %266 = vector.load %arg6[%c1_233, %c0_234, %c0_235] : memref<4x4x16xf32, #tpu.memory_space<vmem>>, vector<1x4x16xf32>
    %267 = vector.shape_cast %266 : vector<1x4x16xf32> to vector<4x16xf32>
    %cst_236 = arith.constant dense<0.000000e+00> : vector<16x16xf32>
    %268 = tpu.matmul %256, %267, %cst_236 {dimension_numbers = #tpu.dot_dimension_numbers<[1], [0], [0], [1], [0, 0, 1, 1], [], []>} : vector<16x4xf32>, vector<4x16xf32>, vector<16x16xf32> -> vector<16x16xf32>
    %c0_237 = arith.constant 0 : index
    %c0_238 = arith.constant 0 : index
    %269 = vector.load %arg7[%c0_237, %c0_238] : memref<1x16xf32, #tpu.memory_space<vmem>>, vector<1x16xf32>
    %270 = vector.broadcast %269 : vector<1x16xf32> to vector<16x16xf32>
    %271 = arith.addf %268, %270 : vector<16x16xf32>
    %cst_239 = arith.constant 0.000000e+00 : f32
    %272 = vector.broadcast %cst_239 : f32 to vector<16x16xf32>
    %273 = arith.maximumf %271, %272 : vector<16x16xf32>
    %c16_240 = arith.constant 16 : index
    %c0_241 = arith.constant 0 : index
    %274 = vector.load %arg16[%c16_240, %c0_241] : memref<64x16xf32, #tpu.memory_space<vmem>>, vector<16x16xf32>
    tpu.vector_store %arg16[%c16_240, %c0_241], %273 {strides = array<i32>} : memref<64x16xf32, #tpu.memory_space<vmem>>, vector<16x16xf32>,
    %c2_242 = arith.constant 2 : index
    %c0_243 = arith.constant 0 : index
    %c0_244 = arith.constant 0 : index
    %275 = vector.load %arg6[%c2_242, %c0_243, %c0_244] : memref<4x4x16xf32, #tpu.memory_space<vmem>>, vector<1x4x16xf32>
    %276 = vector.shape_cast %275 : vector<1x4x16xf32> to vector<4x16xf32>
    %cst_245 = arith.constant dense<0.000000e+00> : vector<16x16xf32>
    %277 = tpu.matmul %256, %276, %cst_245 {dimension_numbers = #tpu.dot_dimension_numbers<[1], [0], [0], [1], [0, 0, 1, 1], [], []>} : vector<16x4xf32>, vector<4x16xf32>, vector<16x16xf32> -> vector<16x16xf32>
    %c0_246 = arith.constant 0 : index
    %c0_247 = arith.constant 0 : index
    %278 = vector.load %arg7[%c0_246, %c0_247] : memref<1x16xf32, #tpu.memory_space<vmem>>, vector<1x16xf32>
    %279 = vector.broadcast %278 : vector<1x16xf32> to vector<16x16xf32>
    %280 = arith.addf %277, %279 : vector<16x16xf32>
    %cst_248 = arith.constant 0.000000e+00 : f32
    %281 = vector.broadcast %cst_248 : f32 to vector<16x16xf32>
    %282 = arith.maximumf %280, %281 : vector<16x16xf32>
    %c32_249 = arith.constant 32 : index
    %c0_250 = arith.constant 0 : index
    %283 = vector.load %arg16[%c32_249, %c0_250] : memref<64x16xf32, #tpu.memory_space<vmem>>, vector<16x16xf32>
    tpu.vector_store %arg16[%c32_249, %c0_250], %282 {strides = array<i32>} : memref<64x16xf32, #tpu.memory_space<vmem>>, vector<16x16xf32>,
    %c3_251 = arith.constant 3 : index
    %c0_252 = arith.constant 0 : index
    %c0_253 = arith.constant 0 : index
    %284 = vector.load %arg6[%c3_251, %c0_252, %c0_253] : memref<4x4x16xf32, #tpu.memory_space<vmem>>, vector<1x4x16xf32>
    %285 = vector.shape_cast %284 : vector<1x4x16xf32> to vector<4x16xf32>
    %cst_254 = arith.constant dense<0.000000e+00> : vector<16x16xf32>
    %286 = tpu.matmul %256, %285, %cst_254 {dimension_numbers = #tpu.dot_dimension_numbers<[1], [0], [0], [1], [0, 0, 1, 1], [], []>} : vector<16x4xf32>, vector<4x16xf32>, vector<16x16xf32> -> vector<16x16xf32>
    %c0_255 = arith.constant 0 : index
    %c0_256 = arith.constant 0 : index
    %287 = vector.load %arg7[%c0_255, %c0_256] : memref<1x16xf32, #tpu.memory_space<vmem>>, vector<1x16xf32>
    %288 = vector.broadcast %287 : vector<1x16xf32> to vector<16x16xf32>
    %289 = arith.addf %286, %288 : vector<16x16xf32>
    %cst_257 = arith.constant 0.000000e+00 : f32
    %290 = vector.broadcast %cst_257 : f32 to vector<16x16xf32>
    %291 = arith.maximumf %289, %290 : vector<16x16xf32>
    %c48_258 = arith.constant 48 : index
    %c0_259 = arith.constant 0 : index
    %292 = vector.load %arg16[%c48_258, %c0_259] : memref<64x16xf32, #tpu.memory_space<vmem>>, vector<16x16xf32>
    tpu.vector_store %arg16[%c48_258, %c0_259], %291 {strides = array<i32>} : memref<64x16xf32, #tpu.memory_space<vmem>>, vector<16x16xf32>,
    %c0_260 = arith.constant 0 : index
    %c0_261 = arith.constant 0 : index
    %293 = vector.load %arg16[%c0_260, %c0_261] : memref<64x16xf32, #tpu.memory_space<vmem>>, vector<64x16xf32>
    %c0_262 = arith.constant 0 : index
    %c0_263 = arith.constant 0 : index
    %294 = vector.load %arg8[%c0_262, %c0_263] : memref<16x12xf32, #tpu.memory_space<vmem>>, vector<16x12xf32>
    %cst_264 = arith.constant dense<0.000000e+00> : vector<64x12xf32>
    %295 = tpu.matmul %293, %294, %cst_264 {dimension_numbers = #tpu.dot_dimension_numbers<[1], [0], [0], [1], [0, 0, 1, 1], [], []>} : vector<64x16xf32>, vector<16x12xf32>, vector<64x12xf32> -> vector<64x12xf32>
    %c0_265 = arith.constant 0 : index
    %c0_266 = arith.constant 0 : index
    %296 = vector.load %arg9[%c0_265, %c0_266] : memref<1x12xf32, #tpu.memory_space<vmem>>, vector<1x12xf32>
    %297 = vector.broadcast %296 : vector<1x12xf32> to vector<64x12xf32>
    %298 = arith.addf %295, %297 : vector<64x12xf32>
    %cst_267 = arith.constant 0.000000e+00 : f32
    %299 = vector.broadcast %cst_267 : f32 to vector<64x12xf32>
    %300 = arith.subf %299, %298 : vector<64x12xf32>
    %301 = math.exp %300 : vector<64x12xf32>
    %cst_268 = arith.constant 1.000000e+00 : f32
    %302 = vector.broadcast %cst_268 : f32 to vector<64x12xf32>
    %303 = arith.addf %302, %301 : vector<64x12xf32>
    %cst_269 = arith.constant 1.000000e+00 : f32
    %304 = vector.broadcast %cst_269 : f32 to vector<64x12xf32>
    %305 = arith.divf %304, %303 : vector<64x12xf32>
    %c0_270 = arith.constant 0 : index
    %c0_271 = arith.constant 0 : index
    %c0_272 = arith.constant 0 : index
    %306 = vector.load %arg11[%c0_270, %c0_271, %c0_272] : memref<1x64x12xf32, #tpu.memory_space<vmem>>, vector<1x64x12xf32>
    %307 = vector.shape_cast %306 : vector<1x64x12xf32> to vector<64x12xf32>
    %308 = vector.shape_cast %305 : vector<64x12xf32> to vector<1x64x12xf32>
    tpu.vector_store %arg11[%c0_270, %c0_271, %c0_272], %308 {strides = array<i32>} : memref<1x64x12xf32, #tpu.memory_space<vmem>>, vector<1x64x12xf32>,
    return
  }
  func.func @transform_0(%arg0: i32) -> (i32, i32, i32) {
    %c0_i32 = arith.constant 0 : i32
    %c0_i32_0 = arith.constant 0 : i32
    %c0_i32_1 = arith.constant 0 : i32
    return %arg0, %c0_i32, %c0_i32_0 : i32, i32, i32
  }
  func.func @transform_1(%arg0: i32) -> (i32, i32, i32) {
    %c0_i32 = arith.constant 0 : i32
    %c0_i32_0 = arith.constant 0 : i32
    %c0_i32_1 = arith.constant 0 : i32
    %c0_i32_2 = arith.constant 0 : i32
    return %c0_i32, %c0_i32_0, %c0_i32_1 : i32, i32, i32
  }
  func.func @transform_2(%arg0: i32) -> (i32, i32) {
    %c0_i32 = arith.constant 0 : i32
    %c0_i32_0 = arith.constant 0 : i32
    %c0_i32_1 = arith.constant 0 : i32
    return %c0_i32, %c0_i32_0 : i32, i32
  }
  func.func @transform_3(%arg0: i32) -> (i32, i32, i32) {
    %c0_i32 = arith.constant 0 : i32
    %c0_i32_0 = arith.constant 0 : i32
    %c0_i32_1 = arith.constant 0 : i32
    %c0_i32_2 = arith.constant 0 : i32
    return %c0_i32, %c0_i32_0, %c0_i32_1 : i32, i32, i32
  }
  func.func @transform_4(%arg0: i32) -> (i32, i32) {
    %c0_i32 = arith.constant 0 : i32
    %c0_i32_0 = arith.constant 0 : i32
    %c0_i32_1 = arith.constant 0 : i32
    return %c0_i32, %c0_i32_0 : i32, i32
  }
  func.func @transform_5(%arg0: i32) -> (i32, i32, i32) {
    %c0_i32 = arith.constant 0 : i32
    %c0_i32_0 = arith.constant 0 : i32
    %c0_i32_1 = arith.constant 0 : i32
    %c0_i32_2 = arith.constant 0 : i32
    return %c0_i32, %c0_i32_0, %c0_i32_1 : i32, i32, i32
  }
  func.func @transform_6(%arg0: i32) -> (i32, i32) {
    %c0_i32 = arith.constant 0 : i32
    %c0_i32_0 = arith.constant 0 : i32
    %c0_i32_1 = arith.constant 0 : i32
    return %c0_i32, %c0_i32_0 : i32, i32
  }
  func.func @transform_7(%arg0: i32) -> (i32, i32) {
    %c0_i32 = arith.constant 0 : i32
    %c0_i32_0 = arith.constant 0 : i32
    %c0_i32_1 = arith.constant 0 : i32
    return %c0_i32, %c0_i32_0 : i32, i32
  }
  func.func @transform_8(%arg0: i32) -> (i32, i32) {
    %c0_i32 = arith.constant 0 : i32
    %c0_i32_0 = arith.constant 0 : i32
    %c0_i32_1 = arith.constant 0 : i32
    return %c0_i32, %c0_i32_0 : i32, i32
  }
  func.func @transform_9(%arg0: i32) -> (i32, i32, i32) {
    %c0_i32 = arith.constant 0 : i32
    %c0_i32_0 = arith.constant 0 : i32
    %c0_i32_1 = arith.constant 0 : i32
    return %arg0, %c0_i32, %c0_i32_0 : i32, i32, i32
  }
  func.func @transform_10(%arg0: i32) -> (i32, i32, i32) {
    %c0_i32 = arith.constant 0 : i32
    %c0_i32_0 = arith.constant 0 : i32
    %c0_i32_1 = arith.constant 0 : i32
    return %arg0, %c0_i32, %c0_i32_0 : i32, i32, i32
  }
}

</mosaic_0001>

<llo_original>
// kernel: tile.9
$region0: #{tile.9}
  %s0 = inlined_call_operand.vmem [shape: f32[4,3], index: 0, kind: input, shape index: {}]
  %s1 = inlined_call_operand.vmem [shape: f32[1,12], index: 1, kind: output, shape index: {}]
  $region1: #{tile.9} parent=0
    #allocation0 [shape = 'u8[4096]{0}', space=vmem, size = 0x1000, scoped, tag = 'scoped mem for output reshape']
    #allocation1 [shape = 'u8[4096]{0}', space=vmem, size = 0x1000, scoped, tag = 'scoped mem for input reshape']
    %s3 = ssub.s32 16, 1
    %v4 = vld [vmem:[%s0] sm:%s3]
    %5 = vst [vmem:[#allocation1] sm:%s3] %v4
    %v6 = vld [vmem:[#allocation1] sm:$0x1]
    %vm7 = vcmask 23552
    %8 = vst.msk [vmem:[#allocation0] sm:$0x1] %vm7, %v6
    %s9 = scalar_lea.vmem [#allocation1], 3
    %v10 = vld [vmem:[%s9] sm:$0x1]
    %11 = vrot.lane.b32.xlu0 %v10, 9
    %v12 = vpop.permute.xlu0 %11
    %vm13 = vcmask 97352
    %14 = vst.msk [vmem:[#allocation0] sm:$0x1] %vm13, %v12
    %s15 = scalar_lea.vmem [#allocation1], 2
    %v16 = vld [vmem:[%s15] sm:$0x1]
    %17 = vrot.lane.b32.xlu0 %v16, 6
    %v18 = vpop.permute.xlu0 %17
    %vm19 = vcmask 72752
    %20 = vst.msk [vmem:[#allocation0] sm:$0x1] %vm19, %v18
    %s21 = scalar_lea.vmem [#allocation1], 1
    %v22 = vld [vmem:[%s21] sm:$0x1]
    %23 = vrot.lane.b32.xlu0 %v22, 3
    %v24 = vpop.permute.xlu0 %23
    %vm25 = vcmask 48152
    %26 = vst.msk [vmem:[#allocation0] sm:$0x1] %vm25, %v24
    %s28 = ssub.s32 2, 1
    %v29 = vld [vmem:[#allocation0] sm:%s28]
    %s31 = ssub.s32 2, 1
    %32 = vst [vmem:[%s1] sm:%s31] %v29

// kernel: tile.8
$region0: #{tile.8}
  #allocation2 [shape = 's32[1]{0}', space=sflag, size = 0x4, scoped, tag = 'scoped memory for tile.8']
  %s0 = inlined_call_operand.hbm [shape: f32[3], index: 0, kind: input, shape index: {}]
  %s1 = inlined_call_operand.vmem [shape: f32[4,3], index: 1, kind: output, shape index: {}]
  $region1: #{tile.8} parent=0
    #allocation0 [shape = 'u8[512]{0}', space=vmem, size = 0x400, scoped, tag = 'operand span for operand 0']
    #allocation1 [shape = 's32[1]{0}', space=sflag, size = 0x4, scoped, tag = 'scoped memory for tile.8']
    %2 = vsyncpa [#allocation1], 0
    // Predicated region
    $region2: #{tile.8} parent=1 // pred_check
      _
    $region3: #{tile.8} parent=1 // pred_check_branch
      %4 = sbr.rel (0) target = $region5
    $region4: #{tile.8} parent=1 // pred_region
      %6 = vsyncadd [#allocation1], 0
      %s8 = sshll.u32 %s0, 4
      %s9 = int_to_ptr.hbm [resolvable:$true] %s8
      %s10 = sshll.u32 [#allocation0], 4
      %s11 = int_to_ptr.vmem [resolvable:$true] %s10
      %13 = dma.hbm_to_vmem [thread:$0]  %s9, 16, %s11, [#allocation1]
    $region5: #{tile.8} parent=1 // pred_fallthru
      _
    // Predicated region
    $region6: #{tile.8} parent=1 // pred_check
      _
    $region7: #{tile.8} parent=1 // pred_check_branch
      %15 = sbr.rel (0) target = $region9
    $region8: #{tile.8} parent=1 // pred_region
      %17 = dma.done [#allocation1], 16
    $region9: #{tile.8} parent=1 // pred_fallthru
      _
    %v18 = vld [vmem:[#allocation0] ss:$0 sm:$0xff]
    %19 = vst [vmem:[%s1] sm:$0xf] %v18
    %20 = vsyncpa [#allocation1], 1

// kernel: autoencoder_forward.1
$region0: #{autoencoder_forward.1}
  #allocation0 [shape = 'u32[]', space=smem, size = 0x4, offset = 0x4, fixed_abs, tag = 'smem constant byte address 0x4 - core index']
  #allocation1 [shape = 'u32[72,128]{1,0:T(1,128)}', space=vmem, size = 0x9000, scoped, tag = 'internal scratch']
  #allocation2 [shape = 'f32[290,3]{1,0:T(8,128)}', space=vmem, size = 0x25000, scoped, tag = 'scratch operand']
  #allocation3 [shape = 'f32[256,16]{1,0:T(8,128)}', space=vmem, size = 0x20000, scoped, tag = 'scratch operand']
  #allocation4 [shape = 'f32[82,16]{1,0:T(8,128)}', space=vmem, size = 0xb000, scoped, tag = 'scratch operand']
  #allocation5 [shape = 'f32[64,4]{1,0:T(8,128)}', space=vmem, size = 0x8000, scoped, tag = 'scratch operand']
  #allocation6 [shape = 'f32[64,16]{1,0:T(8,128)}', space=vmem, size = 0x8000, scoped, tag = 'scratch operand']
  %s0 = inlined_call_operand.vmem [shape: f32[2,256,3], index: 0, kind: input, shape index: {}]
  %s1 = inlined_call_operand.vmem [shape: f32[9,3,16], index: 1, kind: input, shape index: {}]
  %s2 = inlined_call_operand.vmem [shape: f32[1,16], index: 2, kind: input, shape index: {}]
  %s3 = inlined_call_operand.vmem [shape: f32[9,16,4], index: 3, kind: input, shape index: {}]
  %s4 = inlined_call_operand.vmem [shape: f32[1,4], index: 4, kind: input, shape index: {}]
  %s5 = inlined_call_operand.vmem [shape: f32[4,4,16], index: 5, kind: input, shape index: {}]
  %s6 = inlined_call_operand.vmem [shape: f32[1,16], index: 6, kind: input, shape index: {}]
  %s7 = inlined_call_operand.vmem [shape: f32[16,12], index: 7, kind: input, shape index: {}]
  %s8 = inlined_call_operand.vmem [shape: f32[1,12], index: 8, kind: input, shape index: {}]
  %s9 = inlined_call_operand.vmem [shape: f32[2,16,4], index: 9, kind: output, shape index: {0}]
  %s10 = inlined_call_operand.vmem [shape: f32[2,64,12], index: 10, kind: output, shape index: {1}]
  %11 = xla_tuple %s9, %s10
  %s12 = sld [smem:[#allocation0]]
  $region77: #{autoencoder_forward.1} parent=0
    _
  %s14 = ssub.s32 1, %s12
  %s15 = scalar_select 0, %s14, %s12
  loop: start=0, step=1, limit=4
  $region2: #{autoencoder_forward.1} parent=0 // loop_pre_header
    _
  $region3: #{autoencoder_forward.1} parent=0 // loop_header
    %s17 = sphi 0, %s21
    %p18 = scmp.ge.s32.totalorder %s17, 4
    %s27 = sphi 0, %s29
    %s30 = sphi 0, %s27
    %s31 = sphi 0, %s30
    %s47 = sphi 0, %s31
    %s51 = sphi 0, %s51
    %s53 = sphi 0, %s51
    %s54 = sphi 0, %s53
    %s68 = sphi 0, %s54
    %s72 = sphi 0, %s72
    %s74 = sphi 0, %s72
    %s75 = sphi 0, %s74
    %s89 = sphi 0, %s75
    %s93 = sphi 0, %s93
    %s95 = sphi 0, %s93
    %s96 = sphi 0, %s95
    %s110 = sphi 0, %s96
    %s114 = sphi 0, %s114
    %s116 = sphi 0, %s114
    %s117 = sphi 0, %s116
    %s131 = sphi 0, %s117
    %s135 = sphi 0, %s135
    %s137 = sphi 0, %s135
    %s138 = sphi 0, %s137
    %s152 = sphi 0, %s138
    %s156 = sphi 0, %s156
    %s158 = sphi 0, %s156
    %s159 = sphi 0, %s158
    %s173 = sphi 0, %s159
    %s177 = sphi 0, %s177
    %s179 = sphi 0, %s177
    %s180 = sphi 0, %s179
    %s194 = sphi 0, %s180
    %s198 = sphi 0, %s198
    %s200 = sphi 0, %s198
    %s201 = sphi 0, %s200
    %s215 = sphi 0, %s201
    %s221 = sphi 0, %s223
    %s224 = sphi 0, %s221
    %s225 = sphi 0, %s224
    %s241 = sphi 0, %s225
    %s247 = sphi 0, %s249
    %s250 = sphi 0, %s247
    %s251 = sphi 0, %s250
    %s267 = sphi 0, %s251
  $region4: #{autoencoder_forward.1} parent=0 // loop_header_branch
    %20 = sbr.rel (%p18) target = $region8
  $region5: #{autoencoder_forward.1} parent=0 // loop_body
    %s22 = ssub.s32 %s17, 1
    %s23 = ssub.s32 %s17, 2
    %s24 = sadd.s32 %s17, 1
    %s25 = ssub.s32 %s17, %s24
    %p26 = scmp.eq.s32.totalorder %s25, 0
    %s28 = sadd.s32 %s27, 1
    %s29 = scalar_select %p26, %s27, %s28
    %p32 = pneg %p26
    %p33 = scmp.eq.s32.totalorder %s17, 1
    %p34 = por %p32, %p33
    %p35 = scmp.ne.s32.totalorder %s27, %s30
    %p36 = scmp.eq.s32.totalorder %s17, 0
    %p37 = por %p35, %p36
    %p38 = scmp.ne.s32.totalorder %s27, %s30
    %p39 = scmp.eq.s32.totalorder %s22, 1
    %p40 = por %p38, %p39
    %p41 = scmp.ne.s32.totalorder %s30, %s31
    %p42 = scmp.eq.s32.totalorder %s22, 0
    %p43 = por %p41, %p42
    %p44 = scmp.ne.s32.totalorder %s30, %s31
    %p45 = scmp.eq.s32.totalorder %s23, 1
    %p46 = por %p44, %p45
    %p48 = scmp.ne.s32.totalorder %s31, %s47
    %p49 = scmp.eq.s32.totalorder %s23, 0
    %p50 = por %p48, %p49
    %s52 = sadd.s32 %s51, 1
    %p55 = scmp.eq.s32.totalorder %s17, 1
    %p56 = scmp.ne.s32.totalorder %s51, %s53
    %p57 = scmp.eq.s32.totalorder %s17, 0
    %p58 = por %p56, %p57
    %p59 = scmp.ne.s32.totalorder %s51, %s53
    %p60 = scmp.eq.s32.totalorder %s22, 1
    %p61 = por %p59, %p60
    %p62 = scmp.ne.s32.totalorder %s53, %s54
    %p63 = scmp.eq.s32.totalorder %s22, 0
    %p64 = por %p62, %p63
    %p65 = scmp.ne.s32.totalorder %s53, %s54
    %p66 = scmp.eq.s32.totalorder %s23, 1
    %p67 = por %p65, %p66
    %p69 = scmp.ne.s32.totalorder %s54, %s68
    %p70 = scmp.eq.s32.totalorder %s23, 0
    %p71 = por %p69, %p70
    %s73 = sadd.s32 %s72, 1
    %p76 = scmp.eq.s32.totalorder %s17, 1
    %p77 = scmp.ne.s32.totalorder %s72, %s74
    %p78 = scmp.eq.s32.totalorder %s17, 0
    %p79 = por %p77, %p78
    %p80 = scmp.ne.s32.totalorder %s72, %s74
    %p81 = scmp.eq.s32.totalorder %s22, 1
    %p82 = por %p80, %p81
    %p83 = scmp.ne.s32.totalorder %s74, %s75
    %p84 = scmp.eq.s32.totalorder %s22, 0
    %p85 = por %p83, %p84
    %p86 = scmp.ne.s32.totalorder %s74, %s75
    %p87 = scmp.eq.s32.totalorder %s23, 1
    %p88 = por %p86, %p87
    %p90 = scmp.ne.s32.totalorder %s75, %s89
    %p91 = scmp.eq.s32.totalorder %s23, 0
    %p92 = por %p90, %p91
    %s94 = sadd.s32 %s93, 1
    %p97 = scmp.eq.s32.totalorder %s17, 1
    %p98 = scmp.ne.s32.totalorder %s93, %s95
    %p99 = scmp.eq.s32.totalorder %s17, 0
    %p100 = por %p98, %p99
    %p101 = scmp.ne.s32.totalorder %s93, %s95
    %p102 = scmp.eq.s32.totalorder %s22, 1
    %p103 = por %p101, %p102
    %p104 = scmp.ne.s32.totalorder %s95, %s96
    %p105 = scmp.eq.s32.totalorder %s22, 0
    %p106 = por %p104, %p105
    %p107 = scmp.ne.s32.totalorder %s95, %s96
    %p108 = scmp.eq.s32.totalorder %s23, 1
    %p109 = por %p107, %p108
    %p111 = scmp.ne.s32.totalorder %s96, %s110
    %p112 = scmp.eq.s32.totalorder %s23, 0
    %p113 = por %p111, %p112
    %s115 = sadd.s32 %s114, 1
    %p118 = scmp.eq.s32.totalorder %s17, 1
    %p119 = scmp.ne.s32.totalorder %s114, %s116
    %p120 = scmp.eq.s32.totalorder %s17, 0
    %p121 = por %p119, %p120
    %p122 = scmp.ne.s32.totalorder %s114, %s116
    %p123 = scmp.eq.s32.totalorder %s22, 1
    %p124 = por %p122, %p123
    %p125 = scmp.ne.s32.totalorder %s116, %s117
    %p126 = scmp.eq.s32.totalorder %s22, 0
    %p127 = por %p125, %p126
    %p128 = scmp.ne.s32.totalorder %s116, %s117
    %p129 = scmp.eq.s32.totalorder %s23, 1
    %p130 = por %p128, %p129
    %p132 = scmp.ne.s32.totalorder %s117, %s131
    %p133 = scmp.eq.s32.totalorder %s23, 0
    %p134 = por %p132, %p133
    %s136 = sadd.s32 %s135, 1
    %p139 = scmp.eq.s32.totalorder %s17, 1
    %p140 = scmp.ne.s32.totalorder %s135, %s137
    %p141 = scmp.eq.s32.totalorder %s17, 0
    %p142 = por %p140, %p141
    %p143 = scmp.ne.s32.totalorder %s135, %s137
    %p144 = scmp.eq.s32.totalorder %s22, 1
    %p145 = por %p143, %p144
    %p146 = scmp.ne.s32.totalorder %s137, %s138
    %p147 = scmp.eq.s32.totalorder %s22, 0
    %p148 = por %p146, %p147
    %p149 = scmp.ne.s32.totalorder %s137, %s138
    %p150 = scmp.eq.s32.totalorder %s23, 1
    %p151 = por %p149, %p150
    %p153 = scmp.ne.s32.totalorder %s138, %s152
    %p154 = scmp.eq.s32.totalorder %s23, 0
    %p155 = por %p153, %p154
    %s157 = sadd.s32 %s156, 1
    %p160 = scmp.eq.s32.totalorder %s17, 1
    %p161 = scmp.ne.s32.totalorder %s156, %s158
    %p162 = scmp.eq.s32.totalorder %s17, 0
    %p163 = por %p161, %p162
    %p164 = scmp.ne.s32.totalorder %s156, %s158
    %p165 = scmp.eq.s32.totalorder %s22, 1
    %p166 = por %p164, %p165
    %p167 = scmp.ne.s32.totalorder %s158, %s159
    %p168 = scmp.eq.s32.totalorder %s22, 0
    %p169 = por %p167, %p168
    %p170 = scmp.ne.s32.totalorder %s158, %s159
    %p171 = scmp.eq.s32.totalorder %s23, 1
    %p172 = por %p170, %p171
    %p174 = scmp.ne.s32.totalorder %s159, %s173
    %p175 = scmp.eq.s32.totalorder %s23, 0
    %p176 = por %p174, %p175
    %s178 = sadd.s32 %s177, 1
    %p181 = scmp.eq.s32.totalorder %s17, 1
    %p182 = scmp.ne.s32.totalorder %s177, %s179
    %p183 = scmp.eq.s32.totalorder %s17, 0
    %p184 = por %p182, %p183
    %p185 = scmp.ne.s32.totalorder %s177, %s179
    %p186 = scmp.eq.s32.totalorder %s22, 1
    %p187 = por %p185, %p186
    %p188 = scmp.ne.s32.totalorder %s179, %s180
    %p189 = scmp.eq.s32.totalorder %s22, 0
    %p190 = por %p188, %p189
    %p191 = scmp.ne.s32.totalorder %s179, %s180
    %p192 = scmp.eq.s32.totalorder %s23, 1
    %p193 = por %p191, %p192
    %p195 = scmp.ne.s32.totalorder %s180, %s194
    %p196 = scmp.eq.s32.totalorder %s23, 0
    %p197 = por %p195, %p196
    %s199 = sadd.s32 %s198, 1
    %p202 = scmp.eq.s32.totalorder %s17, 1
    %p203 = scmp.ne.s32.totalorder %s198, %s200
    %p204 = scmp.eq.s32.totalorder %s17, 0
    %p205 = por %p203, %p204
    %p206 = scmp.ne.s32.totalorder %s198, %s200
    %p207 = scmp.eq.s32.totalorder %s22, 1
    %p208 = por %p206, %p207
    %p209 = scmp.ne.s32.totalorder %s200, %s201
    %p210 = scmp.eq.s32.totalorder %s22, 0
    %p211 = por %p209, %p210
    %p212 = scmp.ne.s32.totalorder %s200, %s201
    %p213 = scmp.eq.s32.totalorder %s23, 1
    %p214 = por %p212, %p213
    %p216 = scmp.ne.s32.totalorder %s201, %s215
    %p217 = scmp.eq.s32.totalorder %s23, 0
    %p218 = por %p216, %p217
    %s219 = ssub.s32 %s17, %s24
    %p220 = scmp.eq.s32.totalorder %s219, 0
    %s222 = sadd.s32 %s221, 1
    %s223 = scalar_select %p220, %s221, %s222
    %p226 = pneg %p220
    %p227 = scmp.eq.s32.totalorder %s17, 1
    %p228 = por %p226, %p227
    %p229 = scmp.ne.s32.totalorder %s221, %s224
    %p230 = scmp.eq.s32.totalorder %s17, 0
    %p231 = por %p229, %p230
    %p232 = scmp.ne.s32.totalorder %s221, %s224
    %p233 = scmp.eq.s32.totalorder %s22, 1
    %p234 = por %p232, %p233
    %p235 = scmp.ne.s32.totalorder %s224, %s225
    %p236 = scmp.eq.s32.totalorder %s22, 0
    %p237 = por %p235, %p236
    %p238 = scmp.ne.s32.totalorder %s224, %s225
    %p239 = scmp.eq.s32.totalorder %s23, 1
    %p240 = por %p238, %p239
    %p242 = scmp.ne.s32.totalorder %s225, %s241
    %p243 = scmp.eq.s32.totalorder %s23, 0
    %p244 = por %p242, %p243
    %s245 = ssub.s32 %s17, %s24
    %p246 = scmp.eq.s32.totalorder %s245, 0
    %s248 = sadd.s32 %s247, 1
    %s249 = scalar_select %p246, %s247, %s248
    %p252 = pneg %p246
    %p253 = scmp.eq.s32.totalorder %s17, 1
    %p254 = por %p252, %p253
    %p255 = scmp.ne.s32.totalorder %s247, %s250
    %p256 = scmp.eq.s32.totalorder %s17, 0
    %p257 = por %p255, %p256
    %p258 = scmp.ne.s32.totalorder %s247, %s250
    %p259 = scmp.eq.s32.totalorder %s22, 1
    %p260 = por %p258, %p259
    %p261 = scmp.ne.s32.totalorder %s250, %s251
    %p262 = scmp.eq.s32.totalorder %s22, 0
    %p263 = por %p261, %p262
    %p264 = scmp.ne.s32.totalorder %s250, %s251
    %p265 = scmp.eq.s32.totalorder %s23, 1
    %p266 = por %p264, %p265
    %p268 = scmp.ne.s32.totalorder %s251, %s267
    %p269 = scmp.eq.s32.totalorder %s23, 0
    %p270 = por %p268, %p269
    %p271 = scmp.le.s32.totalorder 1, %s17
    %p272 = scmp.lt.s32.totalorder %s17, 3
    %p273 = pnand %p271, %p272
    %p274 = pneg %p273
    // Predicated region
    $region9: #{autoencoder_forward.1} parent=5 // pred_check
      _
    $region10: #{autoencoder_forward.1} parent=5 // pred_check_branch
      %276 = sbr.rel (%p273) target = $region12
    $region11: #{autoencoder_forward.1} parent=5 // pred_region
      %s277 = ssub.s32 %s17, 1
      // Predicated region
      $region13: #{autoencoder_forward.1} parent=11 // pred_check
        %p278 = pneg %p64
      $region14: #{autoencoder_forward.1} parent=11 // pred_check_branch
        %280 = sbr.rel (%p278) target = $region16
      $region15: #{autoencoder_forward.1} parent=11 // pred_region
        _
      $region16: #{autoencoder_forward.1} parent=11 // pred_fallthru
        _
      // Predicated region
      $region17: #{autoencoder_forward.1} parent=11 // pred_check
        %p281 = pneg %p85
      $region18: #{autoencoder_forward.1} parent=11 // pred_check_branch
        %283 = sbr.rel (%p281) target = $region20
      $region19: #{autoencoder_forward.1} parent=11 // pred_region
        _
      $region20: #{autoencoder_forward.1} parent=11 // pred_fallthru
        _
      // Predicated region
      $region21: #{autoencoder_forward.1} parent=11 // pred_check
        %p284 = pneg %p106
      $region22: #{autoencoder_forward.1} parent=11 // pred_check_branch
        %286 = sbr.rel (%p284) target = $region24
      $region23: #{autoencoder_forward.1} parent=11 // pred_region
        _
      $region24: #{autoencoder_forward.1} parent=11 // pred_fallthru
        _
      // Predicated region
      $region25: #{autoencoder_forward.1} parent=11 // pred_check
        %p287 = pneg %p127
      $region26: #{autoencoder_forward.1} parent=11 // pred_check_branch
        %289 = sbr.rel (%p287) target = $region28
      $region27: #{autoencoder_forward.1} parent=11 // pred_region
        _
      $region28: #{autoencoder_forward.1} parent=11 // pred_fallthru
        _
      // Predicated region
      $region29: #{autoencoder_forward.1} parent=11 // pred_check
        %p290 = pneg %p148
      $region30: #{autoencoder_forward.1} parent=11 // pred_check_branch
        %292 = sbr.rel (%p290) target = $region32
      $region31: #{autoencoder_forward.1} parent=11 // pred_region
        _
      $region32: #{autoencoder_forward.1} parent=11 // pred_fallthru
        _
      // Predicated region
      $region33: #{autoencoder_forward.1} parent=11 // pred_check
        %p293 = pneg %p169
      $region34: #{autoencoder_forward.1} parent=11 // pred_check_branch
        %295 = sbr.rel (%p293) target = $region36
      $region35: #{autoencoder_forward.1} parent=11 // pred_region
        _
      $region36: #{autoencoder_forward.1} parent=11 // pred_fallthru
        _
      // Predicated region
      $region37: #{autoencoder_forward.1} parent=11 // pred_check
        %p296 = pneg %p190
      $region38: #{autoencoder_forward.1} parent=11 // pred_check_branch
        %298 = sbr.rel (%p296) target = $region40
      $region39: #{autoencoder_forward.1} parent=11 // pred_region
        _
      $region40: #{autoencoder_forward.1} parent=11 // pred_fallthru
        _
      // Predicated region
      $region41: #{autoencoder_forward.1} parent=11 // pred_check
        %p299 = pneg %p211
      $region42: #{autoencoder_forward.1} parent=11 // pred_check_branch
        %301 = sbr.rel (%p299) target = $region44
      $region43: #{autoencoder_forward.1} parent=11 // pred_region
        _
      $region44: #{autoencoder_forward.1} parent=11 // pred_fallthru
        _
    $region12: #{autoencoder_forward.1} parent=5 // pred_fallthru
      _
    %p302 = scmp.lt.s32.totalorder %s17, 2
    // Predicated region
    $region45: #{autoencoder_forward.1} parent=5 // pred_check
      %p303 = pneg %p302
    $region46: #{autoencoder_forward.1} parent=5 // pred_check_branch
      %305 = sbr.rel (%p303) target = $region48
    $region47: #{autoencoder_forward.1} parent=5 // pred_region
      // Predicated region
      $region49: #{autoencoder_forward.1} parent=47 // pred_check
        %p306 = pneg %p37
      $region50: #{autoencoder_forward.1} parent=47 // pred_check_branch
        %308 = sbr.rel (%p306) target = $region52
      $region51: #{autoencoder_forward.1} parent=47 // pred_region
        %p309 = scmp.lt.s32.totalorder %s17, 1
        %s310 = scalar_select %p309, %s17, 1
        %s311 = smul.addr %s310, 32
        %s312 = smul.addr %s311, 8
        %s313 = scalar_lea.vmem %s0, %s312
      $region52: #{autoencoder_forward.1} parent=47 // pred_fallthru
        _
    $region48: #{autoencoder_forward.1} parent=5 // pred_fallthru
      _
    %p314 = scmp.le.s32.totalorder 1, %s17
    %p315 = scmp.lt.s32.totalorder %s17, 3
    %p316 = pnand %p314, %p315
    %p317 = pneg %p316
    // Predicated region
    $region53: #{autoencoder_forward.1} parent=5 // pred_check
      _
    $region54: #{autoencoder_forward.1} parent=5 // pred_check_branch
      %319 = sbr.rel (%p316) target = $region56
    $region55: #{autoencoder_forward.1} parent=5 // pred_region
      %s320 = ssub.s32 %s17, 1
      %p321 = scmp.lt.s32.totalorder %s22, 1
      %s322 = scalar_select %p321, %s22, 1
      %s323 = smul.addr %s322, 32
      %s324 = smul.addr %s323, 8
      %s325 = scalar_lea.vmem %s0, %s324
      %p326 = pneg %p43
      %p327 = pneg %p40
      %p328 = pneg %p64
      %p329 = pneg %p61
      %p330 = pneg %p85
      %p331 = pneg %p82
      %p332 = pneg %p106
      %p333 = pneg %p103
      %p334 = pneg %p127
      %p335 = pneg %p124
      %p336 = pneg %p148
      %p337 = pneg %p145
      %p338 = pneg %p169
      %p339 = pneg %p166
      %p340 = pneg %p190
      %p341 = pneg %p187
      %p342 = pneg %p211
      %p343 = pneg %p208
      %p344 = pneg %p237
      %p345 = pneg %p234
      %p346 = scmp.lt.s32.totalorder %s22, 1
      %s347 = scalar_select %p346, %s22, 1
      %s348 = smul.addr %s347, 2
      %s349 = smul.addr %s348, 8
      %s350 = scalar_lea.vmem %s9, %s349
      %p351 = pneg %p263
      %p352 = pneg %p260
      %p353 = scmp.lt.s32.totalorder %s22, 1
      %s354 = scalar_select %p353, %s22, 1
      %s355 = smul.addr %s354, 8
      %s356 = smul.addr %s355, 8
      %s357 = scalar_lea.vmem %s10, %s356
      %p358 = scmp.lt.s32.totalorder %s22, 1
      %s359 = scalar_select %p358, %s22, 1
      %s360 = smul.addr %s359, 32
      %s361 = smul.addr %s360, 8
      %s362 = scalar_lea.vmem %s0, %s361
      %p363 = scmp.lt.s32.totalorder %s22, 1
      %s364 = scalar_select %p363, %s22, 1
      %s365 = smul.addr %s364, 2
      %s366 = smul.addr %s365, 8
      %s367 = scalar_lea.vmem %s9, %s366
      %p368 = scmp.lt.s32.totalorder %s22, 1
      %s369 = scalar_select %p368, %s22, 1
      %s370 = smul.addr %s369, 8
      %s371 = smul.addr %s370, 8
      %s372 = scalar_lea.vmem %s10, %s371
      %vm373 = vcmask 23552
      %374 = vst.msk [vmem:[#allocation2] sm:$0xff] %vm373, 0.0
      %375 = vst.msk [vmem:[#allocation2 + $0x8] sm:$0xff] %vm373, 0.0
      %vm376 = vcmask 16384
      %377 = vst.msk [vmem:[#allocation2 + $0x10] sm:$0x1] %vm376, 0.0
      %378 = vst.msk [vmem:[#allocation2 + $0x111] sm:$0xff] %vm373, 0.0
      %379 = vst.msk [vmem:[#allocation2 + $0x119] sm:$0xff] %vm373, 0.0
      %380 = vst.msk [vmem:[#allocation2 + $0x121] sm:$0x1] %vm376, 0.0
      %v381 = vld [vmem:[%s362] sm:$0xff]
      %v382 = vld [vmem:[%s362 + $0x8] sm:$0xff]
      %v383 = vld [vmem:[%s362 + $0x10] sm:$0xff]
      %v384 = vld [vmem:[%s362 + $0x18] sm:$0xff]
      %v385 = vld [vmem:[%s362 + $0x20] sm:$0xff]
      %v386 = vld [vmem:[%s362 + $0x28] sm:$0xff]
      %v387 = vld [vmem:[%s362 + $0x30] sm:$0xff]
      %v388 = vld [vmem:[%s362 + $0x38] sm:$0xff]
      %v389 = vld [vmem:[%s362 + $0x40] sm:$0xff]
      %v390 = vld [vmem:[%s362 + $0x48] sm:$0xff]
      %v391 = vld [vmem:[%s362 + $0x50] sm:$0xff]
      %v392 = vld [vmem:[%s362 + $0x58] sm:$0xff]
      %v393 = vld [vmem:[%s362 + $0x60] sm:$0xff]
      %v394 = vld [vmem:[%s362 + $0x68] sm:$0xff]
      %v395 = vld [vmem:[%s362 + $0x70] sm:$0xff]
      %v396 = vld [vmem:[%s362 + $0x78] sm:$0xff]
      %v397 = vld [vmem:[%s362 + $0x80] sm:$0xff]
      %v398 = vld [vmem:[%s362 + $0x88] sm:$0xff]
      %v399 = vld [vmem:[%s362 + $0x90] sm:$0xff]
      %v400 = vld [vmem:[%s362 + $0x98] sm:$0xff]
      %v401 = vld [vmem:[%s362 + $0xa0] sm:$0xff]
      %v402 = vld [vmem:[%s362 + $0xa8] sm:$0xff]
      %v403 = vld [vmem:[%s362 + $0xb0] sm:$0xff]
      %v404 = vld [vmem:[%s362 + $0xb8] sm:$0xff]
      %v405 = vld [vmem:[%s362 + $0xc0] sm:$0xff]
      %v406 = vld [vmem:[%s362 + $0xc8] sm:$0xff]
      %v407 = vld [vmem:[%s362 + $0xd0] sm:$0xff]
      %v408 = vld [vmem:[%s362 + $0xd8] sm:$0xff]
      %v409 = vld [vmem:[%s362 + $0xe0] sm:$0xff]
      %v410 = vld [vmem:[%s362 + $0xe8] sm:$0xff]
      %v411 = vld [vmem:[%s362 + $0xf0] sm:$0xff]
      %v412 = vld [vmem:[%s362 + $0xf8] sm:$0xff]
      %413 = vst.msk [vmem:[#allocation2 + $0x11] sm:$0xff] %vm373, %v381
      %414 = vst.msk [vmem:[#allocation2 + $0x19] sm:$0xff] %vm373, %v382
      %415 = vst.msk [vmem:[#allocation2 + $0x21] sm:$0xff] %vm373, %v383
      %416 = vst.msk [vmem:[#allocation2 + $0x29] sm:$0xff] %vm373, %v384
      %417 = vst.msk [vmem:[#allocation2 + $0x31] sm:$0xff] %vm373, %v385
      %418 = vst.msk [vmem:[#allocation2 + $0x39] sm:$0xff] %vm373, %v386
      %419 = vst.msk [vmem:[#allocation2 + $0x41] sm:$0xff] %vm373, %v387
      %420 = vst.msk [vmem:[#allocation2 + $0x49] sm:$0xff] %vm373, %v388
      %421 = vst.msk [vmem:[#allocation2 + $0x51] sm:$0xff] %vm373, %v389
      %422 = vst.msk [vmem:[#allocation2 + $0x59] sm:$0xff] %vm373, %v390
      %423 = vst.msk [vmem:[#allocation2 + $0x61] sm:$0xff] %vm373, %v391
      %424 = vst.msk [vmem:[#allocation2 + $0x69] sm:$0xff] %vm373, %v392
      %425 = vst.msk [vmem:[#allocation2 + $0x71] sm:$0xff] %vm373, %v393
      %426 = vst.msk [vmem:[#allocation2 + $0x79] sm:$0xff] %vm373, %v394
      %427 = vst.msk [vmem:[#allocation2 + $0x81] sm:$0xff] %vm373, %v395
      %428 = vst.msk [vmem:[#allocation2 + $0x89] sm:$0xff] %vm373, %v396
      %429 = vst.msk [vmem:[#allocation2 + $0x91] sm:$0xff] %vm373, %v397
      %430 = vst.msk [vmem:[#allocation2 + $0x99] sm:$0xff] %vm373, %v398
      %431 = vst.msk [vmem:[#allocation2 + $0xa1] sm:$0xff] %vm373, %v399
      %432 = vst.msk [vmem:[#allocation2 + $0xa9] sm:$0xff] %vm373, %v400
      %433 = vst.msk [vmem:[#allocation2 + $0xb1] sm:$0xff] %vm373, %v401
      %434 = vst.msk [vmem:[#allocation2 + $0xb9] sm:$0xff] %vm373, %v402
      %435 = vst.msk [vmem:[#allocation2 + $0xc1] sm:$0xff] %vm373, %v403
      %436 = vst.msk [vmem:[#allocation2 + $0xc9] sm:$0xff] %vm373, %v404
      %437 = vst.msk [vmem:[#allocation2 + $0xd1] sm:$0xff] %vm373, %v405
      %438 = vst.msk [vmem:[#allocation2 + $0xd9] sm:$0xff] %vm373, %v406
      %439 = vst.msk [vmem:[#allocation2 + $0xe1] sm:$0xff] %vm373, %v407
      %440 = vst.msk [vmem:[#allocation2 + $0xe9] sm:$0xff] %vm373, %v408
      %441 = vst.msk [vmem:[#allocation2 + $0xf1] sm:$0xff] %vm373, %v409
      %442 = vst.msk [vmem:[#allocation2 + $0xf9] sm:$0xff] %vm373, %v410
      %443 = vst.msk [vmem:[#allocation2 + $0x101] sm:$0xff] %vm373, %v411
      %444 = vst.msk [vmem:[#allocation2 + $0x109] sm:$0xff] %vm373, %v412
      %v445 = vlaneseq
      %v446 = vshrl.u32 %v445, 7
      %v447 = vadd.s32 %v446, 8
      %v448 = vadd.s32 %v446, 16
      %v449 = vadd.s32 %v446, 24
      %v450 = vadd.s32 %v446, 32
      %v451 = vadd.s32 %v446, 40
      %v452 = vadd.s32 %v446, 48
      %v453 = vadd.s32 %v446, 56
      %v454 = vadd.s32 %v446, 64
      %v455 = vadd.s32 %v446, 72
      %v456 = vadd.s32 %v446, 80
      %v457 = vadd.s32 %v446, 88
      %v458 = vadd.s32 %v446, 96
      %v459 = vadd.s32 %v446, 104
      %v460 = vadd.s32 %v446, 112
      %v461 = vadd.s32 %v446, 120
      %v462 = vadd.s32 %v446, 128
      %v463 = vadd.s32 %v446, 136
      %v464 = vadd.s32 %v446, 144
      %v465 = vadd.s32 %v446, 152
      %v466 = vadd.s32 %v446, 160
      %v467 = vadd.s32 %v446, 168
      %v468 = vadd.s32 %v446, 176
      %v469 = vadd.s32 %v446, 184
      %v470 = vadd.s32 %v446, 192
      %v471 = vadd.s32 %v446, 200
      %v472 = vadd.s32 %v446, 208
      %v473 = vadd.s32 %v446, 216
      %v474 = vadd.s32 %v446, 224
      %v475 = vadd.s32 %v446, 232
      %v476 = vadd.s32 %v446, 240
      %v477 = vadd.s32 %v446, 248
      %v478 = vand.u32 %v446, 15
      %v479 = vand.u32 %v447, 15
      %v480 = vand.u32 %v448, 15
      %v481 = vand.u32 %v449, 15
      %v482 = vand.u32 %v450, 15
      %v483 = vand.u32 %v451, 15
      %v484 = vand.u32 %v452, 15
      %v485 = vand.u32 %v453, 15
      %v486 = vand.u32 %v454, 15
      %v487 = vand.u32 %v455, 15
      %v488 = vand.u32 %v456, 15
      %v489 = vand.u32 %v457, 15
      %v490 = vand.u32 %v458, 15
      %v491 = vand.u32 %v459, 15
      %v492 = vand.u32 %v460, 15
      %v493 = vand.u32 %v461, 15
      %v494 = vand.u32 %v462, 15
      %v495 = vand.u32 %v463, 15
      %v496 = vand.u32 %v464, 15
      %v497 = vand.u32 %v465, 15
      %v498 = vand.u32 %v466, 15
      %v499 = vand.u32 %v467, 15
      %v500 = vand.u32 %v468, 15
      %v501 = vand.u32 %v469, 15
      %v502 = vand.u32 %v470, 15
      %v503 = vand.u32 %v471, 15
      %v504 = vand.u32 %v472, 15
      %v505 = vand.u32 %v473, 15
      %v506 = vand.u32 %v474, 15
      %v507 = vand.u32 %v475, 15
      %v508 = vand.u32 %v476, 15
      %v509 = vand.u32 %v477, 15
      %vm510 = vcmp.ne.s32.totalorder %v478, 0
      %vm511 = vcmp.ne.s32.totalorder %v479, 0
      %vm512 = vcmp.ne.s32.totalorder %v480, 0
      %vm513 = vcmp.ne.s32.totalorder %v481, 0
      %vm514 = vcmp.ne.s32.totalorder %v482, 0
      %vm515 = vcmp.ne.s32.totalorder %v483, 0
      %vm516 = vcmp.ne.s32.totalorder %v484, 0
      %vm517 = vcmp.ne.s32.totalorder %v485, 0
      %vm518 = vcmp.ne.s32.totalorder %v486, 0
      %vm519 = vcmp.ne.s32.totalorder %v487, 0
      %vm520 = vcmp.ne.s32.totalorder %v488, 0
      %vm521 = vcmp.ne.s32.totalorder %v489, 0
      %vm522 = vcmp.ne.s32.totalorder %v490, 0
      %vm523 = vcmp.ne.s32.totalorder %v491, 0
      %vm524 = vcmp.ne.s32.totalorder %v492, 0
      %vm525 = vcmp.ne.s32.totalorder %v493, 0
      %vm526 = vcmp.ne.s32.totalorder %v494, 0
      %vm527 = vcmp.ne.s32.totalorder %v495, 0
      %vm528 = vcmp.ne.s32.totalorder %v496, 0
      %vm529 = vcmp.ne.s32.totalorder %v497, 0
      %vm530 = vcmp.ne.s32.totalorder %v498, 0
      %vm531 = vcmp.ne.s32.totalorder %v499, 0
      %vm532 = vcmp.ne.s32.totalorder %v500, 0
      %vm533 = vcmp.ne.s32.totalorder %v501, 0
      %vm534 = vcmp.ne.s32.totalorder %v502, 0
      %vm535 = vcmp.ne.s32.totalorder %v503, 0
      %vm536 = vcmp.ne.s32.totalorder %v504, 0
      %vm537 = vcmp.ne.s32.totalorder %v505, 0
      %vm538 = vcmp.ne.s32.totalorder %v506, 0
      %vm539 = vcmp.ne.s32.totalorder %v507, 0
      %vm540 = vcmp.ne.s32.totalorder %v508, 0
      %vm541 = vcmp.ne.s32.totalorder %v509, 0
      %vm542 = vcmp.ne.s32.totalorder %v478, 15
      %vm543 = vcmp.ne.s32.totalorder %v479, 15
      %vm544 = vcmp.ne.s32.totalorder %v480, 15
      %vm545 = vcmp.ne.s32.totalorder %v481, 15
      %vm546 = vcmp.ne.s32.totalorder %v482, 15
      %vm547 = vcmp.ne.s32.totalorder %v483, 15
      %vm548 = vcmp.ne.s32.totalorder %v484, 15
      %vm549 = vcmp.ne.s32.totalorder %v485, 15
      %vm550 = vcmp.ne.s32.totalorder %v486, 15
      %vm551 = vcmp.ne.s32.totalorder %v487, 15
      %vm552 = vcmp.ne.s32.totalorder %v488, 15
      %vm553 = vcmp.ne.s32.totalorder %v489, 15
      %vm554 = vcmp.ne.s32.totalorder %v490, 15
      %vm555 = vcmp.ne.s32.totalorder %v491, 15
      %vm556 = vcmp.ne.s32.totalorder %v492, 15
      %vm557 = vcmp.ne.s32.totalorder %v493, 15
      %vm558 = vcmp.ne.s32.totalorder %v494, 15
      %vm559 = vcmp.ne.s32.totalorder %v495, 15
      %vm560 = vcmp.ne.s32.totalorder %v496, 15
      %vm561 = vcmp.ne.s32.totalorder %v497, 15
      %vm562 = vcmp.ne.s32.totalorder %v498, 15
      %vm563 = vcmp.ne.s32.totalorder %v499, 15
      %vm564 = vcmp.ne.s32.totalorder %v500, 15
      %vm565 = vcmp.ne.s32.totalorder %v501, 15
      %vm566 = vcmp.ne.s32.totalorder %v502, 15
      %vm567 = vcmp.ne.s32.totalorder %v503, 15
      %vm568 = vcmp.ne.s32.totalorder %v504, 15
      %vm569 = vcmp.ne.s32.totalorder %v505, 15
      %vm570 = vcmp.ne.s32.totalorder %v506, 15
      %vm571 = vcmp.ne.s32.totalorder %v507, 15
      %vm572 = vcmp.ne.s32.totalorder %v508, 15
      %vm573 = vcmp.ne.s32.totalorder %v509, 15
      %v574 = vld [vmem:[#allocation2] sm:$0xff]
      %v575 = vld [vmem:[#allocation2 + $0x8] sm:$0xff]
      %v576 = vld [vmem:[#allocation2 + $0x10] sm:$0xff]
      %v577 = vld [vmem:[#allocation2 + $0x18] sm:$0xff]
      %v578 = vld [vmem:[#allocation2 + $0x20] sm:$0xff]
      %v579 = vld [vmem:[#allocation2 + $0x28] sm:$0xff]
      %v580 = vld [vmem:[#allocation2 + $0x30] sm:$0xff]
      %v581 = vld [vmem:[#allocation2 + $0x38] sm:$0xff]
      %v582 = vld [vmem:[#allocation2 + $0x40] sm:$0xff]
      %v583 = vld [vmem:[#allocation2 + $0x48] sm:$0xff]
      %v584 = vld [vmem:[#allocation2 + $0x50] sm:$0xff]
      %v585 = vld [vmem:[#allocation2 + $0x58] sm:$0xff]
      %v586 = vld [vmem:[#allocation2 + $0x60] sm:$0xff]
      %v587 = vld [vmem:[#allocation2 + $0x68] sm:$0xff]
      %v588 = vld [vmem:[#allocation2 + $0x70] sm:$0xff]
      %v589 = vld [vmem:[#allocation2 + $0x78] sm:$0xff]
      %v590 = vld [vmem:[#allocation2 + $0x80] sm:$0xff]
      %v591 = vld [vmem:[#allocation2 + $0x88] sm:$0xff]
      %v592 = vld [vmem:[#allocation2 + $0x90] sm:$0xff]
      %v593 = vld [vmem:[#allocation2 + $0x98] sm:$0xff]
      %v594 = vld [vmem:[#allocation2 + $0xa0] sm:$0xff]
      %v595 = vld [vmem:[#allocation2 + $0xa8] sm:$0xff]
      %v596 = vld [vmem:[#allocation2 + $0xb0] sm:$0xff]
      %v597 = vld [vmem:[#allocation2 + $0xb8] sm:$0xff]
      %v598 = vld [vmem:[#allocation2 + $0xc0] sm:$0xff]
      %v599 = vld [vmem:[#allocation2 + $0xc8] sm:$0xff]
      %v600 = vld [vmem:[#allocation2 + $0xd0] sm:$0xff]
      %v601 = vld [vmem:[#allocation2 + $0xd8] sm:$0xff]
      %v602 = vld [vmem:[#allocation2 + $0xe0] sm:$0xff]
      %v603 = vld [vmem:[#allocation2 + $0xe8] sm:$0xff]
      %v604 = vld [vmem:[#allocation2 + $0xf0] sm:$0xff]
      %v605 = vld [vmem:[#allocation2 + $0xf8] sm:$0xff]
      %v606 = vsel %vm510, %v574, 0.0
      %v607 = vsel %vm511, %v575, 0.0
      %v608 = vsel %vm512, %v576, 0.0
      %v609 = vsel %vm513, %v577, 0.0
      %v610 = vsel %vm514, %v578, 0.0
      %v611 = vsel %vm515, %v579, 0.0
      %v612 = vsel %vm516, %v580, 0.0
      %v613 = vsel %vm517, %v581, 0.0
      %v614 = vsel %vm518, %v582, 0.0
      %v615 = vsel %vm519, %v583, 0.0
      %v616 = vsel %vm520, %v584, 0.0
      %v617 = vsel %vm521, %v585, 0.0
      %v618 = vsel %vm522, %v586, 0.0
      %v619 = vsel %vm523, %v587, 0.0
      %v620 = vsel %vm524, %v588, 0.0
      %v621 = vsel %vm525, %v589, 0.0
      %v622 = vsel %vm526, %v590, 0.0
      %v623 = vsel %vm527, %v591, 0.0
      %v624 = vsel %vm528, %v592, 0.0
      %v625 = vsel %vm529, %v593, 0.0
      %v626 = vsel %vm530, %v594, 0.0
      %v627 = vsel %vm531, %v595, 0.0
      %v628 = vsel %vm532, %v596, 0.0
      %v629 = vsel %vm533, %v597, 0.0
      %v630 = vsel %vm534, %v598, 0.0
      %v631 = vsel %vm535, %v599, 0.0
      %v632 = vsel %vm536, %v600, 0.0
      %v633 = vsel %vm537, %v601, 0.0
      %v634 = vsel %vm538, %v602, 0.0
      %v635 = vsel %vm539, %v603, 0.0
      %v636 = vsel %vm540, %v604, 0.0
      %v637 = vsel %vm541, %v605, 0.0
      %v638 = vld [vmem:[%s1] sm:$0x7]
      %v639 = vld [vmem:[#allocation2 + $0x1] sm:$0xff]
      %v640 = vld [vmem:[#allocation2 + $0x9] sm:$0xff]
      %v641 = vld [vmem:[#allocation2 + $0x11] sm:$0xff]
      %v642 = vld [vmem:[#allocation2 + $0x19] sm:$0xff]
      %v643 = vld [vmem:[#allocation2 + $0x21] sm:$0xff]
      %v644 = vld [vmem:[#allocation2 + $0x29] sm:$0xff]
      %v645 = vld [vmem:[#allocation2 + $0x31] sm:$0xff]
      %v646 = vld [vmem:[#allocation2 + $0x39] sm:$0xff]
      %v647 = vld [vmem:[#allocation2 + $0x41] sm:$0xff]
      %v648 = vld [vmem:[#allocation2 + $0x49] sm:$0xff]
      %v649 = vld [vmem:[#allocation2 + $0x51] sm:$0xff]
      %v650 = vld [vmem:[#allocation2 + $0x59] sm:$0xff]
      %v651 = vld [vmem:[#allocation2 + $0x61] sm:$0xff]
      %v652 = vld [vmem:[#allocation2 + $0x69] sm:$0xff]
      %v653 = vld [vmem:[#allocation2 + $0x71] sm:$0xff]
      %v654 = vld [vmem:[#allocation2 + $0x79] sm:$0xff]
      %v655 = vld [vmem:[#allocation2 + $0x81] sm:$0xff]
      %v656 = vld [vmem:[#allocation2 + $0x89] sm:$0xff]
      %v657 = vld [vmem:[#allocation2 + $0x91] sm:$0xff]
      %v658 = vld [vmem:[#allocation2 + $0x99] sm:$0xff]
      %v659 = vld [vmem:[#allocation2 + $0xa1] sm:$0xff]
      %v660 = vld [vmem:[#allocation2 + $0xa9] sm:$0xff]
      %v661 = vld [vmem:[#allocation2 + $0xb1] sm:$0xff]
      %v662 = vld [vmem:[#allocation2 + $0xb9] sm:$0xff]
      %v663 = vld [vmem:[#allocation2 + $0xc1] sm:$0xff]
      %v664 = vld [vmem:[#allocation2 + $0xc9] sm:$0xff]
      %v665 = vld [vmem:[#allocation2 + $0xd1] sm:$0xff]
      %v666 = vld [vmem:[#allocation2 + $0xd9] sm:$0xff]
      %v667 = vld [vmem:[#allocation2 + $0xe1] sm:$0xff]
      %v668 = vld [vmem:[#allocation2 + $0xe9] sm:$0xff]
      %v669 = vld [vmem:[#allocation2 + $0xf1] sm:$0xff]
      %v670 = vld [vmem:[#allocation2 + $0xf9] sm:$0xff]
      %s671 = scalar_lea.vmem %s1, 4
      %v672 = vld [vmem:[%s671] sm:$0x7]
      %v674 = vsel %vm373, %v639, 0
      %v677 = vsel %vm373, %v640, 0
      %v680 = vsel %vm373, %v641, 0
      %v683 = vsel %vm373, %v642, 0
      %v686 = vsel %vm373, %v643, 0
      %v689 = vsel %vm373, %v644, 0
      %v692 = vsel %vm373, %v645, 0
      %v695 = vsel %vm373, %v646, 0
      %v698 = vsel %vm373, %v647, 0
      %v701 = vsel %vm373, %v648, 0
      %v704 = vsel %vm373, %v649, 0
      %v707 = vsel %vm373, %v650, 0
      %v710 = vsel %vm373, %v651, 0
      %v713 = vsel %vm373, %v652, 0
      %v716 = vsel %vm373, %v653, 0
      %v719 = vsel %vm373, %v654, 0
      %v722 = vsel %vm373, %v655, 0
      %v725 = vsel %vm373, %v656, 0
      %v728 = vsel %vm373, %v657, 0
      %v731 = vsel %vm373, %v658, 0
      %v734 = vsel %vm373, %v659, 0
      %v737 = vsel %vm373, %v660, 0
      %v740 = vsel %vm373, %v661, 0
      %v743 = vsel %vm373, %v662, 0
      %v746 = vsel %vm373, %v663, 0
      %v749 = vsel %vm373, %v664, 0
      %v752 = vsel %vm373, %v665, 0
      %v755 = vsel %vm373, %v666, 0
      %v758 = vsel %vm373, %v667, 0
      %v761 = vsel %vm373, %v668, 0
      %v764 = vsel %vm373, %v669, 0
      %v767 = vsel %vm373, %v670, 0
      %vm769 = vcmask 1042432
      %v771 = vsel %vm769, %v672, 0
      %773 = vmatpush.msra.mxu0 0.0
      %774 = vmatpush.msra.mxu0 0.0
      %775 = vmatpush.msra.mxu0 0.0
      %776 = vmatpush.msra.mxu0 0.0
      %777 = vmatpush.msra.mxu0 0.0
      %778 = vmatpush.msra.mxu0 0.0
      %779 = vmatpush.msra.mxu0 0.0
      %780 = vmatpush.msra.mxu0 0.0
      %781 = vmatpush.msra.mxu0 0.0
      %782 = vmatpush.msra.mxu0 0.0
      %783 = vmatpush.msra.mxu0 0.0
      %784 = vmatpush.msra.mxu0 0.0
      %785 = vmatpush.msra.mxu0 0.0
      %786 = vmatpush.msra.mxu0 0.0
      %787 = vmatpush.msra.mxu0 0.0
      %788 = vmatpush.msra.mxu0 %v771
      %789 = vmatmul.f32.gmra.mxu0 %v674
      %v790 = vpop.f32.mrf.mxu0
      %v791 = vadd.f32 0.0, %v790
      %792 = vmatmul.f32.gmra.mxu0 %v677
      %v793 = vpop.f32.mrf.mxu0
      %v794 = vadd.f32 0.0, %v793
      %795 = vmatmul.f32.gmra.mxu0 %v680
      %v796 = vpop.f32.mrf.mxu0
      %v797 = vadd.f32 0.0, %v796
      %798 = vmatmul.f32.gmra.mxu0 %v683
      %v799 = vpop.f32.mrf.mxu0
      %v800 = vadd.f32 0.0, %v799
      %801 = vmatmul.f32.gmra.mxu0 %v686
      %v802 = vpop.f32.mrf.mxu0
      %v803 = vadd.f32 0.0, %v802
      %804 = vmatmul.f32.gmra.mxu0 %v689
      %v805 = vpop.f32.mrf.mxu0
      %v806 = vadd.f32 0.0, %v805
      %807 = vmatmul.f32.gmra.mxu0 %v692
      %v808 = vpop.f32.mrf.mxu0
      %v809 = vadd.f32 0.0, %v808
      %810 = vmatmul.f32.gmra.mxu0 %v695
      %v811 = vpop.f32.mrf.mxu0
      %v812 = vadd.f32 0.0, %v811
      %813 = vmatmul.f32.gmra.mxu0 %v698
      %v814 = vpop.f32.mrf.mxu0
      %v815 = vadd.f32 0.0, %v814
      %816 = vmatmul.f32.gmra.mxu0 %v701
      %v817 = vpop.f32.mrf.mxu0
      %v818 = vadd.f32 0.0, %v817
      %819 = vmatmul.f32.gmra.mxu0 %v704
      %v820 = vpop.f32.mrf.mxu0
      %v821 = vadd.f32 0.0, %v820
      %822 = vmatmul.f32.gmra.mxu0 %v707
      %v823 = vpop.f32.mrf.mxu0
      %v824 = vadd.f32 0.0, %v823
      %825 = vmatmul.f32.gmra.mxu0 %v710
      %v826 = vpop.f32.mrf.mxu0
      %v827 = vadd.f32 0.0, %v826
      %828 = vmatmul.f32.gmra.mxu0 %v713
      %v829 = vpop.f32.mrf.mxu0
      %v830 = vadd.f32 0.0, %v829
      %831 = vmatmul.f32.gmra.mxu0 %v716
      %v832 = vpop.f32.mrf.mxu0
      %v833 = vadd.f32 0.0, %v832
      %834 = vmatmul.f32.gmra.mxu0 %v719
      %v835 = vpop.f32.mrf.mxu0
      %v836 = vadd.f32 0.0, %v835
      %837 = vmatmul.f32.gmra.mxu0 %v722
      %v838 = vpop.f32.mrf.mxu0
      %v839 = vadd.f32 0.0, %v838
      %840 = vmatmul.f32.gmra.mxu0 %v725
      %v841 = vpop.f32.mrf.mxu0
      %v842 = vadd.f32 0.0, %v841
      %843 = vmatmul.f32.gmra.mxu0 %v728
      %v844 = vpop.f32.mrf.mxu0
      %v845 = vadd.f32 0.0, %v844
      %846 = vmatmul.f32.gmra.mxu0 %v731
      %v847 = vpop.f32.mrf.mxu0
      %v848 = vadd.f32 0.0, %v847
      %849 = vmatmul.f32.gmra.mxu0 %v734
      %v850 = vpop.f32.mrf.mxu0
      %v851 = vadd.f32 0.0, %v850
      %852 = vmatmul.f32.gmra.mxu0 %v737
      %v853 = vpop.f32.mrf.mxu0
      %v854 = vadd.f32 0.0, %v853
      %855 = vmatmul.f32.gmra.mxu0 %v740
      %v856 = vpop.f32.mrf.mxu0
      %v857 = vadd.f32 0.0, %v856
      %858 = vmatmul.f32.gmra.mxu0 %v743
      %v859 = vpop.f32.mrf.mxu0
      %v860 = vadd.f32 0.0, %v859
      %861 = vmatmul.f32.gmra.mxu0 %v746
      %v862 = vpop.f32.mrf.mxu0
      %v863 = vadd.f32 0.0, %v862
      %864 = vmatmul.f32.gmra.mxu0 %v749
      %v865 = vpop.f32.mrf.mxu0
      %v866 = vadd.f32 0.0, %v865
      %867 = vmatmul.f32.gmra.mxu0 %v752
      %v868 = vpop.f32.mrf.mxu0
      %v869 = vadd.f32 0.0, %v868
      %870 = vmatmul.f32.gmra.mxu0 %v755
      %v871 = vpop.f32.mrf.mxu0
      %v872 = vadd.f32 0.0, %v871
      %873 = vmatmul.f32.gmra.mxu0 %v758
      %v874 = vpop.f32.mrf.mxu0
      %v875 = vadd.f32 0.0, %v874
      %876 = vmatmul.f32.gmra.mxu0 %v761
      %v877 = vpop.f32.mrf.mxu0
      %v878 = vadd.f32 0.0, %v877
      %879 = vmatmul.f32.gmra.mxu0 %v764
      %v880 = vpop.f32.mrf.mxu0
      %v881 = vadd.f32 0.0, %v880
      %882 = vmatmul.f32.gmra.mxu0 %v767
      %v883 = vpop.f32.mrf.mxu0
      %v884 = vadd.f32 0.0, %v883
      %885 = vdwg.mxu0
      %v887 = vsel %vm373, %v606, 0
      %v890 = vsel %vm373, %v607, 0
      %v893 = vsel %vm373, %v608, 0
      %v896 = vsel %vm373, %v609, 0
      %v899 = vsel %vm373, %v610, 0
      %v902 = vsel %vm373, %v611, 0
      %v905 = vsel %vm373, %v612, 0
      %v908 = vsel %vm373, %v613, 0
      %v911 = vsel %vm373, %v614, 0
      %v914 = vsel %vm373, %v615, 0
      %v917 = vsel %vm373, %v616, 0
      %v920 = vsel %vm373, %v617, 0
      %v923 = vsel %vm373, %v618, 0
      %v926 = vsel %vm373, %v619, 0
      %v929 = vsel %vm373, %v620, 0
      %v932 = vsel %vm373, %v621, 0
      %v935 = vsel %vm373, %v622, 0
      %v938 = vsel %vm373, %v623, 0
      %v941 = vsel %vm373, %v624, 0
      %v944 = vsel %vm373, %v625, 0
      %v947 = vsel %vm373, %v626, 0
      %v950 = vsel %vm373, %v627, 0
      %v953 = vsel %vm373, %v628, 0
      %v956 = vsel %vm373, %v629, 0
      %v959 = vsel %vm373, %v630, 0
      %v962 = vsel %vm373, %v631, 0
      %v965 = vsel %vm373, %v632, 0
      %v968 = vsel %vm373, %v633, 0
      %v971 = vsel %vm373, %v634, 0
      %v974 = vsel %vm373, %v635, 0
      %v977 = vsel %vm373, %v636, 0
      %v980 = vsel %vm373, %v637, 0
      %v983 = vsel %vm769, %v638, 0
      %985 = vmatpush.msra.mxu0 0.0
      %986 = vmatpush.msra.mxu0 0.0
      %987 = vmatpush.msra.mxu0 0.0
      %988 = vmatpush.msra.mxu0 0.0
      %989 = vmatpush.msra.mxu0 0.0
      %990 = vmatpush.msra.mxu0 0.0
      %991 = vmatpush.msra.mxu0 0.0
      %992 = vmatpush.msra.mxu0 0.0
      %993 = vmatpush.msra.mxu0 0.0
      %994 = vmatpush.msra.mxu0 0.0
      %995 = vmatpush.msra.mxu0 0.0
      %996 = vmatpush.msra.mxu0 0.0
      %997 = vmatpush.msra.mxu0 0.0
      %998 = vmatpush.msra.mxu0 0.0
      %999 = vmatpush.msra.mxu0 0.0
      %1000 = vmatpush.msra.mxu0 %v983
      %1001 = vmatmul.f32.gmra.mxu0 %v887
      %v1002 = vpop.f32.mrf.mxu0
      %v1003 = vadd.f32 %v791, %v1002
      %1004 = vmatmul.f32.gmra.mxu0 %v890
      %v1005 = vpop.f32.mrf.mxu0
      %v1006 = vadd.f32 %v794, %v1005
      %1007 = vmatmul.f32.gmra.mxu0 %v893
      %v1008 = vpop.f32.mrf.mxu0
      %v1009 = vadd.f32 %v797, %v1008
      %1010 = vmatmul.f32.gmra.mxu0 %v896
      %v1011 = vpop.f32.mrf.mxu0
      %v1012 = vadd.f32 %v800, %v1011
      %1013 = vmatmul.f32.gmra.mxu0 %v899
      %v1014 = vpop.f32.mrf.mxu0
      %v1015 = vadd.f32 %v803, %v1014
      %1016 = vmatmul.f32.gmra.mxu0 %v902
      %v1017 = vpop.f32.mrf.mxu0
      %v1018 = vadd.f32 %v806, %v1017
      %1019 = vmatmul.f32.gmra.mxu0 %v905
      %v1020 = vpop.f32.mrf.mxu0
      %v1021 = vadd.f32 %v809, %v1020
      %1022 = vmatmul.f32.gmra.mxu0 %v908
      %v1023 = vpop.f32.mrf.mxu0
      %v1024 = vadd.f32 %v812, %v1023
      %1025 = vmatmul.f32.gmra.mxu0 %v911
      %v1026 = vpop.f32.mrf.mxu0
      %v1027 = vadd.f32 %v815, %v1026
      %1028 = vmatmul.f32.gmra.mxu0 %v914
      %v1029 = vpop.f32.mrf.mxu0
      %v1030 = vadd.f32 %v818, %v1029
      %1031 = vmatmul.f32.gmra.mxu0 %v917
      %v1032 = vpop.f32.mrf.mxu0
      %v1033 = vadd.f32 %v821, %v1032
      %1034 = vmatmul.f32.gmra.mxu0 %v920
      %v1035 = vpop.f32.mrf.mxu0
      %v1036 = vadd.f32 %v824, %v1035
      %1037 = vmatmul.f32.gmra.mxu0 %v923
      %v1038 = vpop.f32.mrf.mxu0
      %v1039 = vadd.f32 %v827, %v1038
      %1040 = vmatmul.f32.gmra.mxu0 %v926
      %v1041 = vpop.f32.mrf.mxu0
      %v1042 = vadd.f32 %v830, %v1041
      %1043 = vmatmul.f32.gmra.mxu0 %v929
      %v1044 = vpop.f32.mrf.mxu0
      %v1045 = vadd.f32 %v833, %v1044
      %1046 = vmatmul.f32.gmra.mxu0 %v932
      %v1047 = vpop.f32.mrf.mxu0
      %v1048 = vadd.f32 %v836, %v1047
      %1049 = vmatmul.f32.gmra.mxu0 %v935
      %v1050 = vpop.f32.mrf.mxu0
      %v1051 = vadd.f32 %v839, %v1050
      %1052 = vmatmul.f32.gmra.mxu0 %v938
      %v1053 = vpop.f32.mrf.mxu0
      %v1054 = vadd.f32 %v842, %v1053
      %1055 = vmatmul.f32.gmra.mxu0 %v941
      %v1056 = vpop.f32.mrf.mxu0
      %v1057 = vadd.f32 %v845, %v1056
      %1058 = vmatmul.f32.gmra.mxu0 %v944
      %v1059 = vpop.f32.mrf.mxu0
      %v1060 = vadd.f32 %v848, %v1059
      %1061 = vmatmul.f32.gmra.mxu0 %v947
      %v1062 = vpop.f32.mrf.mxu0
      %v1063 = vadd.f32 %v851, %v1062
      %1064 = vmatmul.f32.gmra.mxu0 %v950
      %v1065 = vpop.f32.mrf.mxu0
      %v1066 = vadd.f32 %v854, %v1065
      %1067 = vmatmul.f32.gmra.mxu0 %v953
      %v1068 = vpop.f32.mrf.mxu0
      %v1069 = vadd.f32 %v857, %v1068
      %1070 = vmatmul.f32.gmra.mxu0 %v956
      %v1071 = vpop.f32.mrf.mxu0
      %v1072 = vadd.f32 %v860, %v1071
      %1073 = vmatmul.f32.gmra.mxu0 %v959
      %v1074 = vpop.f32.mrf.mxu0
      %v1075 = vadd.f32 %v863, %v1074
      %1076 = vmatmul.f32.gmra.mxu0 %v962
      %v1077 = vpop.f32.mrf.mxu0
      %v1078 = vadd.f32 %v866, %v1077
      %1079 = vmatmul.f32.gmra.mxu0 %v965
      %v1080 = vpop.f32.mrf.mxu0
      %v1081 = vadd.f32 %v869, %v1080
      %1082 = vmatmul.f32.gmra.mxu0 %v968
      %v1083 = vpop.f32.mrf.mxu0
      %v1084 = vadd.f32 %v872, %v1083
      %1085 = vmatmul.f32.gmra.mxu0 %v971
      %v1086 = vpop.f32.mrf.mxu0
      %v1087 = vadd.f32 %v875, %v1086
      %1088 = vmatmul.f32.gmra.mxu0 %v974
      %v1089 = vpop.f32.mrf.mxu0
      %v1090 = vadd.f32 %v878, %v1089
      %1091 = vmatmul.f32.gmra.mxu0 %v977
      %v1092 = vpop.f32.mrf.mxu0
      %v1093 = vadd.f32 %v881, %v1092
      %1094 = vmatmul.f32.gmra.mxu0 %v980
      %v1095 = vpop.f32.mrf.mxu0
      %v1096 = vadd.f32 %v884, %v1095
      %1097 = vdwg.mxu0
      %v1098 = vld [vmem:[#allocation2 + $0x2] sm:$0xff]
      %v1099 = vld [vmem:[#allocation2 + $0xa] sm:$0xff]
      %v1100 = vld [vmem:[#allocation2 + $0x12] sm:$0xff]
      %v1101 = vld [vmem:[#allocation2 + $0x1a] sm:$0xff]
      %v1102 = vld [vmem:[#allocation2 + $0x22] sm:$0xff]
      %v1103 = vld [vmem:[#allocation2 + $0x2a] sm:$0xff]
      %v1104 = vld [vmem:[#allocation2 + $0x32] sm:$0xff]
      %v1105 = vld [vmem:[#allocation2 + $0x3a] sm:$0xff]
      %v1106 = vld [vmem:[#allocation2 + $0x42] sm:$0xff]
      %v1107 = vld [vmem:[#allocation2 + $0x4a] sm:$0xff]
      %v1108 = vld [vmem:[#allocation2 + $0x52] sm:$0xff]
      %v1109 = vld [vmem:[#allocation2 + $0x5a] sm:$0xff]
      %v1110 = vld [vmem:[#allocation2 + $0x62] sm:$0xff]
      %v1111 = vld [vmem:[#allocation2 + $0x6a] sm:$0xff]
      %v1112 = vld [vmem:[#allocation2 + $0x72] sm:$0xff]
      %v1113 = vld [vmem:[#allocation2 + $0x7a] sm:$0xff]
      %v1114 = vld [vmem:[#allocation2 + $0x82] sm:$0xff]
      %v1115 = vld [vmem:[#allocation2 + $0x8a] sm:$0xff]
      %v1116 = vld [vmem:[#allocation2 + $0x92] sm:$0xff]
      %v1117 = vld [vmem:[#allocation2 + $0x9a] sm:$0xff]
      %v1118 = vld [vmem:[#allocation2 + $0xa2] sm:$0xff]
      %v1119 = vld [vmem:[#allocation2 + $0xaa] sm:$0xff]
      %v1120 = vld [vmem:[#allocation2 + $0xb2] sm:$0xff]
      %v1121 = vld [vmem:[#allocation2 + $0xba] sm:$0xff]
      %v1122 = vld [vmem:[#allocation2 + $0xc2] sm:$0xff]
      %v1123 = vld [vmem:[#allocation2 + $0xca] sm:$0xff]
      %v1124 = vld [vmem:[#allocation2 + $0xd2] sm:$0xff]
      %v1125 = vld [vmem:[#allocation2 + $0xda] sm:$0xff]
      %v1126 = vld [vmem:[#allocation2 + $0xe2] sm:$0xff]
      %v1127 = vld [vmem:[#allocation2 + $0xea] sm:$0xff]
      %v1128 = vld [vmem:[#allocation2 + $0xf2] sm:$0xff]
      %v1129 = vld [vmem:[#allocation2 + $0xfa] sm:$0xff]
      %v1130 = vsel %vm542, %v1098, 0.0
      %v1131 = vsel %vm543, %v1099, 0.0
      %v1132 = vsel %vm544, %v1100, 0.0
      %v1133 = vsel %vm545, %v1101, 0.0
      %v1134 = vsel %vm546, %v1102, 0.0
      %v1135 = vsel %vm547, %v1103, 0.0
      %v1136 = vsel %vm548, %v1104, 0.0
      %v1137 = vsel %vm549, %v1105, 0.0
      %v1138 = vsel %vm550, %v1106, 0.0
      %v1139 = vsel %vm551, %v1107, 0.0
      %v1140 = vsel %vm552, %v1108, 0.0
      %v1141 = vsel %vm553, %v1109, 0.0
      %v1142 = vsel %vm554, %v1110, 0.0
      %v1143 = vsel %vm555, %v1111, 0.0
      %v1144 = vsel %vm556, %v1112, 0.0
      %v1145 = vsel %vm557, %v1113, 0.0
      %v1146 = vsel %vm558, %v1114, 0.0
      %v1147 = vsel %vm559, %v1115, 0.0
      %v1148 = vsel %vm560, %v1116, 0.0
      %v1149 = vsel %vm561, %v1117, 0.0
      %v1150 = vsel %vm562, %v1118, 0.0
      %v1151 = vsel %vm563, %v1119, 0.0
      %v1152 = vsel %vm564, %v1120, 0.0
      %v1153 = vsel %vm565, %v1121, 0.0
      %v1154 = vsel %vm566, %v1122, 0.0
      %v1155 = vsel %vm567, %v1123, 0.0
      %v1156 = vsel %vm568, %v1124, 0.0
      %v1157 = vsel %vm569, %v1125, 0.0
      %v1158 = vsel %vm570, %v1126, 0.0
      %v1159 = vsel %vm571, %v1127, 0.0
      %v1160 = vsel %vm572, %v1128, 0.0
      %v1161 = vsel %vm573, %v1129, 0.0
      %s1162 = scalar_lea.vmem %s1, 8
      %v1163 = vld [vmem:[%s1162] sm:$0x7]
      %v1165 = vsel %vm373, %v1130, 0
      %v1168 = vsel %vm373, %v1131, 0
      %v1171 = vsel %vm373, %v1132, 0
      %v1174 = vsel %vm373, %v1133, 0
      %v1177 = vsel %vm373, %v1134, 0
      %v1180 = vsel %vm373, %v1135, 0
      %v1183 = vsel %vm373, %v1136, 0
      %v1186 = vsel %vm373, %v1137, 0
      %v1189 = vsel %vm373, %v1138, 0
      %v1192 = vsel %vm373, %v1139, 0
      %v1195 = vsel %vm373, %v1140, 0
      %v1198 = vsel %vm373, %v1141, 0
      %v1201 = vsel %vm373, %v1142, 0
      %v1204 = vsel %vm373, %v1143, 0
      %v1207 = vsel %vm373, %v1144, 0
      %v1210 = vsel %vm373, %v1145, 0
      %v1213 = vsel %vm373, %v1146, 0
      %v1216 = vsel %vm373, %v1147, 0
      %v1219 = vsel %vm373, %v1148, 0
      %v1222 = vsel %vm373, %v1149, 0
      %v1225 = vsel %vm373, %v1150, 0
      %v1228 = vsel %vm373, %v1151, 0
      %v1231 = vsel %vm373, %v1152, 0
      %v1234 = vsel %vm373, %v1153, 0
      %v1237 = vsel %vm373, %v1154, 0
      %v1240 = vsel %vm373, %v1155, 0
      %v1243 = vsel %vm373, %v1156, 0
      %v1246 = vsel %vm373, %v1157, 0
      %v1249 = vsel %vm373, %v1158, 0
      %v1252 = vsel %vm373, %v1159, 0
      %v1255 = vsel %vm373, %v1160, 0
      %v1258 = vsel %vm373, %v1161, 0
      %v1261 = vsel %vm769, %v1163, 0
      %1263 = vmatpush.msra.mxu0 0.0
      %1264 = vmatpush.msra.mxu0 0.0
      %1265 = vmatpush.msra.mxu0 0.0
      %1266 = vmatpush.msra.mxu0 0.0
      %1267 = vmatpush.msra.mxu0 0.0
      %1268 = vmatpush.msra.mxu0 0.0
      %1269 = vmatpush.msra.mxu0 0.0
      %1270 = vmatpush.msra.mxu0 0.0
      %1271 = vmatpush.msra.mxu0 0.0
      %1272 = vmatpush.msra.mxu0 0.0
      %1273 = vmatpush.msra.mxu0 0.0
      %1274 = vmatpush.msra.mxu0 0.0
      %1275 = vmatpush.msra.mxu0 0.0
      %1276 = vmatpush.msra.mxu0 0.0
      %1277 = vmatpush.msra.mxu0 0.0
      %1278 = vmatpush.msra.mxu0 %v1261
      %1279 = vmatmul.f32.gmra.mxu0 %v1165
      %v1280 = vpop.f32.mrf.mxu0
      %v1281 = vadd.f32 0.0, %v1280
      %1282 = vmatmul.f32.gmra.mxu0 %v1168
      %v1283 = vpop.f32.mrf.mxu0
      %v1284 = vadd.f32 0.0, %v1283
      %1285 = vmatmul.f32.gmra.mxu0 %v1171
      %v1286 = vpop.f32.mrf.mxu0
      %v1287 = vadd.f32 0.0, %v1286
      %1288 = vmatmul.f32.gmra.mxu0 %v1174
      %v1289 = vpop.f32.mrf.mxu0
      %v1290 = vadd.f32 0.0, %v1289
      %1291 = vmatmul.f32.gmra.mxu0 %v1177
      %v1292 = vpop.f32.mrf.mxu0
      %v1293 = vadd.f32 0.0, %v1292
      %1294 = vmatmul.f32.gmra.mxu0 %v1180
      %v1295 = vpop.f32.mrf.mxu0
      %v1296 = vadd.f32 0.0, %v1295
      %1297 = vmatmul.f32.gmra.mxu0 %v1183
      %v1298 = vpop.f32.mrf.mxu0
      %v1299 = vadd.f32 0.0, %v1298
      %1300 = vmatmul.f32.gmra.mxu0 %v1186
      %v1301 = vpop.f32.mrf.mxu0
      %v1302 = vadd.f32 0.0, %v1301
      %1303 = vmatmul.f32.gmra.mxu0 %v1189
      %v1304 = vpop.f32.mrf.mxu0
      %v1305 = vadd.f32 0.0, %v1304
      %1306 = vmatmul.f32.gmra.mxu0 %v1192
      %v1307 = vpop.f32.mrf.mxu0
      %v1308 = vadd.f32 0.0, %v1307
      %1309 = vmatmul.f32.gmra.mxu0 %v1195
      %v1310 = vpop.f32.mrf.mxu0
      %v1311 = vadd.f32 0.0, %v1310
      %1312 = vmatmul.f32.gmra.mxu0 %v1198
      %v1313 = vpop.f32.mrf.mxu0
      %v1314 = vadd.f32 0.0, %v1313
      %1315 = vmatmul.f32.gmra.mxu0 %v1201
      %v1316 = vpop.f32.mrf.mxu0
      %v1317 = vadd.f32 0.0, %v1316
      %1318 = vmatmul.f32.gmra.mxu0 %v1204
      %v1319 = vpop.f32.mrf.mxu0
      %v1320 = vadd.f32 0.0, %v1319
      %1321 = vmatmul.f32.gmra.mxu0 %v1207
      %v1322 = vpop.f32.mrf.mxu0
      %v1323 = vadd.f32 0.0, %v1322
      %1324 = vmatmul.f32.gmra.mxu0 %v1210
      %v1325 = vpop.f32.mrf.mxu0
      %v1326 = vadd.f32 0.0, %v1325
      %1327 = vmatmul.f32.gmra.mxu0 %v1213
      %v1328 = vpop.f32.mrf.mxu0
      %v1329 = vadd.f32 0.0, %v1328
      %1330 = vmatmul.f32.gmra.mxu0 %v1216
      %v1331 = vpop.f32.mrf.mxu0
      %v1332 = vadd.f32 0.0, %v1331
      %1333 = vmatmul.f32.gmra.mxu0 %v1219
      %v1334 = vpop.f32.mrf.mxu0
      %v1335 = vadd.f32 0.0, %v1334
      %1336 = vmatmul.f32.gmra.mxu0 %v1222
      %v1337 = vpop.f32.mrf.mxu0
      %v1338 = vadd.f32 0.0, %v1337
      %1339 = vmatmul.f32.gmra.mxu0 %v1225
      %v1340 = vpop.f32.mrf.mxu0
      %v1341 = vadd.f32 0.0, %v1340
      %1342 = vmatmul.f32.gmra.mxu0 %v1228
      %v1343 = vpop.f32.mrf.mxu0
      %v1344 = vadd.f32 0.0, %v1343
      %1345 = vmatmul.f32.gmra.mxu0 %v1231
      %v1346 = vpop.f32.mrf.mxu0
      %v1347 = vadd.f32 0.0, %v1346
      %1348 = vmatmul.f32.gmra.mxu0 %v1234
      %v1349 = vpop.f32.mrf.mxu0
      %v1350 = vadd.f32 0.0, %v1349
      %1351 = vmatmul.f32.gmra.mxu0 %v1237
      %v1352 = vpop.f32.mrf.mxu0
      %v1353 = vadd.f32 0.0, %v1352
      %1354 = vmatmul.f32.gmra.mxu0 %v1240
      %v1355 = vpop.f32.mrf.mxu0
      %v1356 = vadd.f32 0.0, %v1355
      %1357 = vmatmul.f32.gmra.mxu0 %v1243
      %v1358 = vpop.f32.mrf.mxu0
      %v1359 = vadd.f32 0.0, %v1358
      %1360 = vmatmul.f32.gmra.mxu0 %v1246
      %v1361 = vpop.f32.mrf.mxu0
      %v1362 = vadd.f32 0.0, %v1361
      %1363 = vmatmul.f32.gmra.mxu0 %v1249
      %v1364 = vpop.f32.mrf.mxu0
      %v1365 = vadd.f32 0.0, %v1364
      %1366 = vmatmul.f32.gmra.mxu0 %v1252
      %v1367 = vpop.f32.mrf.mxu0
      %v1368 = vadd.f32 0.0, %v1367
      %1369 = vmatmul.f32.gmra.mxu0 %v1255
      %v1370 = vpop.f32.mrf.mxu0
      %v1371 = vadd.f32 0.0, %v1370
      %1372 = vmatmul.f32.gmra.mxu0 %v1258
      %v1373 = vpop.f32.mrf.mxu0
      %v1374 = vadd.f32 0.0, %v1373
      %1375 = vdwg.mxu0
      %v1376 = vadd.f32 %v1003, %v1281
      %v1377 = vadd.f32 %v1006, %v1284
      %v1378 = vadd.f32 %v1009, %v1287
      %v1379 = vadd.f32 %v1012, %v1290
      %v1380 = vadd.f32 %v1015, %v1293
      %v1381 = vadd.f32 %v1018, %v1296
      %v1382 = vadd.f32 %v1021, %v1299
      %v1383 = vadd.f32 %v1024, %v1302
      %v1384 = vadd.f32 %v1027, %v1305
      %v1385 = vadd.f32 %v1030, %v1308
      %v1386 = vadd.f32 %v1033, %v1311
      %v1387 = vadd.f32 %v1036, %v1314
      %v1388 = vadd.f32 %v1039, %v1317
      %v1389 = vadd.f32 %v1042, %v1320
      %v1390 = vadd.f32 %v1045, %v1323
      %v1391 = vadd.f32 %v1048, %v1326
      %v1392 = vadd.f32 %v1051, %v1329
      %v1393 = vadd.f32 %v1054, %v1332
      %v1394 = vadd.f32 %v1057, %v1335
      %v1395 = vadd.f32 %v1060, %v1338
      %v1396 = vadd.f32 %v1063, %v1341
      %v1397 = vadd.f32 %v1066, %v1344
      %v1398 = vadd.f32 %v1069, %v1347
      %v1399 = vadd.f32 %v1072, %v1350
      %v1400 = vadd.f32 %v1075, %v1353
      %v1401 = vadd.f32 %v1078, %v1356
      %v1402 = vadd.f32 %v1081, %v1359
      %v1403 = vadd.f32 %v1084, %v1362
      %v1404 = vadd.f32 %v1087, %v1365
      %v1405 = vadd.f32 %v1090, %v1368
      %v1406 = vadd.f32 %v1093, %v1371
      %v1407 = vadd.f32 %v1096, %v1374
      %v1408 = vld [vmem:[#allocation2 + $0x10] sm:$0xff]
      %v1409 = vld [vmem:[#allocation2 + $0x18] sm:$0xff]
      %v1410 = vld [vmem:[#allocation2 + $0x20] sm:$0xff]
      %v1411 = vld [vmem:[#allocation2 + $0x28] sm:$0xff]
      %v1412 = vld [vmem:[#allocation2 + $0x30] sm:$0xff]
      %v1413 = vld [vmem:[#allocation2 + $0x38] sm:$0xff]
      %v1414 = vld [vmem:[#allocation2 + $0x40] sm:$0xff]
      %v1415 = vld [vmem:[#allocation2 + $0x48] sm:$0xff]
      %v1416 = vld [vmem:[#allocation2 + $0x50] sm:$0xff]
      %v1417 = vld [vmem:[#allocation2 + $0x58] sm:$0xff]
      %v1418 = vld [vmem:[#allocation2 + $0x60] sm:$0xff]
      %v1419 = vld [vmem:[#allocation2 + $0x68] sm:$0xff]
      %v1420 = vld [vmem:[#allocation2 + $0x70] sm:$0xff]
      %v1421 = vld [vmem:[#allocation2 + $0x78] sm:$0xff]
      %v1422 = vld [vmem:[#allocation2 + $0x80] sm:$0xff]
      %v1423 = vld [vmem:[#allocation2 + $0x88] sm:$0xff]
      %v1424 = vld [vmem:[#allocation2 + $0x90] sm:$0xff]
      %v1425 = vld [vmem:[#allocation2 + $0x98] sm:$0xff]
      %v1426 = vld [vmem:[#allocation2 + $0xa0] sm:$0xff]
      %v1427 = vld [vmem:[#allocation2 + $0xa8] sm:$0xff]
      %v1428 = vld [vmem:[#allocation2 + $0xb0] sm:$0xff]
      %v1429 = vld [vmem:[#allocation2 + $0xb8] sm:$0xff]
      %v1430 = vld [vmem:[#allocation2 + $0xc0] sm:$0xff]
      %v1431 = vld [vmem:[#allocation2 + $0xc8] sm:$0xff]
      %v1432 = vld [vmem:[#allocation2 + $0xd0] sm:$0xff]
      %v1433 = vld [vmem:[#allocation2 + $0xd8] sm:$0xff]
      %v1434 = vld [vmem:[#allocation2 + $0xe0] sm:$0xff]
      %v1435 = vld [vmem:[#allocation2 + $0xe8] sm:$0xff]
      %v1436 = vld [vmem:[#allocation2 + $0xf0] sm:$0xff]
      %v1437 = vld [vmem:[#allocation2 + $0xf8] sm:$0xff]
      %v1438 = vld [vmem:[#allocation2 + $0x100] sm:$0xff]
      %v1439 = vld [vmem:[#allocation2 + $0x108] sm:$0xff]
      %v1440 = vsel %vm510, %v1408, 0.0
      %v1441 = vsel %vm511, %v1409, 0.0
      %v1442 = vsel %vm512, %v1410, 0.0
      %v1443 = vsel %vm513, %v1411, 0.0
      %v1444 = vsel %vm514, %v1412, 0.0
      %v1445 = vsel %vm515, %v1413, 0.0
      %v1446 = vsel %vm516, %v1414, 0.0
      %v1447 = vsel %vm517, %v1415, 0.0
      %v1448 = vsel %vm518, %v1416, 0.0
      %v1449 = vsel %vm519, %v1417, 0.0
      %v1450 = vsel %vm520, %v1418, 0.0
      %v1451 = vsel %vm521, %v1419, 0.0
      %v1452 = vsel %vm522, %v1420, 0.0
      %v1453 = vsel %vm523, %v1421, 0.0
      %v1454 = vsel %vm524, %v1422, 0.0
      %v1455 = vsel %vm525, %v1423, 0.0
      %v1456 = vsel %vm526, %v1424, 0.0
      %v1457 = vsel %vm527, %v1425, 0.0
      %v1458 = vsel %vm528, %v1426, 0.0
      %v1459 = vsel %vm529, %v1427, 0.0
      %v1460 = vsel %vm530, %v1428, 0.0
      %v1461 = vsel %vm531, %v1429, 0.0
      %v1462 = vsel %vm532, %v1430, 0.0
      %v1463 = vsel %vm533, %v1431, 0.0
      %v1464 = vsel %vm534, %v1432, 0.0
      %v1465 = vsel %vm535, %v1433, 0.0
      %v1466 = vsel %vm536, %v1434, 0.0
      %v1467 = vsel %vm537, %v1435, 0.0
      %v1468 = vsel %vm538, %v1436, 0.0
      %v1469 = vsel %vm539, %v1437, 0.0
      %v1470 = vsel %vm540, %v1438, 0.0
      %v1471 = vsel %vm541, %v1439, 0.0
      %s1472 = scalar_lea.vmem %s1, 12
      %v1473 = vld [vmem:[%s1472] sm:$0x7]
      %v1475 = vsel %vm373, %v1440, 0
      %v1478 = vsel %vm373, %v1441, 0
      %v1481 = vsel %vm373, %v1442, 0
      %v1484 = vsel %vm373, %v1443, 0
      %v1487 = vsel %vm373, %v1444, 0
      %v1490 = vsel %vm373, %v1445, 0
      %v1493 = vsel %vm373, %v1446, 0
      %v1496 = vsel %vm373, %v1447, 0
      %v1499 = vsel %vm373, %v1448, 0
      %v1502 = vsel %vm373, %v1449, 0
      %v1505 = vsel %vm373, %v1450, 0
      %v1508 = vsel %vm373, %v1451, 0
      %v1511 = vsel %vm373, %v1452, 0
      %v1514 = vsel %vm373, %v1453, 0
      %v1517 = vsel %vm373, %v1454, 0
      %v1520 = vsel %vm373, %v1455, 0
      %v1523 = vsel %vm373, %v1456, 0
      %v1526 = vsel %vm373, %v1457, 0
      %v1529 = vsel %vm373, %v1458, 0
      %v1532 = vsel %vm373, %v1459, 0
      %v1535 = vsel %vm373, %v1460, 0
      %v1538 = vsel %vm373, %v1461, 0
      %v1541 = vsel %vm373, %v1462, 0
      %v1544 = vsel %vm373, %v1463, 0
      %v1547 = vsel %vm373, %v1464, 0
      %v1550 = vsel %vm373, %v1465, 0
      %v1553 = vsel %vm373, %v1466, 0
      %v1556 = vsel %vm373, %v1467, 0
      %v1559 = vsel %vm373, %v1468, 0
      %v1562 = vsel %vm373, %v1469, 0
      %v1565 = vsel %vm373, %v1470, 0
      %v1568 = vsel %vm373, %v1471, 0
      %v1571 = vsel %vm769, %v1473, 0
      %1573 = vmatpush.msra.mxu0 0.0
      %1574 = vmatpush.msra.mxu0 0.0
      %1575 = vmatpush.msra.mxu0 0.0
      %1576 = vmatpush.msra.mxu0 0.0
      %1577 = vmatpush.msra.mxu0 0.0
      %1578 = vmatpush.msra.mxu0 0.0
      %1579 = vmatpush.msra.mxu0 0.0
      %1580 = vmatpush.msra.mxu0 0.0
      %1581 = vmatpush.msra.mxu0 0.0
      %1582 = vmatpush.msra.mxu0 0.0
      %1583 = vmatpush.msra.mxu0 0.0
      %1584 = vmatpush.msra.mxu0 0.0
      %1585 = vmatpush.msra.mxu0 0.0
      %1586 = vmatpush.msra.mxu0 0.0
      %1587 = vmatpush.msra.mxu0 0.0
      %1588 = vmatpush.msra.mxu0 %v1571
      %1589 = vmatmul.f32.gmra.mxu0 %v1475
      %v1590 = vpop.f32.mrf.mxu0
      %v1591 = vadd.f32 0.0, %v1590
      %1592 = vmatmul.f32.gmra.mxu0 %v1478
      %v1593 = vpop.f32.mrf.mxu0
      %v1594 = vadd.f32 0.0, %v1593
      %1595 = vmatmul.f32.gmra.mxu0 %v1481
      %v1596 = vpop.f32.mrf.mxu0
      %v1597 = vadd.f32 0.0, %v1596
      %1598 = vmatmul.f32.gmra.mxu0 %v1484
      %v1599 = vpop.f32.mrf.mxu0
      %v1600 = vadd.f32 0.0, %v1599
      %1601 = vmatmul.f32.gmra.mxu0 %v1487
      %v1602 = vpop.f32.mrf.mxu0
      %v1603 = vadd.f32 0.0, %v1602
      %1604 = vmatmul.f32.gmra.mxu0 %v1490
      %v1605 = vpop.f32.mrf.mxu0
      %v1606 = vadd.f32 0.0, %v1605
      %1607 = vmatmul.f32.gmra.mxu0 %v1493
      %v1608 = vpop.f32.mrf.mxu0
      %v1609 = vadd.f32 0.0, %v1608
      %1610 = vmatmul.f32.gmra.mxu0 %v1496
      %v1611 = vpop.f32.mrf.mxu0
      %v1612 = vadd.f32 0.0, %v1611
      %1613 = vmatmul.f32.gmra.mxu0 %v1499
      %v1614 = vpop.f32.mrf.mxu0
      %v1615 = vadd.f32 0.0, %v1614
      %1616 = vmatmul.f32.gmra.mxu0 %v1502
      %v1617 = vpop.f32.mrf.mxu0
      %v1618 = vadd.f32 0.0, %v1617
      %1619 = vmatmul.f32.gmra.mxu0 %v1505
      %v1620 = vpop.f32.mrf.mxu0
      %v1621 = vadd.f32 0.0, %v1620
      %1622 = vmatmul.f32.gmra.mxu0 %v1508
      %v1623 = vpop.f32.mrf.mxu0
      %v1624 = vadd.f32 0.0, %v1623
      %1625 = vmatmul.f32.gmra.mxu0 %v1511
      %v1626 = vpop.f32.mrf.mxu0
      %v1627 = vadd.f32 0.0, %v1626
      %1628 = vmatmul.f32.gmra.mxu0 %v1514
      %v1629 = vpop.f32.mrf.mxu0
      %v1630 = vadd.f32 0.0, %v1629
      %1631 = vmatmul.f32.gmra.mxu0 %v1517
      %v1632 = vpop.f32.mrf.mxu0
      %v1633 = vadd.f32 0.0, %v1632
      %1634 = vmatmul.f32.gmra.mxu0 %v1520
      %v1635 = vpop.f32.mrf.mxu0
      %v1636 = vadd.f32 0.0, %v1635
      %1637 = vmatmul.f32.gmra.mxu0 %v1523
      %v1638 = vpop.f32.mrf.mxu0
      %v1639 = vadd.f32 0.0, %v1638
      %1640 = vmatmul.f32.gmra.mxu0 %v1526
      %v1641 = vpop.f32.mrf.mxu0
      %v1642 = vadd.f32 0.0, %v1641
      %1643 = vmatmul.f32.gmra.mxu0 %v1529
      %v1644 = vpop.f32.mrf.mxu0
      %v1645 = vadd.f32 0.0, %v1644
      %1646 = vmatmul.f32.gmra.mxu0 %v1532
      %v1647 = vpop.f32.mrf.mxu0
      %v1648 = vadd.f32 0.0, %v1647
      %1649 = vmatmul.f32.gmra.mxu0 %v1535
      %v1650 = vpop.f32.mrf.mxu0
      %v1651 = vadd.f32 0.0, %v1650
      %1652 = vmatmul.f32.gmra.mxu0 %v1538
      %v1653 = vpop.f32.mrf.mxu0
      %v1654 = vadd.f32 0.0, %v1653
      %1655 = vmatmul.f32.gmra.mxu0 %v1541
      %v1656 = vpop.f32.mrf.mxu0
      %v1657 = vadd.f32 0.0, %v1656
      %1658 = vmatmul.f32.gmra.mxu0 %v1544
      %v1659 = vpop.f32.mrf.mxu0
      %v1660 = vadd.f32 0.0, %v1659
      %1661 = vmatmul.f32.gmra.mxu0 %v1547
      %v1662 = vpop.f32.mrf.mxu0
      %v1663 = vadd.f32 0.0, %v1662
      %1664 = vmatmul.f32.gmra.mxu0 %v1550
      %v1665 = vpop.f32.mrf.mxu0
      %v1666 = vadd.f32 0.0, %v1665
      %1667 = vmatmul.f32.gmra.mxu0 %v1553
      %v1668 = vpop.f32.mrf.mxu0
      %v1669 = vadd.f32 0.0, %v1668
      %1670 = vmatmul.f32.gmra.mxu0 %v1556
      %v1671 = vpop.f32.mrf.mxu0
      %v1672 = vadd.f32 0.0, %v1671
      %1673 = vmatmul.f32.gmra.mxu0 %v1559
      %v1674 = vpop.f32.mrf.mxu0
      %v1675 = vadd.f32 0.0, %v1674
      %1676 = vmatmul.f32.gmra.mxu0 %v1562
      %v1677 = vpop.f32.mrf.mxu0
      %v1678 = vadd.f32 0.0, %v1677
      %1679 = vmatmul.f32.gmra.mxu0 %v1565
      %v1680 = vpop.f32.mrf.mxu0
      %v1681 = vadd.f32 0.0, %v1680
      %1682 = vmatmul.f32.gmra.mxu0 %v1568
      %v1683 = vpop.f32.mrf.mxu0
      %v1684 = vadd.f32 0.0, %v1683
      %1685 = vdwg.mxu0
      %v1686 = vadd.f32 %v1376, %v1591
      %v1687 = vadd.f32 %v1377, %v1594
      %v1688 = vadd.f32 %v1378, %v1597
      %v1689 = vadd.f32 %v1379, %v1600
      %v1690 = vadd.f32 %v1380, %v1603
      %v1691 = vadd.f32 %v1381, %v1606
      %v1692 = vadd.f32 %v1382, %v1609
      %v1693 = vadd.f32 %v1383, %v1612
      %v1694 = vadd.f32 %v1384, %v1615
      %v1695 = vadd.f32 %v1385, %v1618
      %v1696 = vadd.f32 %v1386, %v1621
      %v1697 = vadd.f32 %v1387, %v1624
      %v1698 = vadd.f32 %v1388, %v1627
      %v1699 = vadd.f32 %v1389, %v1630
      %v1700 = vadd.f32 %v1390, %v1633
      %v1701 = vadd.f32 %v1391, %v1636
      %v1702 = vadd.f32 %v1392, %v1639
      %v1703 = vadd.f32 %v1393, %v1642
      %v1704 = vadd.f32 %v1394, %v1645
      %v1705 = vadd.f32 %v1395, %v1648
      %v1706 = vadd.f32 %v1396, %v1651
      %v1707 = vadd.f32 %v1397, %v1654
      %v1708 = vadd.f32 %v1398, %v1657
      %v1709 = vadd.f32 %v1399, %v1660
      %v1710 = vadd.f32 %v1400, %v1663
      %v1711 = vadd.f32 %v1401, %v1666
      %v1712 = vadd.f32 %v1402, %v1669
      %v1713 = vadd.f32 %v1403, %v1672
      %v1714 = vadd.f32 %v1404, %v1675
      %v1715 = vadd.f32 %v1405, %v1678
      %v1716 = vadd.f32 %v1406, %v1681
      %v1717 = vadd.f32 %v1407, %v1684
      %v1718 = vld [vmem:[#allocation2 + $0x11] sm:$0xff]
      %v1719 = vld [vmem:[#allocation2 + $0x19] sm:$0xff]
      %v1720 = vld [vmem:[#allocation2 + $0x21] sm:$0xff]
      %v1721 = vld [vmem:[#allocation2 + $0x29] sm:$0xff]
      %v1722 = vld [vmem:[#allocation2 + $0x31] sm:$0xff]
      %v1723 = vld [vmem:[#allocation2 + $0x39] sm:$0xff]
      %v1724 = vld [vmem:[#allocation2 + $0x41] sm:$0xff]
      %v1725 = vld [vmem:[#allocation2 + $0x49] sm:$0xff]
      %v1726 = vld [vmem:[#allocation2 + $0x51] sm:$0xff]
      %v1727 = vld [vmem:[#allocation2 + $0x59] sm:$0xff]
      %v1728 = vld [vmem:[#allocation2 + $0x61] sm:$0xff]
      %v1729 = vld [vmem:[#allocation2 + $0x69] sm:$0xff]
      %v1730 = vld [vmem:[#allocation2 + $0x71] sm:$0xff]
      %v1731 = vld [vmem:[#allocation2 + $0x79] sm:$0xff]
      %v1732 = vld [vmem:[#allocation2 + $0x81] sm:$0xff]
      %v1733 = vld [vmem:[#allocation2 + $0x89] sm:$0xff]
      %v1734 = vld [vmem:[#allocation2 + $0x91] sm:$0xff]
      %v1735 = vld [vmem:[#allocation2 + $0x99] sm:$0xff]
      %v1736 = vld [vmem:[#allocation2 + $0xa1] sm:$0xff]
      %v1737 = vld [vmem:[#allocation2 + $0xa9] sm:$0xff]
      %v1738 = vld [vmem:[#allocation2 + $0xb1] sm:$0xff]
      %v1739 = vld [vmem:[#allocation2 + $0xb9] sm:$0xff]
      %v1740 = vld [vmem:[#allocation2 + $0xc1] sm:$0xff]
      %v1741 = vld [vmem:[#allocation2 + $0xc9] sm:$0xff]
      %v1742 = vld [vmem:[#allocation2 + $0xd1] sm:$0xff]
      %v1743 = vld [vmem:[#allocation2 + $0xd9] sm:$0xff]
      %v1744 = vld [vmem:[#allocation2 + $0xe1] sm:$0xff]
      %v1745 = vld [vmem:[#allocation2 + $0xe9] sm:$0xff]
      %v1746 = vld [vmem:[#allocation2 + $0xf1] sm:$0xff]
      %v1747 = vld [vmem:[#allocation2 + $0xf9] sm:$0xff]
      %v1748 = vld [vmem:[#allocation2 + $0x101] sm:$0xff]
      %v1749 = vld [vmem:[#allocation2 + $0x109] sm:$0xff]
      %s1750 = scalar_lea.vmem %s1, 16
      %v1751 = vld [vmem:[%s1750] sm:$0x7]
      %v1753 = vsel %vm373, %v1718, 0
      %v1756 = vsel %vm373, %v1719, 0
      %v1759 = vsel %vm373, %v1720, 0
      %v1762 = vsel %vm373, %v1721, 0
      %v1765 = vsel %vm373, %v1722, 0
      %v1768 = vsel %vm373, %v1723, 0
      %v1771 = vsel %vm373, %v1724, 0
      %v1774 = vsel %vm373, %v1725, 0
      %v1777 = vsel %vm373, %v1726, 0
      %v1780 = vsel %vm373, %v1727, 0
      %v1783 = vsel %vm373, %v1728, 0
      %v1786 = vsel %vm373, %v1729, 0
      %v1789 = vsel %vm373, %v1730, 0
      %v1792 = vsel %vm373, %v1731, 0
      %v1795 = vsel %vm373, %v1732, 0
      %v1798 = vsel %vm373, %v1733, 0
      %v1801 = vsel %vm373, %v1734, 0
      %v1804 = vsel %vm373, %v1735, 0
      %v1807 = vsel %vm373, %v1736, 0
      %v1810 = vsel %vm373, %v1737, 0
      %v1813 = vsel %vm373, %v1738, 0
      %v1816 = vsel %vm373, %v1739, 0
      %v1819 = vsel %vm373, %v1740, 0
      %v1822 = vsel %vm373, %v1741, 0
      %v1825 = vsel %vm373, %v1742, 0
      %v1828 = vsel %vm373, %v1743, 0
      %v1831 = vsel %vm373, %v1744, 0
      %v1834 = vsel %vm373, %v1745, 0
      %v1837 = vsel %vm373, %v1746, 0
      %v1840 = vsel %vm373, %v1747, 0
      %v1843 = vsel %vm373, %v1748, 0
      %v1846 = vsel %vm373, %v1749, 0
      %v1849 = vsel %vm769, %v1751, 0
      %1851 = vmatpush.msra.mxu0 0.0
      %1852 = vmatpush.msra.mxu0 0.0
      %1853 = vmatpush.msra.mxu0 0.0
      %1854 = vmatpush.msra.mxu0 0.0
      %1855 = vmatpush.msra.mxu0 0.0
      %1856 = vmatpush.msra.mxu0 0.0
      %1857 = vmatpush.msra.mxu0 0.0
      %1858 = vmatpush.msra.mxu0 0.0
      %1859 = vmatpush.msra.mxu0 0.0
      %1860 = vmatpush.msra.mxu0 0.0
      %1861 = vmatpush.msra.mxu0 0.0
      %1862 = vmatpush.msra.mxu0 0.0
      %1863 = vmatpush.msra.mxu0 0.0
      %1864 = vmatpush.msra.mxu0 0.0
      %1865 = vmatpush.msra.mxu0 0.0
      %1866 = vmatpush.msra.mxu0 %v1849
      %1867 = vmatmul.f32.gmra.mxu0 %v1753
      %v1868 = vpop.f32.mrf.mxu0
      %v1869 = vadd.f32 0.0, %v1868
      %1870 = vmatmul.f32.gmra.mxu0 %v1756
      %v1871 = vpop.f32.mrf.mxu0
      %v1872 = vadd.f32 0.0, %v1871
      %1873 = vmatmul.f32.gmra.mxu0 %v1759
      %v1874 = vpop.f32.mrf.mxu0
      %v1875 = vadd.f32 0.0, %v1874
      %1876 = vmatmul.f32.gmra.mxu0 %v1762
      %v1877 = vpop.f32.mrf.mxu0
      %v1878 = vadd.f32 0.0, %v1877
      %1879 = vmatmul.f32.gmra.mxu0 %v1765
      %v1880 = vpop.f32.mrf.mxu0
      %v1881 = vadd.f32 0.0, %v1880
      %1882 = vmatmul.f32.gmra.mxu0 %v1768
      %v1883 = vpop.f32.mrf.mxu0
      %v1884 = vadd.f32 0.0, %v1883
      %1885 = vmatmul.f32.gmra.mxu0 %v1771
      %v1886 = vpop.f32.mrf.mxu0
      %v1887 = vadd.f32 0.0, %v1886
      %1888 = vmatmul.f32.gmra.mxu0 %v1774
      %v1889 = vpop.f32.mrf.mxu0
      %v1890 = vadd.f32 0.0, %v1889
      %1891 = vmatmul.f32.gmra.mxu0 %v1777
      %v1892 = vpop.f32.mrf.mxu0
      %v1893 = vadd.f32 0.0, %v1892
      %1894 = vmatmul.f32.gmra.mxu0 %v1780
      %v1895 = vpop.f32.mrf.mxu0
      %v1896 = vadd.f32 0.0, %v1895
      %1897 = vmatmul.f32.gmra.mxu0 %v1783
      %v1898 = vpop.f32.mrf.mxu0
      %v1899 = vadd.f32 0.0, %v1898
      %1900 = vmatmul.f32.gmra.mxu0 %v1786
      %v1901 = vpop.f32.mrf.mxu0
      %v1902 = vadd.f32 0.0, %v1901
      %1903 = vmatmul.f32.gmra.mxu0 %v1789
      %v1904 = vpop.f32.mrf.mxu0
      %v1905 = vadd.f32 0.0, %v1904
      %1906 = vmatmul.f32.gmra.mxu0 %v1792
      %v1907 = vpop.f32.mrf.mxu0
      %v1908 = vadd.f32 0.0, %v1907
      %1909 = vmatmul.f32.gmra.mxu0 %v1795
      %v1910 = vpop.f32.mrf.mxu0
      %v1911 = vadd.f32 0.0, %v1910
      %1912 = vmatmul.f32.gmra.mxu0 %v1798
      %v1913 = vpop.f32.mrf.mxu0
      %v1914 = vadd.f32 0.0, %v1913
      %1915 = vmatmul.f32.gmra.mxu0 %v1801
      %v1916 = vpop.f32.mrf.mxu0
      %v1917 = vadd.f32 0.0, %v1916
      %1918 = vmatmul.f32.gmra.mxu0 %v1804
      %v1919 = vpop.f32.mrf.mxu0
      %v1920 = vadd.f32 0.0, %v1919
      %1921 = vmatmul.f32.gmra.mxu0 %v1807
      %v1922 = vpop.f32.mrf.mxu0
      %v1923 = vadd.f32 0.0, %v1922
      %1924 = vmatmul.f32.gmra.mxu0 %v1810
      %v1925 = vpop.f32.mrf.mxu0
      %v1926 = vadd.f32 0.0, %v1925
      %1927 = vmatmul.f32.gmra.mxu0 %v1813
      %v1928 = vpop.f32.mrf.mxu0
      %v1929 = vadd.f32 0.0, %v1928
      %1930 = vmatmul.f32.gmra.mxu0 %v1816
      %v1931 = vpop.f32.mrf.mxu0
      %v1932 = vadd.f32 0.0, %v1931
      %1933 = vmatmul.f32.gmra.mxu0 %v1819
      %v1934 = vpop.f32.mrf.mxu0
      %v1935 = vadd.f32 0.0, %v1934
      %1936 = vmatmul.f32.gmra.mxu0 %v1822
      %v1937 = vpop.f32.mrf.mxu0
      %v1938 = vadd.f32 0.0, %v1937
      %1939 = vmatmul.f32.gmra.mxu0 %v1825
      %v1940 = vpop.f32.mrf.mxu0
      %v1941 = vadd.f32 0.0, %v1940
      %1942 = vmatmul.f32.gmra.mxu0 %v1828
      %v1943 = vpop.f32.mrf.mxu0
      %v1944 = vadd.f32 0.0, %v1943
      %1945 = vmatmul.f32.gmra.mxu0 %v1831
      %v1946 = vpop.f32.mrf.mxu0
      %v1947 = vadd.f32 0.0, %v1946
      %1948 = vmatmul.f32.gmra.mxu0 %v1834
      %v1949 = vpop.f32.mrf.mxu0
      %v1950 = vadd.f32 0.0, %v1949
      %1951 = vmatmul.f32.gmra.mxu0 %v1837
      %v1952 = vpop.f32.mrf.mxu0
      %v1953 = vadd.f32 0.0, %v1952
      %1954 = vmatmul.f32.gmra.mxu0 %v1840
      %v1955 = vpop.f32.mrf.mxu0
      %v1956 = vadd.f32 0.0, %v1955
      %1957 = vmatmul.f32.gmra.mxu0 %v1843
      %v1958 = vpop.f32.mrf.mxu0
      %v1959 = vadd.f32 0.0, %v1958
      %1960 = vmatmul.f32.gmra.mxu0 %v1846
      %v1961 = vpop.f32.mrf.mxu0
      %v1962 = vadd.f32 0.0, %v1961
      %1963 = vdwg.mxu0
      %v1964 = vadd.f32 %v1686, %v1869
      %v1965 = vadd.f32 %v1687, %v1872
      %v1966 = vadd.f32 %v1688, %v1875
      %v1967 = vadd.f32 %v1689, %v1878
      %v1968 = vadd.f32 %v1690, %v1881
      %v1969 = vadd.f32 %v1691, %v1884
      %v1970 = vadd.f32 %v1692, %v1887
      %v1971 = vadd.f32 %v1693, %v1890
      %v1972 = vadd.f32 %v1694, %v1893
      %v1973 = vadd.f32 %v1695, %v1896
      %v1974 = vadd.f32 %v1696, %v1899
      %v1975 = vadd.f32 %v1697, %v1902
      %v1976 = vadd.f32 %v1698, %v1905
      %v1977 = vadd.f32 %v1699, %v1908
      %v1978 = vadd.f32 %v1700, %v1911
      %v1979 = vadd.f32 %v1701, %v1914
      %v1980 = vadd.f32 %v1702, %v1917
      %v1981 = vadd.f32 %v1703, %v1920
      %v1982 = vadd.f32 %v1704, %v1923
      %v1983 = vadd.f32 %v1705, %v1926
      %v1984 = vadd.f32 %v1706, %v1929
      %v1985 = vadd.f32 %v1707, %v1932
      %v1986 = vadd.f32 %v1708, %v1935
      %v1987 = vadd.f32 %v1709, %v1938
      %v1988 = vadd.f32 %v1710, %v1941
      %v1989 = vadd.f32 %v1711, %v1944
      %v1990 = vadd.f32 %v1712, %v1947
      %v1991 = vadd.f32 %v1713, %v1950
      %v1992 = vadd.f32 %v1714, %v1953
      %v1993 = vadd.f32 %v1715, %v1956
      %v1994 = vadd.f32 %v1716, %v1959
      %v1995 = vadd.f32 %v1717, %v1962
      %v1996 = vld [vmem:[#allocation2 + $0x12] sm:$0xff]
      %v1997 = vld [vmem:[#allocation2 + $0x1a] sm:$0xff]
      %v1998 = vld [vmem:[#allocation2 + $0x22] sm:$0xff]
      %v1999 = vld [vmem:[#allocation2 + $0x2a] sm:$0xff]
      %v2000 = vld [vmem:[#allocation2 + $0x32] sm:$0xff]
      %v2001 = vld [vmem:[#allocation2 + $0x3a] sm:$0xff]
      %v2002 = vld [vmem:[#allocation2 + $0x42] sm:$0xff]
      %v2003 = vld [vmem:[#allocation2 + $0x4a] sm:$0xff]
      %v2004 = vld [vmem:[#allocation2 + $0x52] sm:$0xff]
      %v2005 = vld [vmem:[#allocation2 + $0x5a] sm:$0xff]
      %v2006 = vld [vmem:[#allocation2 + $0x62] sm:$0xff]
      %v2007 = vld [vmem:[#allocation2 + $0x6a] sm:$0xff]
      %v2008 = vld [vmem:[#allocation2 + $0x72] sm:$0xff]
      %v2009 = vld [vmem:[#allocation2 + $0x7a] sm:$0xff]
      %v2010 = vld [vmem:[#allocation2 + $0x82] sm:$0xff]
      %v2011 = vld [vmem:[#allocation2 + $0x8a] sm:$0xff]
      %v2012 = vld [vmem:[#allocation2 + $0x92] sm:$0xff]
      %v2013 = vld [vmem:[#allocation2 + $0x9a] sm:$0xff]
      %v2014 = vld [vmem:[#allocation2 + $0xa2] sm:$0xff]
      %v2015 = vld [vmem:[#allocation2 + $0xaa] sm:$0xff]
      %v2016 = vld [vmem:[#allocation2 + $0xb2] sm:$0xff]
      %v2017 = vld [vmem:[#allocation2 + $0xba] sm:$0xff]
      %v2018 = vld [vmem:[#allocation2 + $0xc2] sm:$0xff]
      %v2019 = vld [vmem:[#allocation2 + $0xca] sm:$0xff]
      %v2020 = vld [vmem:[#allocation2 + $0xd2] sm:$0xff]
      %v2021 = vld [vmem:[#allocation2 + $0xda] sm:$0xff]
      %v2022 = vld [vmem:[#allocation2 + $0xe2] sm:$0xff]
      %v2023 = vld [vmem:[#allocation2 + $0xea] sm:$0xff]
      %v2024 = vld [vmem:[#allocation2 + $0xf2] sm:$0xff]
      %v2025 = vld [vmem:[#allocation2 + $0xfa] sm:$0xff]
      %v2026 = vld [vmem:[#allocation2 + $0x102] sm:$0xff]
      %v2027 = vld [vmem:[#allocation2 + $0x10a] sm:$0xff]
      %v2028 = vsel %vm542, %v1996, 0.0
      %v2029 = vsel %vm543, %v1997, 0.0
      %v2030 = vsel %vm544, %v1998, 0.0
      %v2031 = vsel %vm545, %v1999, 0.0
      %v2032 = vsel %vm546, %v2000, 0.0
      %v2033 = vsel %vm547, %v2001, 0.0
      %v2034 = vsel %vm548, %v2002, 0.0
      %v2035 = vsel %vm549, %v2003, 0.0
      %v2036 = vsel %vm550, %v2004, 0.0
      %v2037 = vsel %vm551, %v2005, 0.0
      %v2038 = vsel %vm552, %v2006, 0.0
      %v2039 = vsel %vm553, %v2007, 0.0
      %v2040 = vsel %vm554, %v2008, 0.0
      %v2041 = vsel %vm555, %v2009, 0.0
      %v2042 = vsel %vm556, %v2010, 0.0
      %v2043 = vsel %vm557, %v2011, 0.0
      %v2044 = vsel %vm558, %v2012, 0.0
      %v2045 = vsel %vm559, %v2013, 0.0
      %v2046 = vsel %vm560, %v2014, 0.0
      %v2047 = vsel %vm561, %v2015, 0.0
      %v2048 = vsel %vm562, %v2016, 0.0
      %v2049 = vsel %vm563, %v2017, 0.0
      %v2050 = vsel %vm564, %v2018, 0.0
      %v2051 = vsel %vm565, %v2019, 0.0
      %v2052 = vsel %vm566, %v2020, 0.0
      %v2053 = vsel %vm567, %v2021, 0.0
      %v2054 = vsel %vm568, %v2022, 0.0
      %v2055 = vsel %vm569, %v2023, 0.0
      %v2056 = vsel %vm570, %v2024, 0.0
      %v2057 = vsel %vm571, %v2025, 0.0
      %v2058 = vsel %vm572, %v2026, 0.0
      %v2059 = vsel %vm573, %v2027, 0.0
      %s2060 = scalar_lea.vmem %s1, 20
      %v2061 = vld [vmem:[%s2060] sm:$0x7]
      %v2063 = vsel %vm373, %v2028, 0
      %v2066 = vsel %vm373, %v2029, 0
      %v2069 = vsel %vm373, %v2030, 0
      %v2072 = vsel %vm373, %v2031, 0
      %v2075 = vsel %vm373, %v2032, 0
      %v2078 = vsel %vm373, %v2033, 0
      %v2081 = vsel %vm373, %v2034, 0
      %v2084 = vsel %vm373, %v2035, 0
      %v2087 = vsel %vm373, %v2036, 0
      %v2090 = vsel %vm373, %v2037, 0
      %v2093 = vsel %vm373, %v2038, 0
      %v2096 = vsel %vm373, %v2039, 0
      %v2099 = vsel %vm373, %v2040, 0
      %v2102 = vsel %vm373, %v2041, 0
      %v2105 = vsel %vm373, %v2042, 0
      %v2108 = vsel %vm373, %v2043, 0
      %v2111 = vsel %vm373, %v2044, 0
      %v2114 = vsel %vm373, %v2045, 0
      %v2117 = vsel %vm373, %v2046, 0
      %v2120 = vsel %vm373, %v2047, 0
      %v2123 = vsel %vm373, %v2048, 0
      %v2126 = vsel %vm373, %v2049, 0
      %v2129 = vsel %vm373, %v2050, 0
      %v2132 = vsel %vm373, %v2051, 0
      %v2135 = vsel %vm373, %v2052, 0
      %v2138 = vsel %vm373, %v2053, 0
      %v2141 = vsel %vm373, %v2054, 0
      %v2144 = vsel %vm373, %v2055, 0
      %v2147 = vsel %vm373, %v2056, 0
      %v2150 = vsel %vm373, %v2057, 0
      %v2153 = vsel %vm373, %v2058, 0
      %v2156 = vsel %vm373, %v2059, 0
      %v2159 = vsel %vm769, %v2061, 0
      %2161 = vmatpush.msra.mxu0 0.0
      %2162 = vmatpush.msra.mxu0 0.0
      %2163 = vmatpush.msra.mxu0 0.0
      %2164 = vmatpush.msra.mxu0 0.0
      %2165 = vmatpush.msra.mxu0 0.0
      %2166 = vmatpush.msra.mxu0 0.0
      %2167 = vmatpush.msra.mxu0 0.0
      %2168 = vmatpush.msra.mxu0 0.0
      %2169 = vmatpush.msra.mxu0 0.0
      %2170 = vmatpush.msra.mxu0 0.0
      %2171 = vmatpush.msra.mxu0 0.0
      %2172 = vmatpush.msra.mxu0 0.0
      %2173 = vmatpush.msra.mxu0 0.0
      %2174 = vmatpush.msra.mxu0 0.0
      %2175 = vmatpush.msra.mxu0 0.0
      %2176 = vmatpush.msra.mxu0 %v2159
      %2177 = vmatmul.f32.gmra.mxu0 %v2063
      %v2178 = vpop.f32.mrf.mxu0
      %v2179 = vadd.f32 0.0, %v2178
      %2180 = vmatmul.f32.gmra.mxu0 %v2066
      %v2181 = vpop.f32.mrf.mxu0
      %v2182 = vadd.f32 0.0, %v2181
      %2183 = vmatmul.f32.gmra.mxu0 %v2069
      %v2184 = vpop.f32.mrf.mxu0
      %v2185 = vadd.f32 0.0, %v2184
      %2186 = vmatmul.f32.gmra.mxu0 %v2072
      %v2187 = vpop.f32.mrf.mxu0
      %v2188 = vadd.f32 0.0, %v2187
      %2189 = vmatmul.f32.gmra.mxu0 %v2075
      %v2190 = vpop.f32.mrf.mxu0
      %v2191 = vadd.f32 0.0, %v2190
      %2192 = vmatmul.f32.gmra.mxu0 %v2078
      %v2193 = vpop.f32.mrf.mxu0
      %v2194 = vadd.f32 0.0, %v2193
      %2195 = vmatmul.f32.gmra.mxu0 %v2081
      %v2196 = vpop.f32.mrf.mxu0
      %v2197 = vadd.f32 0.0, %v2196
      %2198 = vmatmul.f32.gmra.mxu0 %v2084
      %v2199 = vpop.f32.mrf.mxu0
      %v2200 = vadd.f32 0.0, %v2199
      %2201 = vmatmul.f32.gmra.mxu0 %v2087
      %v2202 = vpop.f32.mrf.mxu0
      %v2203 = vadd.f32 0.0, %v2202
      %2204 = vmatmul.f32.gmra.mxu0 %v2090
      %v2205 = vpop.f32.mrf.mxu0
      %v2206 = vadd.f32 0.0, %v2205
      %2207 = vmatmul.f32.gmra.mxu0 %v2093
      %v2208 = vpop.f32.mrf.mxu0
      %v2209 = vadd.f32 0.0, %v2208
      %2210 = vmatmul.f32.gmra.mxu0 %v2096
      %v2211 = vpop.f32.mrf.mxu0
      %v2212 = vadd.f32 0.0, %v2211
      %2213 = vmatmul.f32.gmra.mxu0 %v2099
      %v2214 = vpop.f32.mrf.mxu0
      %v2215 = vadd.f32 0.0, %v2214
      %2216 = vmatmul.f32.gmra.mxu0 %v2102
      %v2217 = vpop.f32.mrf.mxu0
      %v2218 = vadd.f32 0.0, %v2217
      %2219 = vmatmul.f32.gmra.mxu0 %v2105
      %v2220 = vpop.f32.mrf.mxu0
      %v2221 = vadd.f32 0.0, %v2220
      %2222 = vmatmul.f32.gmra.mxu0 %v2108
      %v2223 = vpop.f32.mrf.mxu0
      %v2224 = vadd.f32 0.0, %v2223
      %2225 = vmatmul.f32.gmra.mxu0 %v2111
      %v2226 = vpop.f32.mrf.mxu0
      %v2227 = vadd.f32 0.0, %v2226
      %2228 = vmatmul.f32.gmra.mxu0 %v2114
      %v2229 = vpop.f32.mrf.mxu0
      %v2230 = vadd.f32 0.0, %v2229
      %2231 = vmatmul.f32.gmra.mxu0 %v2117
      %v2232 = vpop.f32.mrf.mxu0
      %v2233 = vadd.f32 0.0, %v2232
      %2234 = vmatmul.f32.gmra.mxu0 %v2120
      %v2235 = vpop.f32.mrf.mxu0
      %v2236 = vadd.f32 0.0, %v2235
      %2237 = vmatmul.f32.gmra.mxu0 %v2123
      %v2238 = vpop.f32.mrf.mxu0
      %v2239 = vadd.f32 0.0, %v2238
      %2240 = vmatmul.f32.gmra.mxu0 %v2126
      %v2241 = vpop.f32.mrf.mxu0
      %v2242 = vadd.f32 0.0, %v2241
      %2243 = vmatmul.f32.gmra.mxu0 %v2129
      %v2244 = vpop.f32.mrf.mxu0
      %v2245 = vadd.f32 0.0, %v2244
      %2246 = vmatmul.f32.gmra.mxu0 %v2132
      %v2247 = vpop.f32.mrf.mxu0
      %v2248 = vadd.f32 0.0, %v2247
      %2249 = vmatmul.f32.gmra.mxu0 %v2135
      %v2250 = vpop.f32.mrf.mxu0
      %v2251 = vadd.f32 0.0, %v2250
      %2252 = vmatmul.f32.gmra.mxu0 %v2138
      %v2253 = vpop.f32.mrf.mxu0
      %v2254 = vadd.f32 0.0, %v2253
      %2255 = vmatmul.f32.gmra.mxu0 %v2141
      %v2256 = vpop.f32.mrf.mxu0
      %v2257 = vadd.f32 0.0, %v2256
      %2258 = vmatmul.f32.gmra.mxu0 %v2144
      %v2259 = vpop.f32.mrf.mxu0
      %v2260 = vadd.f32 0.0, %v2259
      %2261 = vmatmul.f32.gmra.mxu0 %v2147
      %v2262 = vpop.f32.mrf.mxu0
      %v2263 = vadd.f32 0.0, %v2262
      %2264 = vmatmul.f32.gmra.mxu0 %v2150
      %v2265 = vpop.f32.mrf.mxu0
      %v2266 = vadd.f32 0.0, %v2265
      %2267 = vmatmul.f32.gmra.mxu0 %v2153
      %v2268 = vpop.f32.mrf.mxu0
      %v2269 = vadd.f32 0.0, %v2268
      %2270 = vmatmul.f32.gmra.mxu0 %v2156
      %v2271 = vpop.f32.mrf.mxu0
      %v2272 = vadd.f32 0.0, %v2271
      %2273 = vdwg.mxu0
      %v2274 = vadd.f32 %v1964, %v2179
      %v2275 = vadd.f32 %v1965, %v2182
      %v2276 = vadd.f32 %v1966, %v2185
      %v2277 = vadd.f32 %v1967, %v2188
      %v2278 = vadd.f32 %v1968, %v2191
      %v2279 = vadd.f32 %v1969, %v2194
      %v2280 = vadd.f32 %v1970, %v2197
      %v2281 = vadd.f32 %v1971, %v2200
      %v2282 = vadd.f32 %v1972, %v2203
      %v2283 = vadd.f32 %v1973, %v2206
      %v2284 = vadd.f32 %v1974, %v2209
      %v2285 = vadd.f32 %v1975, %v2212
      %v2286 = vadd.f32 %v1976, %v2215
      %v2287 = vadd.f32 %v1977, %v2218
      %v2288 = vadd.f32 %v1978, %v2221
      %v2289 = vadd.f32 %v1979, %v2224
      %v2290 = vadd.f32 %v1980, %v2227
      %v2291 = vadd.f32 %v1981, %v2230
      %v2292 = vadd.f32 %v1982, %v2233
      %v2293 = vadd.f32 %v1983, %v2236
      %v2294 = vadd.f32 %v1984, %v2239
      %v2295 = vadd.f32 %v1985, %v2242
      %v2296 = vadd.f32 %v1986, %v2245
      %v2297 = vadd.f32 %v1987, %v2248
      %v2298 = vadd.f32 %v1988, %v2251
      %v2299 = vadd.f32 %v1989, %v2254
      %v2300 = vadd.f32 %v1990, %v2257
      %v2301 = vadd.f32 %v1991, %v2260
      %v2302 = vadd.f32 %v1992, %v2263
      %v2303 = vadd.f32 %v1993, %v2266
      %v2304 = vadd.f32 %v1994, %v2269
      %v2305 = vadd.f32 %v1995, %v2272
      %v2306 = vld [vmem:[#allocation2 + $0x20] sm:$0xff]
      %v2307 = vld [vmem:[#allocation2 + $0x28] sm:$0xff]
      %v2308 = vld [vmem:[#allocation2 + $0x30] sm:$0xff]
      %v2309 = vld [vmem:[#allocation2 + $0x38] sm:$0xff]
      %v2310 = vld [vmem:[#allocation2 + $0x40] sm:$0xff]
      %v2311 = vld [vmem:[#allocation2 + $0x48] sm:$0xff]
      %v2312 = vld [vmem:[#allocation2 + $0x50] sm:$0xff]
      %v2313 = vld [vmem:[#allocation2 + $0x58] sm:$0xff]
      %v2314 = vld [vmem:[#allocation2 + $0x60] sm:$0xff]
      %v2315 = vld [vmem:[#allocation2 + $0x68] sm:$0xff]
      %v2316 = vld [vmem:[#allocation2 + $0x70] sm:$0xff]
      %v2317 = vld [vmem:[#allocation2 + $0x78] sm:$0xff]
      %v2318 = vld [vmem:[#allocation2 + $0x80] sm:$0xff]
      %v2319 = vld [vmem:[#allocation2 + $0x88] sm:$0xff]
      %v2320 = vld [vmem:[#allocation2 + $0x90] sm:$0xff]
      %v2321 = vld [vmem:[#allocation2 + $0x98] sm:$0xff]
      %v2322 = vld [vmem:[#allocation2 + $0xa0] sm:$0xff]
      %v2323 = vld [vmem:[#allocation2 + $0xa8] sm:$0xff]
      %v2324 = vld [vmem:[#allocation2 + $0xb0] sm:$0xff]
      %v2325 = vld [vmem:[#allocation2 + $0xb8] sm:$0xff]
      %v2326 = vld [vmem:[#allocation2 + $0xc0] sm:$0xff]
      %v2327 = vld [vmem:[#allocation2 + $0xc8] sm:$0xff]
      %v2328 = vld [vmem:[#allocation2 + $0xd0] sm:$0xff]
      %v2329 = vld [vmem:[#allocation2 + $0xd8] sm:$0xff]
      %v2330 = vld [vmem:[#allocation2 + $0xe0] sm:$0xff]
      %v2331 = vld [vmem:[#allocation2 + $0xe8] sm:$0xff]
      %v2332 = vld [vmem:[#allocation2 + $0xf0] sm:$0xff]
      %v2333 = vld [vmem:[#allocation2 + $0xf8] sm:$0xff]
      %v2334 = vld [vmem:[#allocation2 + $0x100] sm:$0xff]
      %v2335 = vld [vmem:[#allocation2 + $0x108] sm:$0xff]
      %v2336 = vld [vmem:[#allocation2 + $0x110] sm:$0xff]
      %v2337 = vld [vmem:[#allocation2 + $0x118] sm:$0xff]
      %v2338 = vsel %vm510, %v2306, 0.0
      %v2339 = vsel %vm511, %v2307, 0.0
      %v2340 = vsel %vm512, %v2308, 0.0
      %v2341 = vsel %vm513, %v2309, 0.0
      %v2342 = vsel %vm514, %v2310, 0.0
      %v2343 = vsel %vm515, %v2311, 0.0
      %v2344 = vsel %vm516, %v2312, 0.0
      %v2345 = vsel %vm517, %v2313, 0.0
      %v2346 = vsel %vm518, %v2314, 0.0
      %v2347 = vsel %vm519, %v2315, 0.0
      %v2348 = vsel %vm520, %v2316, 0.0
      %v2349 = vsel %vm521, %v2317, 0.0
      %v2350 = vsel %vm522, %v2318, 0.0
      %v2351 = vsel %vm523, %v2319, 0.0
      %v2352 = vsel %vm524, %v2320, 0.0
      %v2353 = vsel %vm525, %v2321, 0.0
      %v2354 = vsel %vm526, %v2322, 0.0
      %v2355 = vsel %vm527, %v2323, 0.0
      %v2356 = vsel %vm528, %v2324, 0.0
      %v2357 = vsel %vm529, %v2325, 0.0
      %v2358 = vsel %vm530, %v2326, 0.0
      %v2359 = vsel %vm531, %v2327, 0.0
      %v2360 = vsel %vm532, %v2328, 0.0
      %v2361 = vsel %vm533, %v2329, 0.0
      %v2362 = vsel %vm534, %v2330, 0.0
      %v2363 = vsel %vm535, %v2331, 0.0
      %v2364 = vsel %vm536, %v2332, 0.0
      %v2365 = vsel %vm537, %v2333, 0.0
      %v2366 = vsel %vm538, %v2334, 0.0
      %v2367 = vsel %vm539, %v2335, 0.0
      %v2368 = vsel %vm540, %v2336, 0.0
      %v2369 = vsel %vm541, %v2337, 0.0
      %s2370 = scalar_lea.vmem %s1, 24
      %v2371 = vld [vmem:[%s2370] sm:$0x7]
      %v2373 = vsel %vm373, %v2338, 0
      %v2376 = vsel %vm373, %v2339, 0
      %v2379 = vsel %vm373, %v2340, 0
      %v2382 = vsel %vm373, %v2341, 0
      %v2385 = vsel %vm373, %v2342, 0
      %v2388 = vsel %vm373, %v2343, 0
      %v2391 = vsel %vm373, %v2344, 0
      %v2394 = vsel %vm373, %v2345, 0
      %v2397 = vsel %vm373, %v2346, 0
      %v2400 = vsel %vm373, %v2347, 0
      %v2403 = vsel %vm373, %v2348, 0
      %v2406 = vsel %vm373, %v2349, 0
      %v2409 = vsel %vm373, %v2350, 0
      %v2412 = vsel %vm373, %v2351, 0
      %v2415 = vsel %vm373, %v2352, 0
      %v2418 = vsel %vm373, %v2353, 0
      %v2421 = vsel %vm373, %v2354, 0
      %v2424 = vsel %vm373, %v2355, 0
      %v2427 = vsel %vm373, %v2356, 0
      %v2430 = vsel %vm373, %v2357, 0
      %v2433 = vsel %vm373, %v2358, 0
      %v2436 = vsel %vm373, %v2359, 0
      %v2439 = vsel %vm373, %v2360, 0
      %v2442 = vsel %vm373, %v2361, 0
      %v2445 = vsel %vm373, %v2362, 0
      %v2448 = vsel %vm373, %v2363, 0
      %v2451 = vsel %vm373, %v2364, 0
      %v2454 = vsel %vm373, %v2365, 0
      %v2457 = vsel %vm373, %v2366, 0
      %v2460 = vsel %vm373, %v2367, 0
      %v2463 = vsel %vm373, %v2368, 0
      %v2466 = vsel %vm373, %v2369, 0
      %v2469 = vsel %vm769, %v2371, 0
      %2471 = vmatpush.msra.mxu0 0.0
      %2472 = vmatpush.msra.mxu0 0.0
      %2473 = vmatpush.msra.mxu0 0.0
      %2474 = vmatpush.msra.mxu0 0.0
      %2475 = vmatpush.msra.mxu0 0.0
      %2476 = vmatpush.msra.mxu0 0.0
      %2477 = vmatpush.msra.mxu0 0.0
      %2478 = vmatpush.msra.mxu0 0.0
      %2479 = vmatpush.msra.mxu0 0.0
      %2480 = vmatpush.msra.mxu0 0.0
      %2481 = vmatpush.msra.mxu0 0.0
      %2482 = vmatpush.msra.mxu0 0.0
      %2483 = vmatpush.msra.mxu0 0.0
      %2484 = vmatpush.msra.mxu0 0.0
      %2485 = vmatpush.msra.mxu0 0.0
      %2486 = vmatpush.msra.mxu0 %v2469
      %2487 = vmatmul.f32.gmra.mxu0 %v2373
      %v2488 = vpop.f32.mrf.mxu0
      %v2489 = vadd.f32 0.0, %v2488
      %2490 = vmatmul.f32.gmra.mxu0 %v2376
      %v2491 = vpop.f32.mrf.mxu0
      %v2492 = vadd.f32 0.0, %v2491
      %2493 = vmatmul.f32.gmra.mxu0 %v2379
      %v2494 = vpop.f32.mrf.mxu0
      %v2495 = vadd.f32 0.0, %v2494
      %2496 = vmatmul.f32.gmra.mxu0 %v2382
      %v2497 = vpop.f32.mrf.mxu0
      %v2498 = vadd.f32 0.0, %v2497
      %2499 = vmatmul.f32.gmra.mxu0 %v2385
      %v2500 = vpop.f32.mrf.mxu0
      %v2501 = vadd.f32 0.0, %v2500
      %2502 = vmatmul.f32.gmra.mxu0 %v2388
      %v2503 = vpop.f32.mrf.mxu0
      %v2504 = vadd.f32 0.0, %v2503
      %2505 = vmatmul.f32.gmra.mxu0 %v2391
      %v2506 = vpop.f32.mrf.mxu0
      %v2507 = vadd.f32 0.0, %v2506
      %2508 = vmatmul.f32.gmra.mxu0 %v2394
      %v2509 = vpop.f32.mrf.mxu0
      %v2510 = vadd.f32 0.0, %v2509
      %2511 = vmatmul.f32.gmra.mxu0 %v2397
      %v2512 = vpop.f32.mrf.mxu0
      %v2513 = vadd.f32 0.0, %v2512
      %2514 = vmatmul.f32.gmra.mxu0 %v2400
      %v2515 = vpop.f32.mrf.mxu0
      %v2516 = vadd.f32 0.0, %v2515
      %2517 = vmatmul.f32.gmra.mxu0 %v2403
      %v2518 = vpop.f32.mrf.mxu0
      %v2519 = vadd.f32 0.0, %v2518
      %2520 = vmatmul.f32.gmra.mxu0 %v2406
      %v2521 = vpop.f32.mrf.mxu0
      %v2522 = vadd.f32 0.0, %v2521
      %2523 = vmatmul.f32.gmra.mxu0 %v2409
      %v2524 = vpop.f32.mrf.mxu0
      %v2525 = vadd.f32 0.0, %v2524
      %2526 = vmatmul.f32.gmra.mxu0 %v2412
      %v2527 = vpop.f32.mrf.mxu0
      %v2528 = vadd.f32 0.0, %v2527
      %2529 = vmatmul.f32.gmra.mxu0 %v2415
      %v2530 = vpop.f32.mrf.mxu0
      %v2531 = vadd.f32 0.0, %v2530
      %2532 = vmatmul.f32.gmra.mxu0 %v2418
      %v2533 = vpop.f32.mrf.mxu0
      %v2534 = vadd.f32 0.0, %v2533
      %2535 = vmatmul.f32.gmra.mxu0 %v2421
      %v2536 = vpop.f32.mrf.mxu0
      %v2537 = vadd.f32 0.0, %v2536
      %2538 = vmatmul.f32.gmra.mxu0 %v2424
      %v2539 = vpop.f32.mrf.mxu0
      %v2540 = vadd.f32 0.0, %v2539
      %2541 = vmatmul.f32.gmra.mxu0 %v2427
      %v2542 = vpop.f32.mrf.mxu0
      %v2543 = vadd.f32 0.0, %v2542
      %2544 = vmatmul.f32.gmra.mxu0 %v2430
      %v2545 = vpop.f32.mrf.mxu0
      %v2546 = vadd.f32 0.0, %v2545
      %2547 = vmatmul.f32.gmra.mxu0 %v2433
      %v2548 = vpop.f32.mrf.mxu0
      %v2549 = vadd.f32 0.0, %v2548
      %2550 = vmatmul.f32.gmra.mxu0 %v2436
      %v2551 = vpop.f32.mrf.mxu0
      %v2552 = vadd.f32 0.0, %v2551
      %2553 = vmatmul.f32.gmra.mxu0 %v2439
      %v2554 = vpop.f32.mrf.mxu0
      %v2555 = vadd.f32 0.0, %v2554
      %2556 = vmatmul.f32.gmra.mxu0 %v2442
      %v2557 = vpop.f32.mrf.mxu0
      %v2558 = vadd.f32 0.0, %v2557
      %2559 = vmatmul.f32.gmra.mxu0 %v2445
      %v2560 = vpop.f32.mrf.mxu0
      %v2561 = vadd.f32 0.0, %v2560
      %2562 = vmatmul.f32.gmra.mxu0 %v2448
      %v2563 = vpop.f32.mrf.mxu0
      %v2564 = vadd.f32 0.0, %v2563
      %2565 = vmatmul.f32.gmra.mxu0 %v2451
      %v2566 = vpop.f32.mrf.mxu0
      %v2567 = vadd.f32 0.0, %v2566
      %2568 = vmatmul.f32.gmra.mxu0 %v2454
      %v2569 = vpop.f32.mrf.mxu0
      %v2570 = vadd.f32 0.0, %v2569
      %2571 = vmatmul.f32.gmra.mxu0 %v2457
      %v2572 = vpop.f32.mrf.mxu0
      %v2573 = vadd.f32 0.0, %v2572
      %2574 = vmatmul.f32.gmra.mxu0 %v2460
      %v2575 = vpop.f32.mrf.mxu0
      %v2576 = vadd.f32 0.0, %v2575
      %2577 = vmatmul.f32.gmra.mxu0 %v2463
      %v2578 = vpop.f32.mrf.mxu0
      %v2579 = vadd.f32 0.0, %v2578
      %2580 = vmatmul.f32.gmra.mxu0 %v2466
      %v2581 = vpop.f32.mrf.mxu0
      %v2582 = vadd.f32 0.0, %v2581
      %2583 = vdwg.mxu0
      %v2584 = vadd.f32 %v2274, %v2489
      %v2585 = vadd.f32 %v2275, %v2492
      %v2586 = vadd.f32 %v2276, %v2495
      %v2587 = vadd.f32 %v2277, %v2498
      %v2588 = vadd.f32 %v2278, %v2501
      %v2589 = vadd.f32 %v2279, %v2504
      %v2590 = vadd.f32 %v2280, %v2507
      %v2591 = vadd.f32 %v2281, %v2510
      %v2592 = vadd.f32 %v2282, %v2513
      %v2593 = vadd.f32 %v2283, %v2516
      %v2594 = vadd.f32 %v2284, %v2519
      %v2595 = vadd.f32 %v2285, %v2522
      %v2596 = vadd.f32 %v2286, %v2525
      %v2597 = vadd.f32 %v2287, %v2528
      %v2598 = vadd.f32 %v2288, %v2531
      %v2599 = vadd.f32 %v2289, %v2534
      %v2600 = vadd.f32 %v2290, %v2537
      %v2601 = vadd.f32 %v2291, %v2540
      %v2602 = vadd.f32 %v2292, %v2543
      %v2603 = vadd.f32 %v2293, %v2546
      %v2604 = vadd.f32 %v2294, %v2549
      %v2605 = vadd.f32 %v2295, %v2552
      %v2606 = vadd.f32 %v2296, %v2555
      %v2607 = vadd.f32 %v2297, %v2558
      %v2608 = vadd.f32 %v2298, %v2561
      %v2609 = vadd.f32 %v2299, %v2564
      %v2610 = vadd.f32 %v2300, %v2567
      %v2611 = vadd.f32 %v2301, %v2570
      %v2612 = vadd.f32 %v2302, %v2573
      %v2613 = vadd.f32 %v2303, %v2576
      %v2614 = vadd.f32 %v2304, %v2579
      %v2615 = vadd.f32 %v2305, %v2582
      %v2616 = vld [vmem:[#allocation2 + $0x21] sm:$0xff]
      %v2617 = vld [vmem:[#allocation2 + $0x29] sm:$0xff]
      %v2618 = vld [vmem:[#allocation2 + $0x31] sm:$0xff]
      %v2619 = vld [vmem:[#allocation2 + $0x39] sm:$0xff]
      %v2620 = vld [vmem:[#allocation2 + $0x41] sm:$0xff]
      %v2621 = vld [vmem:[#allocation2 + $0x49] sm:$0xff]
      %v2622 = vld [vmem:[#allocation2 + $0x51] sm:$0xff]
      %v2623 = vld [vmem:[#allocation2 + $0x59] sm:$0xff]
      %v2624 = vld [vmem:[#allocation2 + $0x61] sm:$0xff]
      %v2625 = vld [vmem:[#allocation2 + $0x69] sm:$0xff]
      %v2626 = vld [vmem:[#allocation2 + $0x71] sm:$0xff]
      %v2627 = vld [vmem:[#allocation2 + $0x79] sm:$0xff]
      %v2628 = vld [vmem:[#allocation2 + $0x81] sm:$0xff]
      %v2629 = vld [vmem:[#allocation2 + $0x89] sm:$0xff]
      %v2630 = vld [vmem:[#allocation2 + $0x91] sm:$0xff]
      %v2631 = vld [vmem:[#allocation2 + $0x99] sm:$0xff]
      %v2632 = vld [vmem:[#allocation2 + $0xa1] sm:$0xff]
      %v2633 = vld [vmem:[#allocation2 + $0xa9] sm:$0xff]
      %v2634 = vld [vmem:[#allocation2 + $0xb1] sm:$0xff]
      %v2635 = vld [vmem:[#allocation2 + $0xb9] sm:$0xff]
      %v2636 = vld [vmem:[#allocation2 + $0xc1] sm:$0xff]
      %v2637 = vld [vmem:[#allocation2 + $0xc9] sm:$0xff]
      %v2638 = vld [vmem:[#allocation2 + $0xd1] sm:$0xff]
      %v2639 = vld [vmem:[#allocation2 + $0xd9] sm:$0xff]
      %v2640 = vld [vmem:[#allocation2 + $0xe1] sm:$0xff]
      %v2641 = vld [vmem:[#allocation2 + $0xe9] sm:$0xff]
      %v2642 = vld [vmem:[#allocation2 + $0xf1] sm:$0xff]
      %v2643 = vld [vmem:[#allocation2 + $0xf9] sm:$0xff]
      %v2644 = vld [vmem:[#allocation2 + $0x101] sm:$0xff]
      %v2645 = vld [vmem:[#allocation2 + $0x109] sm:$0xff]
      %v2646 = vld [vmem:[#allocation2 + $0x111] sm:$0xff]
      %v2647 = vld [vmem:[#allocation2 + $0x119] sm:$0xff]
      %s2648 = scalar_lea.vmem %s1, 28
      %v2649 = vld [vmem:[%s2648] sm:$0x7]
      %v2651 = vsel %vm373, %v2616, 0
      %v2654 = vsel %vm373, %v2617, 0
      %v2657 = vsel %vm373, %v2618, 0
      %v2660 = vsel %vm373, %v2619, 0
      %v2663 = vsel %vm373, %v2620, 0
      %v2666 = vsel %vm373, %v2621, 0
      %v2669 = vsel %vm373, %v2622, 0
      %v2672 = vsel %vm373, %v2623, 0
      %v2675 = vsel %vm373, %v2624, 0
      %v2678 = vsel %vm373, %v2625, 0
      %v2681 = vsel %vm373, %v2626, 0
      %v2684 = vsel %vm373, %v2627, 0
      %v2687 = vsel %vm373, %v2628, 0
      %v2690 = vsel %vm373, %v2629, 0
      %v2693 = vsel %vm373, %v2630, 0
      %v2696 = vsel %vm373, %v2631, 0
      %v2699 = vsel %vm373, %v2632, 0
      %v2702 = vsel %vm373, %v2633, 0
      %v2705 = vsel %vm373, %v2634, 0
      %v2708 = vsel %vm373, %v2635, 0
      %v2711 = vsel %vm373, %v2636, 0
      %v2714 = vsel %vm373, %v2637, 0
      %v2717 = vsel %vm373, %v2638, 0
      %v2720 = vsel %vm373, %v2639, 0
      %v2723 = vsel %vm373, %v2640, 0
      %v2726 = vsel %vm373, %v2641, 0
      %v2729 = vsel %vm373, %v2642, 0
      %v2732 = vsel %vm373, %v2643, 0
      %v2735 = vsel %vm373, %v2644, 0
      %v2738 = vsel %vm373, %v2645, 0
      %v2741 = vsel %vm373, %v2646, 0
      %v2744 = vsel %vm373, %v2647, 0
      %v2747 = vsel %vm769, %v2649, 0
      %2749 = vmatpush.msra.mxu0 0.0
      %2750 = vmatpush.msra.mxu0 0.0
      %2751 = vmatpush.msra.mxu0 0.0
      %2752 = vmatpush.msra.mxu0 0.0
      %2753 = vmatpush.msra.mxu0 0.0
      %2754 = vmatpush.msra.mxu0 0.0
      %2755 = vmatpush.msra.mxu0 0.0
      %2756 = vmatpush.msra.mxu0 0.0
      %2757 = vmatpush.msra.mxu0 0.0
      %2758 = vmatpush.msra.mxu0 0.0
      %2759 = vmatpush.msra.mxu0 0.0
      %2760 = vmatpush.msra.mxu0 0.0
      %2761 = vmatpush.msra.mxu0 0.0
      %2762 = vmatpush.msra.mxu0 0.0
      %2763 = vmatpush.msra.mxu0 0.0
      %2764 = vmatpush.msra.mxu0 %v2747
      %2765 = vmatmul.f32.gmra.mxu0 %v2651
      %v2766 = vpop.f32.mrf.mxu0
      %v2767 = vadd.f32 0.0, %v2766
      %2768 = vmatmul.f32.gmra.mxu0 %v2654
      %v2769 = vpop.f32.mrf.mxu0
      %v2770 = vadd.f32 0.0, %v2769
      %2771 = vmatmul.f32.gmra.mxu0 %v2657
      %v2772 = vpop.f32.mrf.mxu0
      %v2773 = vadd.f32 0.0, %v2772
      %2774 = vmatmul.f32.gmra.mxu0 %v2660
      %v2775 = vpop.f32.mrf.mxu0
      %v2776 = vadd.f32 0.0, %v2775
      %2777 = vmatmul.f32.gmra.mxu0 %v2663
      %v2778 = vpop.f32.mrf.mxu0
      %v2779 = vadd.f32 0.0, %v2778
      %2780 = vmatmul.f32.gmra.mxu0 %v2666
      %v2781 = vpop.f32.mrf.mxu0
      %v2782 = vadd.f32 0.0, %v2781
      %2783 = vmatmul.f32.gmra.mxu0 %v2669
      %v2784 = vpop.f32.mrf.mxu0
      %v2785 = vadd.f32 0.0, %v2784
      %2786 = vmatmul.f32.gmra.mxu0 %v2672
      %v2787 = vpop.f32.mrf.mxu0
      %v2788 = vadd.f32 0.0, %v2787
      %2789 = vmatmul.f32.gmra.mxu0 %v2675
      %v2790 = vpop.f32.mrf.mxu0
      %v2791 = vadd.f32 0.0, %v2790
      %2792 = vmatmul.f32.gmra.mxu0 %v2678
      %v2793 = vpop.f32.mrf.mxu0
      %v2794 = vadd.f32 0.0, %v2793
      %2795 = vmatmul.f32.gmra.mxu0 %v2681
      %v2796 = vpop.f32.mrf.mxu0
      %v2797 = vadd.f32 0.0, %v2796
      %2798 = vmatmul.f32.gmra.mxu0 %v2684
      %v2799 = vpop.f32.mrf.mxu0
      %v2800 = vadd.f32 0.0, %v2799
      %2801 = vmatmul.f32.gmra.mxu0 %v2687
      %v2802 = vpop.f32.mrf.mxu0
      %v2803 = vadd.f32 0.0, %v2802
      %2804 = vmatmul.f32.gmra.mxu0 %v2690
      %v2805 = vpop.f32.mrf.mxu0
      %v2806 = vadd.f32 0.0, %v2805
      %2807 = vmatmul.f32.gmra.mxu0 %v2693
      %v2808 = vpop.f32.mrf.mxu0
      %v2809 = vadd.f32 0.0, %v2808
      %2810 = vmatmul.f32.gmra.mxu0 %v2696
      %v2811 = vpop.f32.mrf.mxu0
      %v2812 = vadd.f32 0.0, %v2811
      %2813 = vmatmul.f32.gmra.mxu0 %v2699
      %v2814 = vpop.f32.mrf.mxu0
      %v2815 = vadd.f32 0.0, %v2814
      %2816 = vmatmul.f32.gmra.mxu0 %v2702
      %v2817 = vpop.f32.mrf.mxu0
      %v2818 = vadd.f32 0.0, %v2817
      %2819 = vmatmul.f32.gmra.mxu0 %v2705
      %v2820 = vpop.f32.mrf.mxu0
      %v2821 = vadd.f32 0.0, %v2820
      %2822 = vmatmul.f32.gmra.mxu0 %v2708
      %v2823 = vpop.f32.mrf.mxu0
      %v2824 = vadd.f32 0.0, %v2823
      %2825 = vmatmul.f32.gmra.mxu0 %v2711
      %v2826 = vpop.f32.mrf.mxu0
      %v2827 = vadd.f32 0.0, %v2826
      %2828 = vmatmul.f32.gmra.mxu0 %v2714
      %v2829 = vpop.f32.mrf.mxu0
      %v2830 = vadd.f32 0.0, %v2829
      %2831 = vmatmul.f32.gmra.mxu0 %v2717
      %v2832 = vpop.f32.mrf.mxu0
      %v2833 = vadd.f32 0.0, %v2832
      %2834 = vmatmul.f32.gmra.mxu0 %v2720
      %v2835 = vpop.f32.mrf.mxu0
      %v2836 = vadd.f32 0.0, %v2835
      %2837 = vmatmul.f32.gmra.mxu0 %v2723
      %v2838 = vpop.f32.mrf.mxu0
      %v2839 = vadd.f32 0.0, %v2838
      %2840 = vmatmul.f32.gmra.mxu0 %v2726
      %v2841 = vpop.f32.mrf.mxu0
      %v2842 = vadd.f32 0.0, %v2841
      %2843 = vmatmul.f32.gmra.mxu0 %v2729
      %v2844 = vpop.f32.mrf.mxu0
      %v2845 = vadd.f32 0.0, %v2844
      %2846 = vmatmul.f32.gmra.mxu0 %v2732
      %v2847 = vpop.f32.mrf.mxu0
      %v2848 = vadd.f32 0.0, %v2847
      %2849 = vmatmul.f32.gmra.mxu0 %v2735
      %v2850 = vpop.f32.mrf.mxu0
      %v2851 = vadd.f32 0.0, %v2850
      %2852 = vmatmul.f32.gmra.mxu0 %v2738
      %v2853 = vpop.f32.mrf.mxu0
      %v2854 = vadd.f32 0.0, %v2853
      %2855 = vmatmul.f32.gmra.mxu0 %v2741
      %v2856 = vpop.f32.mrf.mxu0
      %v2857 = vadd.f32 0.0, %v2856
      %2858 = vmatmul.f32.gmra.mxu0 %v2744
      %v2859 = vpop.f32.mrf.mxu0
      %v2860 = vadd.f32 0.0, %v2859
      %2861 = vdwg.mxu0
      %v2862 = vadd.f32 %v2584, %v2767
      %v2863 = vadd.f32 %v2585, %v2770
      %v2864 = vadd.f32 %v2586, %v2773
      %v2865 = vadd.f32 %v2587, %v2776
      %v2866 = vadd.f32 %v2588, %v2779
      %v2867 = vadd.f32 %v2589, %v2782
      %v2868 = vadd.f32 %v2590, %v2785
      %v2869 = vadd.f32 %v2591, %v2788
      %v2870 = vadd.f32 %v2592, %v2791
      %v2871 = vadd.f32 %v2593, %v2794
      %v2872 = vadd.f32 %v2594, %v2797
      %v2873 = vadd.f32 %v2595, %v2800
      %v2874 = vadd.f32 %v2596, %v2803
      %v2875 = vadd.f32 %v2597, %v2806
      %v2876 = vadd.f32 %v2598, %v2809
      %v2877 = vadd.f32 %v2599, %v2812
      %v2878 = vadd.f32 %v2600, %v2815
      %v2879 = vadd.f32 %v2601, %v2818
      %v2880 = vadd.f32 %v2602, %v2821
      %v2881 = vadd.f32 %v2603, %v2824
      %v2882 = vadd.f32 %v2604, %v2827
      %v2883 = vadd.f32 %v2605, %v2830
      %v2884 = vadd.f32 %v2606, %v2833
      %v2885 = vadd.f32 %v2607, %v2836
      %v2886 = vadd.f32 %v2608, %v2839
      %v2887 = vadd.f32 %v2609, %v2842
      %v2888 = vadd.f32 %v2610, %v2845
      %v2889 = vadd.f32 %v2611, %v2848
      %v2890 = vadd.f32 %v2612, %v2851
      %v2891 = vadd.f32 %v2613, %v2854
      %v2892 = vadd.f32 %v2614, %v2857
      %v2893 = vadd.f32 %v2615, %v2860
      %v2894 = vld [vmem:[#allocation2 + $0x22] sm:$0xff]
      %v2895 = vld [vmem:[#allocation2 + $0x2a] sm:$0xff]
      %v2896 = vld [vmem:[#allocation2 + $0x32] sm:$0xff]
      %v2897 = vld [vmem:[#allocation2 + $0x3a] sm:$0xff]
      %v2898 = vld [vmem:[#allocation2 + $0x42] sm:$0xff]
      %v2899 = vld [vmem:[#allocation2 + $0x4a] sm:$0xff]
      %v2900 = vld [vmem:[#allocation2 + $0x52] sm:$0xff]
      %v2901 = vld [vmem:[#allocation2 + $0x5a] sm:$0xff]
      %v2902 = vld [vmem:[#allocation2 + $0x62] sm:$0xff]
      %v2903 = vld [vmem:[#allocation2 + $0x6a] sm:$0xff]
      %v2904 = vld [vmem:[#allocation2 + $0x72] sm:$0xff]
      %v2905 = vld [vmem:[#allocation2 + $0x7a] sm:$0xff]
      %v2906 = vld [vmem:[#allocation2 + $0x82] sm:$0xff]
      %v2907 = vld [vmem:[#allocation2 + $0x8a] sm:$0xff]
      %v2908 = vld [vmem:[#allocation2 + $0x92] sm:$0xff]
      %v2909 = vld [vmem:[#allocation2 + $0x9a] sm:$0xff]
      %v2910 = vld [vmem:[#allocation2 + $0xa2] sm:$0xff]
      %v2911 = vld [vmem:[#allocation2 + $0xaa] sm:$0xff]
      %v2912 = vld [vmem:[#allocation2 + $0xb2] sm:$0xff]
      %v2913 = vld [vmem:[#allocation2 + $0xba] sm:$0xff]
      %v2914 = vld [vmem:[#allocation2 + $0xc2] sm:$0xff]
      %v2915 = vld [vmem:[#allocation2 + $0xca] sm:$0xff]
      %v2916 = vld [vmem:[#allocation2 + $0xd2] sm:$0xff]
      %v2917 = vld [vmem:[#allocation2 + $0xda] sm:$0xff]
      %v2918 = vld [vmem:[#allocation2 + $0xe2] sm:$0xff]
      %v2919 = vld [vmem:[#allocation2 + $0xea] sm:$0xff]
      %v2920 = vld [vmem:[#allocation2 + $0xf2] sm:$0xff]
      %v2921 = vld [vmem:[#allocation2 + $0xfa] sm:$0xff]
      %v2922 = vld [vmem:[#allocation2 + $0x102] sm:$0xff]
      %v2923 = vld [vmem:[#allocation2 + $0x10a] sm:$0xff]
      %v2924 = vld [vmem:[#allocation2 + $0x112] sm:$0xff]
      %v2925 = vld [vmem:[#allocation2 + $0x11a] sm:$0xff]
      %v2926 = vsel %vm542, %v2894, 0.0
      %v2927 = vsel %vm543, %v2895, 0.0
      %v2928 = vsel %vm544, %v2896, 0.0
      %v2929 = vsel %vm545, %v2897, 0.0
      %v2930 = vsel %vm546, %v2898, 0.0
      %v2931 = vsel %vm547, %v2899, 0.0
      %v2932 = vsel %vm548, %v2900, 0.0
      %v2933 = vsel %vm549, %v2901, 0.0
      %v2934 = vsel %vm550, %v2902, 0.0
      %v2935 = vsel %vm551, %v2903, 0.0
      %v2936 = vsel %vm552, %v2904, 0.0
      %v2937 = vsel %vm553, %v2905, 0.0
      %v2938 = vsel %vm554, %v2906, 0.0
      %v2939 = vsel %vm555, %v2907, 0.0
      %v2940 = vsel %vm556, %v2908, 0.0
      %v2941 = vsel %vm557, %v2909, 0.0
      %v2942 = vsel %vm558, %v2910, 0.0
      %v2943 = vsel %vm559, %v2911, 0.0
      %v2944 = vsel %vm560, %v2912, 0.0
      %v2945 = vsel %vm561, %v2913, 0.0
      %v2946 = vsel %vm562, %v2914, 0.0
      %v2947 = vsel %vm563, %v2915, 0.0
      %v2948 = vsel %vm564, %v2916, 0.0
      %v2949 = vsel %vm565, %v2917, 0.0
      %v2950 = vsel %vm566, %v2918, 0.0
      %v2951 = vsel %vm567, %v2919, 0.0
      %v2952 = vsel %vm568, %v2920, 0.0
      %v2953 = vsel %vm569, %v2921, 0.0
      %v2954 = vsel %vm570, %v2922, 0.0
      %v2955 = vsel %vm571, %v2923, 0.0
      %v2956 = vsel %vm572, %v2924, 0.0
      %v2957 = vsel %vm573, %v2925, 0.0
      %s2958 = scalar_lea.vmem %s1, 32
      %v2959 = vld [vmem:[%s2958] sm:$0x7]
      %v2961 = vsel %vm373, %v2926, 0
      %v2964 = vsel %vm373, %v2927, 0
      %v2967 = vsel %vm373, %v2928, 0
      %v2970 = vsel %vm373, %v2929, 0
      %v2973 = vsel %vm373, %v2930, 0
      %v2976 = vsel %vm373, %v2931, 0
      %v2979 = vsel %vm373, %v2932, 0
      %v2982 = vsel %vm373, %v2933, 0
      %v2985 = vsel %vm373, %v2934, 0
      %v2988 = vsel %vm373, %v2935, 0
      %v2991 = vsel %vm373, %v2936, 0
      %v2994 = vsel %vm373, %v2937, 0
      %v2997 = vsel %vm373, %v2938, 0
      %v3000 = vsel %vm373, %v2939, 0
      %v3003 = vsel %vm373, %v2940, 0
      %v3006 = vsel %vm373, %v2941, 0
      %v3009 = vsel %vm373, %v2942, 0
      %v3012 = vsel %vm373, %v2943, 0
      %v3015 = vsel %vm373, %v2944, 0
      %v3018 = vsel %vm373, %v2945, 0
      %v3021 = vsel %vm373, %v2946, 0
      %v3024 = vsel %vm373, %v2947, 0
      %v3027 = vsel %vm373, %v2948, 0
      %v3030 = vsel %vm373, %v2949, 0
      %v3033 = vsel %vm373, %v2950, 0
      %v3036 = vsel %vm373, %v2951, 0
      %v3039 = vsel %vm373, %v2952, 0
      %v3042 = vsel %vm373, %v2953, 0
      %v3045 = vsel %vm373, %v2954, 0
      %v3048 = vsel %vm373, %v2955, 0
      %v3051 = vsel %vm373, %v2956, 0
      %v3054 = vsel %vm373, %v2957, 0
      %v3057 = vsel %vm769, %v2959, 0
      %3059 = vmatpush.msra.mxu0 0.0
      %3060 = vmatpush.msra.mxu0 0.0
      %3061 = vmatpush.msra.mxu0 0.0
      %3062 = vmatpush.msra.mxu0 0.0
      %3063 = vmatpush.msra.mxu0 0.0
      %3064 = vmatpush.msra.mxu0 0.0
      %3065 = vmatpush.msra.mxu0 0.0
      %3066 = vmatpush.msra.mxu0 0.0
      %3067 = vmatpush.msra.mxu0 0.0
      %3068 = vmatpush.msra.mxu0 0.0
      %3069 = vmatpush.msra.mxu0 0.0
      %3070 = vmatpush.msra.mxu0 0.0
      %3071 = vmatpush.msra.mxu0 0.0
      %3072 = vmatpush.msra.mxu0 0.0
      %3073 = vmatpush.msra.mxu0 0.0
      %3074 = vmatpush.msra.mxu0 %v3057
      %3075 = vmatmul.f32.gmra.mxu0 %v2961
      %v3076 = vpop.f32.mrf.mxu0
      %v3077 = vadd.f32 0.0, %v3076
      %3078 = vmatmul.f32.gmra.mxu0 %v2964
      %v3079 = vpop.f32.mrf.mxu0
      %v3080 = vadd.f32 0.0, %v3079
      %3081 = vmatmul.f32.gmra.mxu0 %v2967
      %v3082 = vpop.f32.mrf.mxu0
      %v3083 = vadd.f32 0.0, %v3082
      %3084 = vmatmul.f32.gmra.mxu0 %v2970
      %v3085 = vpop.f32.mrf.mxu0
      %v3086 = vadd.f32 0.0, %v3085
      %3087 = vmatmul.f32.gmra.mxu0 %v2973
      %v3088 = vpop.f32.mrf.mxu0
      %v3089 = vadd.f32 0.0, %v3088
      %3090 = vmatmul.f32.gmra.mxu0 %v2976
      %v3091 = vpop.f32.mrf.mxu0
      %v3092 = vadd.f32 0.0, %v3091
      %3093 = vmatmul.f32.gmra.mxu0 %v2979
      %v3094 = vpop.f32.mrf.mxu0
      %v3095 = vadd.f32 0.0, %v3094
      %3096 = vmatmul.f32.gmra.mxu0 %v2982
      %v3097 = vpop.f32.mrf.mxu0
      %v3098 = vadd.f32 0.0, %v3097
      %3099 = vmatmul.f32.gmra.mxu0 %v2985
      %v3100 = vpop.f32.mrf.mxu0
      %v3101 = vadd.f32 0.0, %v3100
      %3102 = vmatmul.f32.gmra.mxu0 %v2988
      %v3103 = vpop.f32.mrf.mxu0
      %v3104 = vadd.f32 0.0, %v3103
      %3105 = vmatmul.f32.gmra.mxu0 %v2991
      %v3106 = vpop.f32.mrf.mxu0
      %v3107 = vadd.f32 0.0, %v3106
      %3108 = vmatmul.f32.gmra.mxu0 %v2994
      %v3109 = vpop.f32.mrf.mxu0
      %v3110 = vadd.f32 0.0, %v3109
      %3111 = vmatmul.f32.gmra.mxu0 %v2997
      %v3112 = vpop.f32.mrf.mxu0
      %v3113 = vadd.f32 0.0, %v3112
      %3114 = vmatmul.f32.gmra.mxu0 %v3000
      %v3115 = vpop.f32.mrf.mxu0
      %v3116 = vadd.f32 0.0, %v3115
      %3117 = vmatmul.f32.gmra.mxu0 %v3003
      %v3118 = vpop.f32.mrf.mxu0
      %v3119 = vadd.f32 0.0, %v3118
      %3120 = vmatmul.f32.gmra.mxu0 %v3006
      %v3121 = vpop.f32.mrf.mxu0
      %v3122 = vadd.f32 0.0, %v3121
      %3123 = vmatmul.f32.gmra.mxu0 %v3009
      %v3124 = vpop.f32.mrf.mxu0
      %v3125 = vadd.f32 0.0, %v3124
      %3126 = vmatmul.f32.gmra.mxu0 %v3012
      %v3127 = vpop.f32.mrf.mxu0
      %v3128 = vadd.f32 0.0, %v3127
      %3129 = vmatmul.f32.gmra.mxu0 %v3015
      %v3130 = vpop.f32.mrf.mxu0
      %v3131 = vadd.f32 0.0, %v3130
      %3132 = vmatmul.f32.gmra.mxu0 %v3018
      %v3133 = vpop.f32.mrf.mxu0
      %v3134 = vadd.f32 0.0, %v3133
      %3135 = vmatmul.f32.gmra.mxu0 %v3021
      %v3136 = vpop.f32.mrf.mxu0
      %v3137 = vadd.f32 0.0, %v3136
      %3138 = vmatmul.f32.gmra.mxu0 %v3024
      %v3139 = vpop.f32.mrf.mxu0
      %v3140 = vadd.f32 0.0, %v3139
      %3141 = vmatmul.f32.gmra.mxu0 %v3027
      %v3142 = vpop.f32.mrf.mxu0
      %v3143 = vadd.f32 0.0, %v3142
      %3144 = vmatmul.f32.gmra.mxu0 %v3030
      %v3145 = vpop.f32.mrf.mxu0
      %v3146 = vadd.f32 0.0, %v3145
      %3147 = vmatmul.f32.gmra.mxu0 %v3033
      %v3148 = vpop.f32.mrf.mxu0
      %v3149 = vadd.f32 0.0, %v3148
      %3150 = vmatmul.f32.gmra.mxu0 %v3036
      %v3151 = vpop.f32.mrf.mxu0
      %v3152 = vadd.f32 0.0, %v3151
      %3153 = vmatmul.f32.gmra.mxu0 %v3039
      %v3154 = vpop.f32.mrf.mxu0
      %v3155 = vadd.f32 0.0, %v3154
      %3156 = vmatmul.f32.gmra.mxu0 %v3042
      %v3157 = vpop.f32.mrf.mxu0
      %v3158 = vadd.f32 0.0, %v3157
      %3159 = vmatmul.f32.gmra.mxu0 %v3045
      %v3160 = vpop.f32.mrf.mxu0
      %v3161 = vadd.f32 0.0, %v3160
      %3162 = vmatmul.f32.gmra.mxu0 %v3048
      %v3163 = vpop.f32.mrf.mxu0
      %v3164 = vadd.f32 0.0, %v3163
      %3165 = vmatmul.f32.gmra.mxu0 %v3051
      %v3166 = vpop.f32.mrf.mxu0
      %v3167 = vadd.f32 0.0, %v3166
      %3168 = vmatmul.f32.gmra.mxu0 %v3054
      %v3169 = vpop.f32.mrf.mxu0
      %v3170 = vadd.f32 0.0, %v3169
      %3171 = vdwg.mxu0
      %v3172 = vadd.f32 %v2862, %v3077
      %v3173 = vadd.f32 %v2863, %v3080
      %v3174 = vadd.f32 %v2864, %v3083
      %v3175 = vadd.f32 %v2865, %v3086
      %v3176 = vadd.f32 %v2866, %v3089
      %v3177 = vadd.f32 %v2867, %v3092
      %v3178 = vadd.f32 %v2868, %v3095
      %v3179 = vadd.f32 %v2869, %v3098
      %v3180 = vadd.f32 %v2870, %v3101
      %v3181 = vadd.f32 %v2871, %v3104
      %v3182 = vadd.f32 %v2872, %v3107
      %v3183 = vadd.f32 %v2873, %v3110
      %v3184 = vadd.f32 %v2874, %v3113
      %v3185 = vadd.f32 %v2875, %v3116
      %v3186 = vadd.f32 %v2876, %v3119
      %v3187 = vadd.f32 %v2877, %v3122
      %v3188 = vadd.f32 %v2878, %v3125
      %v3189 = vadd.f32 %v2879, %v3128
      %v3190 = vadd.f32 %v2880, %v3131
      %v3191 = vadd.f32 %v2881, %v3134
      %v3192 = vadd.f32 %v2882, %v3137
      %v3193 = vadd.f32 %v2883, %v3140
      %v3194 = vadd.f32 %v2884, %v3143
      %v3195 = vadd.f32 %v2885, %v3146
      %v3196 = vadd.f32 %v2886, %v3149
      %v3197 = vadd.f32 %v2887, %v3152
      %v3198 = vadd.f32 %v2888, %v3155
      %v3199 = vadd.f32 %v2889, %v3158
      %v3200 = vadd.f32 %v2890, %v3161
      %v3201 = vadd.f32 %v2891, %v3164
      %v3202 = vadd.f32 %v2892, %v3167
      %v3203 = vadd.f32 %v2893, %v3170
      %v3204 = vld [vmem:[%s2] sm:$0x1]
      %v3206 = vperm.slane %v3204, 0
      %v3208 = vadd.f32 %v3172, %v3206
      %v3209 = vadd.f32 %v3173, %v3206
      %v3210 = vadd.f32 %v3174, %v3206
      %v3211 = vadd.f32 %v3175, %v3206
      %v3212 = vadd.f32 %v3176, %v3206
      %v3213 = vadd.f32 %v3177, %v3206
      %v3214 = vadd.f32 %v3178, %v3206
      %v3215 = vadd.f32 %v3179, %v3206
      %v3216 = vadd.f32 %v3180, %v3206
      %v3217 = vadd.f32 %v3181, %v3206
      %v3218 = vadd.f32 %v3182, %v3206
      %v3219 = vadd.f32 %v3183, %v3206
      %v3220 = vadd.f32 %v3184, %v3206
      %v3221 = vadd.f32 %v3185, %v3206
      %v3222 = vadd.f32 %v3186, %v3206
      %v3223 = vadd.f32 %v3187, %v3206
      %v3224 = vadd.f32 %v3188, %v3206
      %v3225 = vadd.f32 %v3189, %v3206
      %v3226 = vadd.f32 %v3190, %v3206
      %v3227 = vadd.f32 %v3191, %v3206
      %v3228 = vadd.f32 %v3192, %v3206
      %v3229 = vadd.f32 %v3193, %v3206
      %v3230 = vadd.f32 %v3194, %v3206
      %v3231 = vadd.f32 %v3195, %v3206
      %v3232 = vadd.f32 %v3196, %v3206
      %v3233 = vadd.f32 %v3197, %v3206
      %v3234 = vadd.f32 %v3198, %v3206
      %v3235 = vadd.f32 %v3199, %v3206
      %v3236 = vadd.f32 %v3200, %v3206
      %v3237 = vadd.f32 %v3201, %v3206
      %v3238 = vadd.f32 %v3202, %v3206
      %v3239 = vadd.f32 %v3203, %v3206
      %v3240 = vmax.f32 %v3208, 0.0
      %v3241 = vmax.f32 %v3209, 0.0
      %v3242 = vmax.f32 %v3210, 0.0
      %v3243 = vmax.f32 %v3211, 0.0
      %v3244 = vmax.f32 %v3212, 0.0
      %v3245 = vmax.f32 %v3213, 0.0
      %v3246 = vmax.f32 %v3214, 0.0
      %v3247 = vmax.f32 %v3215, 0.0
      %v3248 = vmax.f32 %v3216, 0.0
      %v3249 = vmax.f32 %v3217, 0.0
      %v3250 = vmax.f32 %v3218, 0.0
      %v3251 = vmax.f32 %v3219, 0.0
      %v3252 = vmax.f32 %v3220, 0.0
      %v3253 = vmax.f32 %v3221, 0.0
      %v3254 = vmax.f32 %v3222, 0.0
      %v3255 = vmax.f32 %v3223, 0.0
      %v3256 = vmax.f32 %v3224, 0.0
      %v3257 = vmax.f32 %v3225, 0.0
      %v3258 = vmax.f32 %v3226, 0.0
      %v3259 = vmax.f32 %v3227, 0.0
      %v3260 = vmax.f32 %v3228, 0.0
      %v3261 = vmax.f32 %v3229, 0.0
      %v3262 = vmax.f32 %v3230, 0.0
      %v3263 = vmax.f32 %v3231, 0.0
      %v3264 = vmax.f32 %v3232, 0.0
      %v3265 = vmax.f32 %v3233, 0.0
      %v3266 = vmax.f32 %v3234, 0.0
      %v3267 = vmax.f32 %v3235, 0.0
      %v3268 = vmax.f32 %v3236, 0.0
      %v3269 = vmax.f32 %v3237, 0.0
      %v3270 = vmax.f32 %v3238, 0.0
      %v3271 = vmax.f32 %v3239, 0.0
      %vm3272 = vcmask 130048
      %3273 = vst.msk [vmem:[#allocation3] sm:$0xff] %vm3272, %v3240
      %3274 = vst.msk [vmem:[#allocation3 + $0x8] sm:$0xff] %vm3272, %v3241
      %3275 = vst.msk [vmem:[#allocation3 + $0x10] sm:$0xff] %vm3272, %v3242
      %3276 = vst.msk [vmem:[#allocation3 + $0x18] sm:$0xff] %vm3272, %v3243
      %3277 = vst.msk [vmem:[#allocation3 + $0x20] sm:$0xff] %vm3272, %v3244
      %3278 = vst.msk [vmem:[#allocation3 + $0x28] sm:$0xff] %vm3272, %v3245
      %3279 = vst.msk [vmem:[#allocation3 + $0x30] sm:$0xff] %vm3272, %v3246
      %3280 = vst.msk [vmem:[#allocation3 + $0x38] sm:$0xff] %vm3272, %v3247
      %3281 = vst.msk [vmem:[#allocation3 + $0x40] sm:$0xff] %vm3272, %v3248
      %3282 = vst.msk [vmem:[#allocation3 + $0x48] sm:$0xff] %vm3272, %v3249
      %3283 = vst.msk [vmem:[#allocation3 + $0x50] sm:$0xff] %vm3272, %v3250
      %3284 = vst.msk [vmem:[#allocation3 + $0x58] sm:$0xff] %vm3272, %v3251
      %3285 = vst.msk [vmem:[#allocation3 + $0x60] sm:$0xff] %vm3272, %v3252
      %3286 = vst.msk [vmem:[#allocation3 + $0x68] sm:$0xff] %vm3272, %v3253
      %3287 = vst.msk [vmem:[#allocation3 + $0x70] sm:$0xff] %vm3272, %v3254
      %3288 = vst.msk [vmem:[#allocation3 + $0x78] sm:$0xff] %vm3272, %v3255
      %3289 = vst.msk [vmem:[#allocation3 + $0x80] sm:$0xff] %vm3272, %v3256
      %3290 = vst.msk [vmem:[#allocation3 + $0x88] sm:$0xff] %vm3272, %v3257
      %3291 = vst.msk [vmem:[#allocation3 + $0x90] sm:$0xff] %vm3272, %v3258
      %3292 = vst.msk [vmem:[#allocation3 + $0x98] sm:$0xff] %vm3272, %v3259
      %3293 = vst.msk [vmem:[#allocation3 + $0xa0] sm:$0xff] %vm3272, %v3260
      %3294 = vst.msk [vmem:[#allocation3 + $0xa8] sm:$0xff] %vm3272, %v3261
      %3295 = vst.msk [vmem:[#allocation3 + $0xb0] sm:$0xff] %vm3272, %v3262
      %3296 = vst.msk [vmem:[#allocation3 + $0xb8] sm:$0xff] %vm3272, %v3263
      %3297 = vst.msk [vmem:[#allocation3 + $0xc0] sm:$0xff] %vm3272, %v3264
      %3298 = vst.msk [vmem:[#allocation3 + $0xc8] sm:$0xff] %vm3272, %v3265
      %3299 = vst.msk [vmem:[#allocation3 + $0xd0] sm:$0xff] %vm3272, %v3266
      %3300 = vst.msk [vmem:[#allocation3 + $0xd8] sm:$0xff] %vm3272, %v3267
      %3301 = vst.msk [vmem:[#allocation3 + $0xe0] sm:$0xff] %vm3272, %v3268
      %3302 = vst.msk [vmem:[#allocation3 + $0xe8] sm:$0xff] %vm3272, %v3269
      %3303 = vst.msk [vmem:[#allocation3 + $0xf0] sm:$0xff] %vm3272, %v3270
      %3304 = vst.msk [vmem:[#allocation3 + $0xf8] sm:$0xff] %vm3272, %v3271
      %3305 = vst.msk [vmem:[#allocation4] sm:$0xff] %vm3272, 0.0
      %vm3306 = vcmask 122880
      %3307 = vst.msk [vmem:[#allocation4 + $0x8] sm:$0x1] %vm3306, 0.0
      %3308 = vst.msk [vmem:[#allocation4 + $0x49] sm:$0xff] %vm3272, 0.0
      %3309 = vst.msk [vmem:[#allocation4 + $0x51] sm:$0x1] %vm3306, 0.0
      %v3310 = vld [vmem:[#allocation3] ss:$2 sm:$0xff]
      %s3311 = scalar_lea.vmem [#allocation3], 1
      %v3312 = vld [vmem:[%s3311] ss:$2 sm:$0xff]
      %s3313 = scalar_lea.vmem [#allocation3], 16
      %v3314 = vld [vmem:[%s3313] ss:$2 sm:$0xff]
      %s3315 = scalar_lea.vmem [#allocation3], 17
      %v3316 = vld [vmem:[%s3315] ss:$2 sm:$0xff]
      %v3317 = vmax.f32 %v3310, %v3312
      %v3318 = vmax.f32 %v3314, %v3316
      %v3319 = vmax.f32 %v3317, %v3318
      %3320 = vst.msk [vmem:[#allocation4 + $0x9] sm:$0xff] %vm3272, %v3319
      %s3321 = scalar_lea.vmem [#allocation3], 32
      %v3322 = vld [vmem:[%s3321] ss:$2 sm:$0xff]
      %s3323 = scalar_lea.vmem [#allocation3], 33
      %v3324 = vld [vmem:[%s3323] ss:$2 sm:$0xff]
      %s3325 = scalar_lea.vmem [#allocation3], 48
      %v3326 = vld [vmem:[%s3325] ss:$2 sm:$0xff]
      %s3327 = scalar_lea.vmem [#allocation3], 49
      %v3328 = vld [vmem:[%s3327] ss:$2 sm:$0xff]
      %v3329 = vmax.f32 %v3322, %v3324
      %v3330 = vmax.f32 %v3326, %v3328
      %v3331 = vmax.f32 %v3329, %v3330
      %3332 = vst.msk [vmem:[#allocation4 + $0x11] sm:$0xff] %vm3272, %v3331
      %s3333 = scalar_lea.vmem [#allocation3], 64
      %v3334 = vld [vmem:[%s3333] ss:$2 sm:$0xff]
      %s3335 = scalar_lea.vmem [#allocation3], 65
      %v3336 = vld [vmem:[%s3335] ss:$2 sm:$0xff]
      %s3337 = scalar_lea.vmem [#allocation3], 80
      %v3338 = vld [vmem:[%s3337] ss:$2 sm:$0xff]
      %s3339 = scalar_lea.vmem [#allocation3], 81
      %v3340 = vld [vmem:[%s3339] ss:$2 sm:$0xff]
      %v3341 = vmax.f32 %v3334, %v3336
      %v3342 = vmax.f32 %v3338, %v3340
      %v3343 = vmax.f32 %v3341, %v3342
      %3344 = vst.msk [vmem:[#allocation4 + $0x19] sm:$0xff] %vm3272, %v3343
      %s3345 = scalar_lea.vmem [#allocation3], 96
      %v3346 = vld [vmem:[%s3345] ss:$2 sm:$0xff]
      %s3347 = scalar_lea.vmem [#allocation3], 97
      %v3348 = vld [vmem:[%s3347] ss:$2 sm:$0xff]
      %s3349 = scalar_lea.vmem [#allocation3], 112
      %v3350 = vld [vmem:[%s3349] ss:$2 sm:$0xff]
      %s3351 = scalar_lea.vmem [#allocation3], 113
      %v3352 = vld [vmem:[%s3351] ss:$2 sm:$0xff]
      %v3353 = vmax.f32 %v3346, %v3348
      %v3354 = vmax.f32 %v3350, %v3352
      %v3355 = vmax.f32 %v3353, %v3354
      %3356 = vst.msk [vmem:[#allocation4 + $0x21] sm:$0xff] %vm3272, %v3355
      %s3357 = scalar_lea.vmem [#allocation3], 128
      %v3358 = vld [vmem:[%s3357] ss:$2 sm:$0xff]
      %s3359 = scalar_lea.vmem [#allocation3], 129
      %v3360 = vld [vmem:[%s3359] ss:$2 sm:$0xff]
      %s3361 = scalar_lea.vmem [#allocation3], 144
      %v3362 = vld [vmem:[%s3361] ss:$2 sm:$0xff]
      %s3363 = scalar_lea.vmem [#allocation3], 145
      %v3364 = vld [vmem:[%s3363] ss:$2 sm:$0xff]
      %v3365 = vmax.f32 %v3358, %v3360
      %v3366 = vmax.f32 %v3362, %v3364
      %v3367 = vmax.f32 %v3365, %v3366
      %3368 = vst.msk [vmem:[#allocation4 + $0x29] sm:$0xff] %vm3272, %v3367
      %s3369 = scalar_lea.vmem [#allocation3], 160
      %v3370 = vld [vmem:[%s3369] ss:$2 sm:$0xff]
      %s3371 = scalar_lea.vmem [#allocation3], 161
      %v3372 = vld [vmem:[%s3371] ss:$2 sm:$0xff]
      %s3373 = scalar_lea.vmem [#allocation3], 176
      %v3374 = vld [vmem:[%s3373] ss:$2 sm:$0xff]
      %s3375 = scalar_lea.vmem [#allocation3], 177
      %v3376 = vld [vmem:[%s3375] ss:$2 sm:$0xff]
      %v3377 = vmax.f32 %v3370, %v3372
      %v3378 = vmax.f32 %v3374, %v3376
      %v3379 = vmax.f32 %v3377, %v3378
      %3380 = vst.msk [vmem:[#allocation4 + $0x31] sm:$0xff] %vm3272, %v3379
      %s3381 = scalar_lea.vmem [#allocation3], 192
      %v3382 = vld [vmem:[%s3381] ss:$2 sm:$0xff]
      %s3383 = scalar_lea.vmem [#allocation3], 193
      %v3384 = vld [vmem:[%s3383] ss:$2 sm:$0xff]
      %s3385 = scalar_lea.vmem [#allocation3], 208
      %v3386 = vld [vmem:[%s3385] ss:$2 sm:$0xff]
      %s3387 = scalar_lea.vmem [#allocation3], 209
      %v3388 = vld [vmem:[%s3387] ss:$2 sm:$0xff]
      %v3389 = vmax.f32 %v3382, %v3384
      %v3390 = vmax.f32 %v3386, %v3388
      %v3391 = vmax.f32 %v3389, %v3390
      %3392 = vst.msk [vmem:[#allocation4 + $0x39] sm:$0xff] %vm3272, %v3391
      %s3393 = scalar_lea.vmem [#allocation3], 224
      %v3394 = vld [vmem:[%s3393] ss:$2 sm:$0xff]
      %s3395 = scalar_lea.vmem [#allocation3], 225
      %v3396 = vld [vmem:[%s3395] ss:$2 sm:$0xff]
      %s3397 = scalar_lea.vmem [#allocation3], 240
      %v3398 = vld [vmem:[%s3397] ss:$2 sm:$0xff]
      %s3399 = scalar_lea.vmem [#allocation3], 241
      %v3400 = vld [vmem:[%s3399] ss:$2 sm:$0xff]
      %v3401 = vmax.f32 %v3394, %v3396
      %v3402 = vmax.f32 %v3398, %v3400
      %v3403 = vmax.f32 %v3401, %v3402
      %3404 = vst.msk [vmem:[#allocation4 + $0x41] sm:$0xff] %vm3272, %v3403
      %v3405 = vand.u32 %v446, 7
      %v3406 = vand.u32 %v447, 7
      %v3407 = vand.u32 %v448, 7
      %v3408 = vand.u32 %v449, 7
      %v3409 = vand.u32 %v450, 7
      %v3410 = vand.u32 %v451, 7
      %v3411 = vand.u32 %v452, 7
      %v3412 = vand.u32 %v453, 7
      %vm3413 = vcmp.ne.s32.totalorder %v3405, 0
      %vm3414 = vcmp.ne.s32.totalorder %v3406, 0
      %vm3415 = vcmp.ne.s32.totalorder %v3407, 0
      %vm3416 = vcmp.ne.s32.totalorder %v3408, 0
      %vm3417 = vcmp.ne.s32.totalorder %v3409, 0
      %vm3418 = vcmp.ne.s32.totalorder %v3410, 0
      %vm3419 = vcmp.ne.s32.totalorder %v3411, 0
      %vm3420 = vcmp.ne.s32.totalorder %v3412, 0
      %vm3421 = vcmp.ne.s32.totalorder %v3405, 7
      %vm3422 = vcmp.ne.s32.totalorder %v3406, 7
      %vm3423 = vcmp.ne.s32.totalorder %v3407, 7
      %vm3424 = vcmp.ne.s32.totalorder %v3408, 7
      %vm3425 = vcmp.ne.s32.totalorder %v3409, 7
      %vm3426 = vcmp.ne.s32.totalorder %v3410, 7
      %vm3427 = vcmp.ne.s32.totalorder %v3411, 7
      %vm3428 = vcmp.ne.s32.totalorder %v3412, 7
      %v3429 = vld [vmem:[#allocation4] sm:$0xff]
      %v3430 = vld [vmem:[#allocation4 + $0x8] sm:$0xff]
      %v3431 = vld [vmem:[#allocation4 + $0x10] sm:$0xff]
      %v3432 = vld [vmem:[#allocation4 + $0x18] sm:$0xff]
      %v3433 = vld [vmem:[#allocation4 + $0x20] sm:$0xff]
      %v3434 = vld [vmem:[#allocation4 + $0x28] sm:$0xff]
      %v3435 = vld [vmem:[#allocation4 + $0x30] sm:$0xff]
      %v3436 = vld [vmem:[#allocation4 + $0x38] sm:$0xff]
      %v3437 = vsel %vm3413, %v3429, 0.0
      %v3438 = vsel %vm3414, %v3430, 0.0
      %v3439 = vsel %vm3415, %v3431, 0.0
      %v3440 = vsel %vm3416, %v3432, 0.0
      %v3441 = vsel %vm3417, %v3433, 0.0
      %v3442 = vsel %vm3418, %v3434, 0.0
      %v3443 = vsel %vm3419, %v3435, 0.0
      %v3444 = vsel %vm3420, %v3436, 0.0
      %v3445 = vld [vmem:[%s3] sm:$0xff]
      %v3446 = vld [vmem:[%s3 + $0x8] sm:$0xff]
      %v3447 = vld [vmem:[#allocation4 + $0x1] sm:$0xff]
      %v3448 = vld [vmem:[#allocation4 + $0x9] sm:$0xff]
      %v3449 = vld [vmem:[#allocation4 + $0x11] sm:$0xff]
      %v3450 = vld [vmem:[#allocation4 + $0x19] sm:$0xff]
      %v3451 = vld [vmem:[#allocation4 + $0x21] sm:$0xff]
      %v3452 = vld [vmem:[#allocation4 + $0x29] sm:$0xff]
      %v3453 = vld [vmem:[#allocation4 + $0x31] sm:$0xff]
      %v3454 = vld [vmem:[#allocation4 + $0x39] sm:$0xff]
      %s3455 = scalar_lea.vmem %s3, 16
      %v3456 = vld [vmem:[%s3455] sm:$0xff]
      %v3457 = vld [vmem:[%s3455 + $0x8] sm:$0xff]
      %v3459 = vsel %vm3272, %v3447, 0
      %v3462 = vsel %vm3272, %v3448, 0
      %v3465 = vsel %vm3272, %v3449, 0
      %v3468 = vsel %vm3272, %v3450, 0
      %v3471 = vsel %vm3272, %v3451, 0
      %v3474 = vsel %vm3272, %v3452, 0
      %v3477 = vsel %vm3272, %v3453, 0
      %v3480 = vsel %vm3272, %v3454, 0
      %3482 = vmatpush.msra.mxu0 0.0
      %3483 = vmatpush.msra.mxu0 0.0
      %3484 = vmatpush.msra.mxu0 0.0
      %3485 = vmatpush.msra.mxu0 0.0
      %3486 = vmatpush.msra.mxu0 0.0
      %3487 = vmatpush.msra.mxu0 0.0
      %3488 = vmatpush.msra.mxu0 0.0
      %3489 = vmatpush.msra.mxu0 0.0
      %3490 = vmatpush.msra.mxu0 0.0
      %3491 = vmatpush.msra.mxu0 0.0
      %3492 = vmatpush.msra.mxu0 0.0
      %3493 = vmatpush.msra.mxu0 0.0
      %3494 = vmatpush.msra.mxu0 0.0
      %3495 = vmatpush.msra.mxu0 0.0
      %3496 = vmatpush.msra.mxu0 %v3457
      %3497 = vmatpush.msra.mxu0 %v3456
      %3498 = vmatmul.f32.gmra.mxu0 %v3459
      %v3499 = vpop.f32.mrf.mxu0
      %v3500 = vadd.f32 0.0, %v3499
      %3501 = vmatmul.f32.gmra.mxu0 %v3462
      %v3502 = vpop.f32.mrf.mxu0
      %v3503 = vadd.f32 0.0, %v3502
      %3504 = vmatmul.f32.gmra.mxu0 %v3465
      %v3505 = vpop.f32.mrf.mxu0
      %v3506 = vadd.f32 0.0, %v3505
      %3507 = vmatmul.f32.gmra.mxu0 %v3468
      %v3508 = vpop.f32.mrf.mxu0
      %v3509 = vadd.f32 0.0, %v3508
      %3510 = vmatmul.f32.gmra.mxu0 %v3471
      %v3511 = vpop.f32.mrf.mxu0
      %v3512 = vadd.f32 0.0, %v3511
      %3513 = vmatmul.f32.gmra.mxu0 %v3474
      %v3514 = vpop.f32.mrf.mxu0
      %v3515 = vadd.f32 0.0, %v3514
      %3516 = vmatmul.f32.gmra.mxu0 %v3477
      %v3517 = vpop.f32.mrf.mxu0
      %v3518 = vadd.f32 0.0, %v3517
      %3519 = vmatmul.f32.gmra.mxu0 %v3480
      %v3520 = vpop.f32.mrf.mxu0
      %v3521 = vadd.f32 0.0, %v3520
      %3522 = vdwg.mxu0
      %v3524 = vsel %vm3272, %v3437, 0
      %v3527 = vsel %vm3272, %v3438, 0
      %v3530 = vsel %vm3272, %v3439, 0
      %v3533 = vsel %vm3272, %v3440, 0
      %v3536 = vsel %vm3272, %v3441, 0
      %v3539 = vsel %vm3272, %v3442, 0
      %v3542 = vsel %vm3272, %v3443, 0
      %v3545 = vsel %vm3272, %v3444, 0
      %3547 = vmatpush.msra.mxu0 0.0
      %3548 = vmatpush.msra.mxu0 0.0
      %3549 = vmatpush.msra.mxu0 0.0
      %3550 = vmatpush.msra.mxu0 0.0
      %3551 = vmatpush.msra.mxu0 0.0
      %3552 = vmatpush.msra.mxu0 0.0
      %3553 = vmatpush.msra.mxu0 0.0
      %3554 = vmatpush.msra.mxu0 0.0
      %3555 = vmatpush.msra.mxu0 0.0
      %3556 = vmatpush.msra.mxu0 0.0
      %3557 = vmatpush.msra.mxu0 0.0
      %3558 = vmatpush.msra.mxu0 0.0
      %3559 = vmatpush.msra.mxu0 0.0
      %3560 = vmatpush.msra.mxu0 0.0
      %3561 = vmatpush.msra.mxu0 %v3446
      %3562 = vmatpush.msra.mxu0 %v3445
      %3563 = vmatmul.f32.gmra.mxu0 %v3524
      %v3564 = vpop.f32.mrf.mxu0
      %v3565 = vadd.f32 %v3500, %v3564
      %3566 = vmatmul.f32.gmra.mxu0 %v3527
      %v3567 = vpop.f32.mrf.mxu0
      %v3568 = vadd.f32 %v3503, %v3567
      %3569 = vmatmul.f32.gmra.mxu0 %v3530
      %v3570 = vpop.f32.mrf.mxu0
      %v3571 = vadd.f32 %v3506, %v3570
      %3572 = vmatmul.f32.gmra.mxu0 %v3533
      %v3573 = vpop.f32.mrf.mxu0
      %v3574 = vadd.f32 %v3509, %v3573
      %3575 = vmatmul.f32.gmra.mxu0 %v3536
      %v3576 = vpop.f32.mrf.mxu0
      %v3577 = vadd.f32 %v3512, %v3576
      %3578 = vmatmul.f32.gmra.mxu0 %v3539
      %v3579 = vpop.f32.mrf.mxu0
      %v3580 = vadd.f32 %v3515, %v3579
      %3581 = vmatmul.f32.gmra.mxu0 %v3542
      %v3582 = vpop.f32.mrf.mxu0
      %v3583 = vadd.f32 %v3518, %v3582
      %3584 = vmatmul.f32.gmra.mxu0 %v3545
      %v3585 = vpop.f32.mrf.mxu0
      %v3586 = vadd.f32 %v3521, %v3585
      %3587 = vdwg.mxu0
      %v3588 = vld [vmem:[#allocation4 + $0x2] sm:$0xff]
      %v3589 = vld [vmem:[#allocation4 + $0xa] sm:$0xff]
      %v3590 = vld [vmem:[#allocation4 + $0x12] sm:$0xff]
      %v3591 = vld [vmem:[#allocation4 + $0x1a] sm:$0xff]
      %v3592 = vld [vmem:[#allocation4 + $0x22] sm:$0xff]
      %v3593 = vld [vmem:[#allocation4 + $0x2a] sm:$0xff]
      %v3594 = vld [vmem:[#allocation4 + $0x32] sm:$0xff]
      %v3595 = vld [vmem:[#allocation4 + $0x3a] sm:$0xff]
      %v3596 = vsel %vm3421, %v3588, 0.0
      %v3597 = vsel %vm3422, %v3589, 0.0
      %v3598 = vsel %vm3423, %v3590, 0.0
      %v3599 = vsel %vm3424, %v3591, 0.0
      %v3600 = vsel %vm3425, %v3592, 0.0
      %v3601 = vsel %vm3426, %v3593, 0.0
      %v3602 = vsel %vm3427, %v3594, 0.0
      %v3603 = vsel %vm3428, %v3595, 0.0
      %s3604 = scalar_lea.vmem %s3, 32
      %v3605 = vld [vmem:[%s3604] sm:$0xff]
      %v3606 = vld [vmem:[%s3604 + $0x8] sm:$0xff]
      %v3608 = vsel %vm3272, %v3596, 0
      %v3611 = vsel %vm3272, %v3597, 0
      %v3614 = vsel %vm3272, %v3598, 0
      %v3617 = vsel %vm3272, %v3599, 0
      %v3620 = vsel %vm3272, %v3600, 0
      %v3623 = vsel %vm3272, %v3601, 0
      %v3626 = vsel %vm3272, %v3602, 0
      %v3629 = vsel %vm3272, %v3603, 0
      %3631 = vmatpush.msra.mxu0 0.0
      %3632 = vmatpush.msra.mxu0 0.0
      %3633 = vmatpush.msra.mxu0 0.0
      %3634 = vmatpush.msra.mxu0 0.0
      %3635 = vmatpush.msra.mxu0 0.0
      %3636 = vmatpush.msra.mxu0 0.0
      %3637 = vmatpush.msra.mxu0 0.0
      %3638 = vmatpush.msra.mxu0 0.0
      %3639 = vmatpush.msra.mxu0 0.0
      %3640 = vmatpush.msra.mxu0 0.0
      %3641 = vmatpush.msra.mxu0 0.0
      %3642 = vmatpush.msra.mxu0 0.0
      %3643 = vmatpush.msra.mxu0 0.0
      %3644 = vmatpush.msra.mxu0 0.0
      %3645 = vmatpush.msra.mxu0 %v3606
      %3646 = vmatpush.msra.mxu0 %v3605
      %3647 = vmatmul.f32.gmra.mxu0 %v3608
      %v3648 = vpop.f32.mrf.mxu0
      %v3649 = vadd.f32 0.0, %v3648
      %3650 = vmatmul.f32.gmra.mxu0 %v3611
      %v3651 = vpop.f32.mrf.mxu0
      %v3652 = vadd.f32 0.0, %v3651
      %3653 = vmatmul.f32.gmra.mxu0 %v3614
      %v3654 = vpop.f32.mrf.mxu0
      %v3655 = vadd.f32 0.0, %v3654
      %3656 = vmatmul.f32.gmra.mxu0 %v3617
      %v3657 = vpop.f32.mrf.mxu0
      %v3658 = vadd.f32 0.0, %v3657
      %3659 = vmatmul.f32.gmra.mxu0 %v3620
      %v3660 = vpop.f32.mrf.mxu0
      %v3661 = vadd.f32 0.0, %v3660
      %3662 = vmatmul.f32.gmra.mxu0 %v3623
      %v3663 = vpop.f32.mrf.mxu0
      %v3664 = vadd.f32 0.0, %v3663
      %3665 = vmatmul.f32.gmra.mxu0 %v3626
      %v3666 = vpop.f32.mrf.mxu0
      %v3667 = vadd.f32 0.0, %v3666
      %3668 = vmatmul.f32.gmra.mxu0 %v3629
      %v3669 = vpop.f32.mrf.mxu0
      %v3670 = vadd.f32 0.0, %v3669
      %3671 = vdwg.mxu0
      %v3672 = vadd.f32 %v3565, %v3649
      %v3673 = vadd.f32 %v3568, %v3652
      %v3674 = vadd.f32 %v3571, %v3655
      %v3675 = vadd.f32 %v3574, %v3658
      %v3676 = vadd.f32 %v3577, %v3661
      %v3677 = vadd.f32 %v3580, %v3664
      %v3678 = vadd.f32 %v3583, %v3667
      %v3679 = vadd.f32 %v3586, %v3670
      %v3680 = vld [vmem:[#allocation4 + $0x8] sm:$0xff]
      %v3681 = vld [vmem:[#allocation4 + $0x10] sm:$0xff]
      %v3682 = vld [vmem:[#allocation4 + $0x18] sm:$0xff]
      %v3683 = vld [vmem:[#allocation4 + $0x20] sm:$0xff]
      %v3684 = vld [vmem:[#allocation4 + $0x28] sm:$0xff]
      %v3685 = vld [vmem:[#allocation4 + $0x30] sm:$0xff]
      %v3686 = vld [vmem:[#allocation4 + $0x38] sm:$0xff]
      %v3687 = vld [vmem:[#allocation4 + $0x40] sm:$0xff]
      %v3688 = vsel %vm3413, %v3680, 0.0
      %v3689 = vsel %vm3414, %v3681, 0.0
      %v3690 = vsel %vm3415, %v3682, 0.0
      %v3691 = vsel %vm3416, %v3683, 0.0
      %v3692 = vsel %vm3417, %v3684, 0.0
      %v3693 = vsel %vm3418, %v3685, 0.0
      %v3694 = vsel %vm3419, %v3686, 0.0
      %v3695 = vsel %vm3420, %v3687, 0.0
      %s3696 = scalar_lea.vmem %s3, 48
      %v3697 = vld [vmem:[%s3696] sm:$0xff]
      %v3698 = vld [vmem:[%s3696 + $0x8] sm:$0xff]
      %v3700 = vsel %vm3272, %v3688, 0
      %v3703 = vsel %vm3272, %v3689, 0
      %v3706 = vsel %vm3272, %v3690, 0
      %v3709 = vsel %vm3272, %v3691, 0
      %v3712 = vsel %vm3272, %v3692, 0
      %v3715 = vsel %vm3272, %v3693, 0
      %v3718 = vsel %vm3272, %v3694, 0
      %v3721 = vsel %vm3272, %v3695, 0
      %3723 = vmatpush.msra.mxu0 0.0
      %3724 = vmatpush.msra.mxu0 0.0
      %3725 = vmatpush.msra.mxu0 0.0
      %3726 = vmatpush.msra.mxu0 0.0
      %3727 = vmatpush.msra.mxu0 0.0
      %3728 = vmatpush.msra.mxu0 0.0
      %3729 = vmatpush.msra.mxu0 0.0
      %3730 = vmatpush.msra.mxu0 0.0
      %3731 = vmatpush.msra.mxu0 0.0
      %3732 = vmatpush.msra.mxu0 0.0
      %3733 = vmatpush.msra.mxu0 0.0
      %3734 = vmatpush.msra.mxu0 0.0
      %3735 = vmatpush.msra.mxu0 0.0
      %3736 = vmatpush.msra.mxu0 0.0
      %3737 = vmatpush.msra.mxu0 %v3698
      %3738 = vmatpush.msra.mxu0 %v3697
      %3739 = vmatmul.f32.gmra.mxu0 %v3700
      %v3740 = vpop.f32.mrf.mxu0
      %v3741 = vadd.f32 0.0, %v3740
      %3742 = vmatmul.f32.gmra.mxu0 %v3703
      %v3743 = vpop.f32.mrf.mxu0
      %v3744 = vadd.f32 0.0, %v3743
      %3745 = vmatmul.f32.gmra.mxu0 %v3706
      %v3746 = vpop.f32.mrf.mxu0
      %v3747 = vadd.f32 0.0, %v3746
      %3748 = vmatmul.f32.gmra.mxu0 %v3709
      %v3749 = vpop.f32.mrf.mxu0
      %v3750 = vadd.f32 0.0, %v3749
      %3751 = vmatmul.f32.gmra.mxu0 %v3712
      %v3752 = vpop.f32.mrf.mxu0
      %v3753 = vadd.f32 0.0, %v3752
      %3754 = vmatmul.f32.gmra.mxu0 %v3715
      %v3755 = vpop.f32.mrf.mxu0
      %v3756 = vadd.f32 0.0, %v3755
      %3757 = vmatmul.f32.gmra.mxu0 %v3718
      %v3758 = vpop.f32.mrf.mxu0
      %v3759 = vadd.f32 0.0, %v3758
      %3760 = vmatmul.f32.gmra.mxu0 %v3721
      %v3761 = vpop.f32.mrf.mxu0
      %v3762 = vadd.f32 0.0, %v3761
      %3763 = vdwg.mxu0
      %v3764 = vadd.f32 %v3672, %v3741
      %v3765 = vadd.f32 %v3673, %v3744
      %v3766 = vadd.f32 %v3674, %v3747
      %v3767 = vadd.f32 %v3675, %v3750
      %v3768 = vadd.f32 %v3676, %v3753
      %v3769 = vadd.f32 %v3677, %v3756
      %v3770 = vadd.f32 %v3678, %v3759
      %v3771 = vadd.f32 %v3679, %v3762
      %v3772 = vld [vmem:[#allocation4 + $0x9] sm:$0xff]
      %v3773 = vld [vmem:[#allocation4 + $0x11] sm:$0xff]
      %v3774 = vld [vmem:[#allocation4 + $0x19] sm:$0xff]
      %v3775 = vld [vmem:[#allocation4 + $0x21] sm:$0xff]
      %v3776 = vld [vmem:[#allocation4 + $0x29] sm:$0xff]
      %v3777 = vld [vmem:[#allocation4 + $0x31] sm:$0xff]
      %v3778 = vld [vmem:[#allocation4 + $0x39] sm:$0xff]
      %v3779 = vld [vmem:[#allocation4 + $0x41] sm:$0xff]
      %s3780 = scalar_lea.vmem %s3, 64
      %v3781 = vld [vmem:[%s3780] sm:$0xff]
      %v3782 = vld [vmem:[%s3780 + $0x8] sm:$0xff]
      %v3784 = vsel %vm3272, %v3772, 0
      %v3787 = vsel %vm3272, %v3773, 0
      %v3790 = vsel %vm3272, %v3774, 0
      %v3793 = vsel %vm3272, %v3775, 0
      %v3796 = vsel %vm3272, %v3776, 0
      %v3799 = vsel %vm3272, %v3777, 0
      %v3802 = vsel %vm3272, %v3778, 0
      %v3805 = vsel %vm3272, %v3779, 0
      %3807 = vmatpush.msra.mxu0 0.0
      %3808 = vmatpush.msra.mxu0 0.0
      %3809 = vmatpush.msra.mxu0 0.0
      %3810 = vmatpush.msra.mxu0 0.0
      %3811 = vmatpush.msra.mxu0 0.0
      %3812 = vmatpush.msra.mxu0 0.0
      %3813 = vmatpush.msra.mxu0 0.0
      %3814 = vmatpush.msra.mxu0 0.0
      %3815 = vmatpush.msra.mxu0 0.0
      %3816 = vmatpush.msra.mxu0 0.0
      %3817 = vmatpush.msra.mxu0 0.0
      %3818 = vmatpush.msra.mxu0 0.0
      %3819 = vmatpush.msra.mxu0 0.0
      %3820 = vmatpush.msra.mxu0 0.0
      %3821 = vmatpush.msra.mxu0 %v3782
      %3822 = vmatpush.msra.mxu0 %v3781
      %3823 = vmatmul.f32.gmra.mxu0 %v3784
      %v3824 = vpop.f32.mrf.mxu0
      %v3825 = vadd.f32 0.0, %v3824
      %3826 = vmatmul.f32.gmra.mxu0 %v3787
      %v3827 = vpop.f32.mrf.mxu0
      %v3828 = vadd.f32 0.0, %v3827
      %3829 = vmatmul.f32.gmra.mxu0 %v3790
      %v3830 = vpop.f32.mrf.mxu0
      %v3831 = vadd.f32 0.0, %v3830
      %3832 = vmatmul.f32.gmra.mxu0 %v3793
      %v3833 = vpop.f32.mrf.mxu0
      %v3834 = vadd.f32 0.0, %v3833
      %3835 = vmatmul.f32.gmra.mxu0 %v3796
      %v3836 = vpop.f32.mrf.mxu0
      %v3837 = vadd.f32 0.0, %v3836
      %3838 = vmatmul.f32.gmra.mxu0 %v3799
      %v3839 = vpop.f32.mrf.mxu0
      %v3840 = vadd.f32 0.0, %v3839
      %3841 = vmatmul.f32.gmra.mxu0 %v3802
      %v3842 = vpop.f32.mrf.mxu0
      %v3843 = vadd.f32 0.0, %v3842
      %3844 = vmatmul.f32.gmra.mxu0 %v3805
      %v3845 = vpop.f32.mrf.mxu0
      %v3846 = vadd.f32 0.0, %v3845
      %3847 = vdwg.mxu0
      %v3848 = vadd.f32 %v3764, %v3825
      %v3849 = vadd.f32 %v3765, %v3828
      %v3850 = vadd.f32 %v3766, %v3831
      %v3851 = vadd.f32 %v3767, %v3834
      %v3852 = vadd.f32 %v3768, %v3837
      %v3853 = vadd.f32 %v3769, %v3840
      %v3854 = vadd.f32 %v3770, %v3843
      %v3855 = vadd.f32 %v3771, %v3846
      %v3856 = vld [vmem:[#allocation4 + $0xa] sm:$0xff]
      %v3857 = vld [vmem:[#allocation4 + $0x12] sm:$0xff]
      %v3858 = vld [vmem:[#allocation4 + $0x1a] sm:$0xff]
      %v3859 = vld [vmem:[#allocation4 + $0x22] sm:$0xff]
      %v3860 = vld [vmem:[#allocation4 + $0x2a] sm:$0xff]
      %v3861 = vld [vmem:[#allocation4 + $0x32] sm:$0xff]
      %v3862 = vld [vmem:[#allocation4 + $0x3a] sm:$0xff]
      %v3863 = vld [vmem:[#allocation4 + $0x42] sm:$0xff]
      %v3864 = vsel %vm3421, %v3856, 0.0
      %v3865 = vsel %vm3422, %v3857, 0.0
      %v3866 = vsel %vm3423, %v3858, 0.0
      %v3867 = vsel %vm3424, %v3859, 0.0
      %v3868 = vsel %vm3425, %v3860, 0.0
      %v3869 = vsel %vm3426, %v3861, 0.0
      %v3870 = vsel %vm3427, %v3862, 0.0
      %v3871 = vsel %vm3428, %v3863, 0.0
      %s3872 = scalar_lea.vmem %s3, 80
      %v3873 = vld [vmem:[%s3872] sm:$0xff]
      %v3874 = vld [vmem:[%s3872 + $0x8] sm:$0xff]
      %v3876 = vsel %vm3272, %v3864, 0
      %v3879 = vsel %vm3272, %v3865, 0
      %v3882 = vsel %vm3272, %v3866, 0
      %v3885 = vsel %vm3272, %v3867, 0
      %v3888 = vsel %vm3272, %v3868, 0
      %v3891 = vsel %vm3272, %v3869, 0
      %v3894 = vsel %vm3272, %v3870, 0
      %v3897 = vsel %vm3272, %v3871, 0
      %3899 = vmatpush.msra.mxu0 0.0
      %3900 = vmatpush.msra.mxu0 0.0
      %3901 = vmatpush.msra.mxu0 0.0
      %3902 = vmatpush.msra.mxu0 0.0
      %3903 = vmatpush.msra.mxu0 0.0
      %3904 = vmatpush.msra.mxu0 0.0
      %3905 = vmatpush.msra.mxu0 0.0
      %3906 = vmatpush.msra.mxu0 0.0
      %3907 = vmatpush.msra.mxu0 0.0
      %3908 = vmatpush.msra.mxu0 0.0
      %3909 = vmatpush.msra.mxu0 0.0
      %3910 = vmatpush.msra.mxu0 0.0
      %3911 = vmatpush.msra.mxu0 0.0
      %3912 = vmatpush.msra.mxu0 0.0
      %3913 = vmatpush.msra.mxu0 %v3874
      %3914 = vmatpush.msra.mxu0 %v3873
      %3915 = vmatmul.f32.gmra.mxu0 %v3876
      %v3916 = vpop.f32.mrf.mxu0
      %v3917 = vadd.f32 0.0, %v3916
      %3918 = vmatmul.f32.gmra.mxu0 %v3879
      %v3919 = vpop.f32.mrf.mxu0
      %v3920 = vadd.f32 0.0, %v3919
      %3921 = vmatmul.f32.gmra.mxu0 %v3882
      %v3922 = vpop.f32.mrf.mxu0
      %v3923 = vadd.f32 0.0, %v3922
      %3924 = vmatmul.f32.gmra.mxu0 %v3885
      %v3925 = vpop.f32.mrf.mxu0
      %v3926 = vadd.f32 0.0, %v3925
      %3927 = vmatmul.f32.gmra.mxu0 %v3888
      %v3928 = vpop.f32.mrf.mxu0
      %v3929 = vadd.f32 0.0, %v3928
      %3930 = vmatmul.f32.gmra.mxu0 %v3891
      %v3931 = vpop.f32.mrf.mxu0
      %v3932 = vadd.f32 0.0, %v3931
      %3933 = vmatmul.f32.gmra.mxu0 %v3894
      %v3934 = vpop.f32.mrf.mxu0
      %v3935 = vadd.f32 0.0, %v3934
      %3936 = vmatmul.f32.gmra.mxu0 %v3897
      %v3937 = vpop.f32.mrf.mxu0
      %v3938 = vadd.f32 0.0, %v3937
      %3939 = vdwg.mxu0
      %v3940 = vadd.f32 %v3848, %v3917
      %v3941 = vadd.f32 %v3849, %v3920
      %v3942 = vadd.f32 %v3850, %v3923
      %v3943 = vadd.f32 %v3851, %v3926
      %v3944 = vadd.f32 %v3852, %v3929
      %v3945 = vadd.f32 %v3853, %v3932
      %v3946 = vadd.f32 %v3854, %v3935
      %v3947 = vadd.f32 %v3855, %v3938
      %v3948 = vld [vmem:[#allocation4 + $0x10] sm:$0xff]
      %v3949 = vld [vmem:[#allocation4 + $0x18] sm:$0xff]
      %v3950 = vld [vmem:[#allocation4 + $0x20] sm:$0xff]
      %v3951 = vld [vmem:[#allocation4 + $0x28] sm:$0xff]
      %v3952 = vld [vmem:[#allocation4 + $0x30] sm:$0xff]
      %v3953 = vld [vmem:[#allocation4 + $0x38] sm:$0xff]
      %v3954 = vld [vmem:[#allocation4 + $0x40] sm:$0xff]
      %v3955 = vld [vmem:[#allocation4 + $0x48] sm:$0xff]
      %v3956 = vsel %vm3413, %v3948, 0.0
      %v3957 = vsel %vm3414, %v3949, 0.0
      %v3958 = vsel %vm3415, %v3950, 0.0
      %v3959 = vsel %vm3416, %v3951, 0.0
      %v3960 = vsel %vm3417, %v3952, 0.0
      %v3961 = vsel %vm3418, %v3953, 0.0
      %v3962 = vsel %vm3419, %v3954, 0.0
      %v3963 = vsel %vm3420, %v3955, 0.0
      %s3964 = scalar_lea.vmem %s3, 96
      %v3965 = vld [vmem:[%s3964] sm:$0xff]
      %v3966 = vld [vmem:[%s3964 + $0x8] sm:$0xff]
      %v3968 = vsel %vm3272, %v3956, 0
      %v3971 = vsel %vm3272, %v3957, 0
      %v3974 = vsel %vm3272, %v3958, 0
      %v3977 = vsel %vm3272, %v3959, 0
      %v3980 = vsel %vm3272, %v3960, 0
      %v3983 = vsel %vm3272, %v3961, 0
      %v3986 = vsel %vm3272, %v3962, 0
      %v3989 = vsel %vm3272, %v3963, 0
      %3991 = vmatpush.msra.mxu0 0.0
      %3992 = vmatpush.msra.mxu0 0.0
      %3993 = vmatpush.msra.mxu0 0.0
      %3994 = vmatpush.msra.mxu0 0.0
      %3995 = vmatpush.msra.mxu0 0.0
      %3996 = vmatpush.msra.mxu0 0.0
      %3997 = vmatpush.msra.mxu0 0.0
      %3998 = vmatpush.msra.mxu0 0.0
      %3999 = vmatpush.msra.mxu0 0.0
      %4000 = vmatpush.msra.mxu0 0.0
      %4001 = vmatpush.msra.mxu0 0.0
      %4002 = vmatpush.msra.mxu0 0.0
      %4003 = vmatpush.msra.mxu0 0.0
      %4004 = vmatpush.msra.mxu0 0.0
      %4005 = vmatpush.msra.mxu0 %v3966
      %4006 = vmatpush.msra.mxu0 %v3965
      %4007 = vmatmul.f32.gmra.mxu0 %v3968
      %v4008 = vpop.f32.mrf.mxu0
      %v4009 = vadd.f32 0.0, %v4008
      %4010 = vmatmul.f32.gmra.mxu0 %v3971
      %v4011 = vpop.f32.mrf.mxu0
      %v4012 = vadd.f32 0.0, %v4011
      %4013 = vmatmul.f32.gmra.mxu0 %v3974
      %v4014 = vpop.f32.mrf.mxu0
      %v4015 = vadd.f32 0.0, %v4014
      %4016 = vmatmul.f32.gmra.mxu0 %v3977
      %v4017 = vpop.f32.mrf.mxu0
      %v4018 = vadd.f32 0.0, %v4017
      %4019 = vmatmul.f32.gmra.mxu0 %v3980
      %v4020 = vpop.f32.mrf.mxu0
      %v4021 = vadd.f32 0.0, %v4020
      %4022 = vmatmul.f32.gmra.mxu0 %v3983
      %v4023 = vpop.f32.mrf.mxu0
      %v4024 = vadd.f32 0.0, %v4023
      %4025 = vmatmul.f32.gmra.mxu0 %v3986
      %v4026 = vpop.f32.mrf.mxu0
      %v4027 = vadd.f32 0.0, %v4026
      %4028 = vmatmul.f32.gmra.mxu0 %v3989
      %v4029 = vpop.f32.mrf.mxu0
      %v4030 = vadd.f32 0.0, %v4029
      %4031 = vdwg.mxu0
      %v4032 = vadd.f32 %v3940, %v4009
      %v4033 = vadd.f32 %v3941, %v4012
      %v4034 = vadd.f32 %v3942, %v4015
      %v4035 = vadd.f32 %v3943, %v4018
      %v4036 = vadd.f32 %v3944, %v4021
      %v4037 = vadd.f32 %v3945, %v4024
      %v4038 = vadd.f32 %v3946, %v4027
      %v4039 = vadd.f32 %v3947, %v4030
      %v4040 = vld [vmem:[#allocation4 + $0x11] sm:$0xff]
      %v4041 = vld [vmem:[#allocation4 + $0x19] sm:$0xff]
      %v4042 = vld [vmem:[#allocation4 + $0x21] sm:$0xff]
      %v4043 = vld [vmem:[#allocation4 + $0x29] sm:$0xff]
      %v4044 = vld [vmem:[#allocation4 + $0x31] sm:$0xff]
      %v4045 = vld [vmem:[#allocation4 + $0x39] sm:$0xff]
      %v4046 = vld [vmem:[#allocation4 + $0x41] sm:$0xff]
      %v4047 = vld [vmem:[#allocation4 + $0x49] sm:$0xff]
      %s4048 = scalar_lea.vmem %s3, 112
      %v4049 = vld [vmem:[%s4048] sm:$0xff]
      %v4050 = vld [vmem:[%s4048 + $0x8] sm:$0xff]
      %v4052 = vsel %vm3272, %v4040, 0
      %v4055 = vsel %vm3272, %v4041, 0
      %v4058 = vsel %vm3272, %v4042, 0
      %v4061 = vsel %vm3272, %v4043, 0
      %v4064 = vsel %vm3272, %v4044, 0
      %v4067 = vsel %vm3272, %v4045, 0
      %v4070 = vsel %vm3272, %v4046, 0
      %v4073 = vsel %vm3272, %v4047, 0
      %4075 = vmatpush.msra.mxu0 0.0
      %4076 = vmatpush.msra.mxu0 0.0
      %4077 = vmatpush.msra.mxu0 0.0
      %4078 = vmatpush.msra.mxu0 0.0
      %4079 = vmatpush.msra.mxu0 0.0
      %4080 = vmatpush.msra.mxu0 0.0
      %4081 = vmatpush.msra.mxu0 0.0
      %4082 = vmatpush.msra.mxu0 0.0
      %4083 = vmatpush.msra.mxu0 0.0
      %4084 = vmatpush.msra.mxu0 0.0
      %4085 = vmatpush.msra.mxu0 0.0
      %4086 = vmatpush.msra.mxu0 0.0
      %4087 = vmatpush.msra.mxu0 0.0
      %4088 = vmatpush.msra.mxu0 0.0
      %4089 = vmatpush.msra.mxu0 %v4050
      %4090 = vmatpush.msra.mxu0 %v4049
      %4091 = vmatmul.f32.gmra.mxu0 %v4052
      %v4092 = vpop.f32.mrf.mxu0
      %v4093 = vadd.f32 0.0, %v4092
      %4094 = vmatmul.f32.gmra.mxu0 %v4055
      %v4095 = vpop.f32.mrf.mxu0
      %v4096 = vadd.f32 0.0, %v4095
      %4097 = vmatmul.f32.gmra.mxu0 %v4058
      %v4098 = vpop.f32.mrf.mxu0
      %v4099 = vadd.f32 0.0, %v4098
      %4100 = vmatmul.f32.gmra.mxu0 %v4061
      %v4101 = vpop.f32.mrf.mxu0
      %v4102 = vadd.f32 0.0, %v4101
      %4103 = vmatmul.f32.gmra.mxu0 %v4064
      %v4104 = vpop.f32.mrf.mxu0
      %v4105 = vadd.f32 0.0, %v4104
      %4106 = vmatmul.f32.gmra.mxu0 %v4067
      %v4107 = vpop.f32.mrf.mxu0
      %v4108 = vadd.f32 0.0, %v4107
      %4109 = vmatmul.f32.gmra.mxu0 %v4070
      %v4110 = vpop.f32.mrf.mxu0
      %v4111 = vadd.f32 0.0, %v4110
      %4112 = vmatmul.f32.gmra.mxu0 %v4073
      %v4113 = vpop.f32.mrf.mxu0
      %v4114 = vadd.f32 0.0, %v4113
      %4115 = vdwg.mxu0
      %v4116 = vadd.f32 %v4032, %v4093
      %v4117 = vadd.f32 %v4033, %v4096
      %v4118 = vadd.f32 %v4034, %v4099
      %v4119 = vadd.f32 %v4035, %v4102
      %v4120 = vadd.f32 %v4036, %v4105
      %v4121 = vadd.f32 %v4037, %v4108
      %v4122 = vadd.f32 %v4038, %v4111
      %v4123 = vadd.f32 %v4039, %v4114
      %v4124 = vld [vmem:[#allocation4 + $0x12] sm:$0xff]
      %v4125 = vld [vmem:[#allocation4 + $0x1a] sm:$0xff]
      %v4126 = vld [vmem:[#allocation4 + $0x22] sm:$0xff]
      %v4127 = vld [vmem:[#allocation4 + $0x2a] sm:$0xff]
      %v4128 = vld [vmem:[#allocation4 + $0x32] sm:$0xff]
      %v4129 = vld [vmem:[#allocation4 + $0x3a] sm:$0xff]
      %v4130 = vld [vmem:[#allocation4 + $0x42] sm:$0xff]
      %v4131 = vld [vmem:[#allocation4 + $0x4a] sm:$0xff]
      %v4132 = vsel %vm3421, %v4124, 0.0
      %v4133 = vsel %vm3422, %v4125, 0.0
      %v4134 = vsel %vm3423, %v4126, 0.0
      %v4135 = vsel %vm3424, %v4127, 0.0
      %v4136 = vsel %vm3425, %v4128, 0.0
      %v4137 = vsel %vm3426, %v4129, 0.0
      %v4138 = vsel %vm3427, %v4130, 0.0
      %v4139 = vsel %vm3428, %v4131, 0.0
      %s4140 = scalar_lea.vmem %s3, 128
      %v4141 = vld [vmem:[%s4140] sm:$0xff]
      %v4142 = vld [vmem:[%s4140 + $0x8] sm:$0xff]
      %v4144 = vsel %vm3272, %v4132, 0
      %v4147 = vsel %vm3272, %v4133, 0
      %v4150 = vsel %vm3272, %v4134, 0
      %v4153 = vsel %vm3272, %v4135, 0
      %v4156 = vsel %vm3272, %v4136, 0
      %v4159 = vsel %vm3272, %v4137, 0
      %v4162 = vsel %vm3272, %v4138, 0
      %v4165 = vsel %vm3272, %v4139, 0
      %4167 = vmatpush.msra.mxu0 0.0
      %4168 = vmatpush.msra.mxu0 0.0
      %4169 = vmatpush.msra.mxu0 0.0
      %4170 = vmatpush.msra.mxu0 0.0
      %4171 = vmatpush.msra.mxu0 0.0
      %4172 = vmatpush.msra.mxu0 0.0
      %4173 = vmatpush.msra.mxu0 0.0
      %4174 = vmatpush.msra.mxu0 0.0
      %4175 = vmatpush.msra.mxu0 0.0
      %4176 = vmatpush.msra.mxu0 0.0
      %4177 = vmatpush.msra.mxu0 0.0
      %4178 = vmatpush.msra.mxu0 0.0
      %4179 = vmatpush.msra.mxu0 0.0
      %4180 = vmatpush.msra.mxu0 0.0
      %4181 = vmatpush.msra.mxu0 %v4142
      %4182 = vmatpush.msra.mxu0 %v4141
      %4183 = vmatmul.f32.gmra.mxu0 %v4144
      %v4184 = vpop.f32.mrf.mxu0
      %v4185 = vadd.f32 0.0, %v4184
      %4186 = vmatmul.f32.gmra.mxu0 %v4147
      %v4187 = vpop.f32.mrf.mxu0
      %v4188 = vadd.f32 0.0, %v4187
      %4189 = vmatmul.f32.gmra.mxu0 %v4150
      %v4190 = vpop.f32.mrf.mxu0
      %v4191 = vadd.f32 0.0, %v4190
      %4192 = vmatmul.f32.gmra.mxu0 %v4153
      %v4193 = vpop.f32.mrf.mxu0
      %v4194 = vadd.f32 0.0, %v4193
      %4195 = vmatmul.f32.gmra.mxu0 %v4156
      %v4196 = vpop.f32.mrf.mxu0
      %v4197 = vadd.f32 0.0, %v4196
      %4198 = vmatmul.f32.gmra.mxu0 %v4159
      %v4199 = vpop.f32.mrf.mxu0
      %v4200 = vadd.f32 0.0, %v4199
      %4201 = vmatmul.f32.gmra.mxu0 %v4162
      %v4202 = vpop.f32.mrf.mxu0
      %v4203 = vadd.f32 0.0, %v4202
      %4204 = vmatmul.f32.gmra.mxu0 %v4165
      %v4205 = vpop.f32.mrf.mxu0
      %v4206 = vadd.f32 0.0, %v4205
      %4207 = vdwg.mxu0
      %v4208 = vadd.f32 %v4116, %v4185
      %v4209 = vadd.f32 %v4117, %v4188
      %v4210 = vadd.f32 %v4118, %v4191
      %v4211 = vadd.f32 %v4119, %v4194
      %v4212 = vadd.f32 %v4120, %v4197
      %v4213 = vadd.f32 %v4121, %v4200
      %v4214 = vadd.f32 %v4122, %v4203
      %v4215 = vadd.f32 %v4123, %v4206
      %v4216 = vld [vmem:[%s4] sm:$0x1]
      %v4218 = vperm.slane %v4216, 0
      %v4220 = vadd.f32 %v4208, %v4218
      %v4221 = vadd.f32 %v4209, %v4218
      %v4222 = vadd.f32 %v4210, %v4218
      %v4223 = vadd.f32 %v4211, %v4218
      %v4224 = vadd.f32 %v4212, %v4218
      %v4225 = vadd.f32 %v4213, %v4218
      %v4226 = vadd.f32 %v4214, %v4218
      %v4227 = vadd.f32 %v4215, %v4218
      %v4228 = vmax.f32 %v4220, 0.0
      %v4229 = vmax.f32 %v4221, 0.0
      %v4230 = vmax.f32 %v4222, 0.0
      %v4231 = vmax.f32 %v4223, 0.0
      %v4232 = vmax.f32 %v4224, 0.0
      %v4233 = vmax.f32 %v4225, 0.0
      %v4234 = vmax.f32 %v4226, 0.0
      %v4235 = vmax.f32 %v4227, 0.0
      %vm4236 = vcmask 31744
      %4237 = vst.msk [vmem:[#allocation5] sm:$0xff] %vm4236, %v4228
      %4238 = vst.msk [vmem:[#allocation5 + $0x8] sm:$0xff] %vm4236, %v4229
      %4239 = vst.msk [vmem:[#allocation5 + $0x10] sm:$0xff] %vm4236, %v4230
      %4240 = vst.msk [vmem:[#allocation5 + $0x18] sm:$0xff] %vm4236, %v4231
      %4241 = vst.msk [vmem:[#allocation5 + $0x20] sm:$0xff] %vm4236, %v4232
      %4242 = vst.msk [vmem:[#allocation5 + $0x28] sm:$0xff] %vm4236, %v4233
      %4243 = vst.msk [vmem:[#allocation5 + $0x30] sm:$0xff] %vm4236, %v4234
      %4244 = vst.msk [vmem:[#allocation5 + $0x38] sm:$0xff] %vm4236, %v4235
      %v4245 = vld [vmem:[#allocation5] ss:$2 sm:$0xf]
      %s4246 = scalar_lea.vmem [#allocation5], 1
      %v4247 = vld [vmem:[%s4246] ss:$2 sm:$0xf]
      %s4248 = scalar_lea.vmem [#allocation5], 8
      %v4249 = vld [vmem:[%s4248] ss:$2 sm:$0xf]
      %s4250 = scalar_lea.vmem [#allocation5], 9
      %v4251 = vld [vmem:[%s4250] ss:$2 sm:$0xf]
      %v4252 = vmax.f32 %v4245, %v4247
      %v4253 = vmax.f32 %v4249, %v4251
      %v4254 = vmax.f32 %v4252, %v4253
      %vm4255 = vcmask 27648
      %4256 = vst.msk [vmem:[%s367] sm:$0xf] %vm4255, %v4254
      %s4257 = scalar_lea.vmem [#allocation5], 16
      %v4258 = vld [vmem:[%s4257] ss:$2 sm:$0xf]
      %s4259 = scalar_lea.vmem [#allocation5], 17
      %v4260 = vld [vmem:[%s4259] ss:$2 sm:$0xf]
      %s4261 = scalar_lea.vmem [#allocation5], 24
      %v4262 = vld [vmem:[%s4261] ss:$2 sm:$0xf]
      %s4263 = scalar_lea.vmem [#allocation5], 25
      %v4264 = vld [vmem:[%s4263] ss:$2 sm:$0xf]
      %v4265 = vmax.f32 %v4258, %v4260
      %v4266 = vmax.f32 %v4262, %v4264
      %v4267 = vmax.f32 %v4265, %v4266
      %4268 = vst.msk [vmem:[%s367 + $0x4] sm:$0xf] %vm4255, %v4267
      %s4269 = scalar_lea.vmem [#allocation5], 32
      %v4270 = vld [vmem:[%s4269] ss:$2 sm:$0xf]
      %s4271 = scalar_lea.vmem [#allocation5], 33
      %v4272 = vld [vmem:[%s4271] ss:$2 sm:$0xf]
      %s4273 = scalar_lea.vmem [#allocation5], 40
      %v4274 = vld [vmem:[%s4273] ss:$2 sm:$0xf]
      %s4275 = scalar_lea.vmem [#allocation5], 41
      %v4276 = vld [vmem:[%s4275] ss:$2 sm:$0xf]
      %v4277 = vmax.f32 %v4270, %v4272
      %v4278 = vmax.f32 %v4274, %v4276
      %v4279 = vmax.f32 %v4277, %v4278
      %4280 = vst.msk [vmem:[%s367 + $0x8] sm:$0xf] %vm4255, %v4279
      %s4281 = scalar_lea.vmem [#allocation5], 48
      %v4282 = vld [vmem:[%s4281] ss:$2 sm:$0xf]
      %s4283 = scalar_lea.vmem [#allocation5], 49
      %v4284 = vld [vmem:[%s4283] ss:$2 sm:$0xf]
      %s4285 = scalar_lea.vmem [#allocation5], 56
      %v4286 = vld [vmem:[%s4285] ss:$2 sm:$0xf]
      %s4287 = scalar_lea.vmem [#allocation5], 57
      %v4288 = vld [vmem:[%s4287] ss:$2 sm:$0xf]
      %v4289 = vmax.f32 %v4282, %v4284
      %v4290 = vmax.f32 %v4286, %v4288
      %v4291 = vmax.f32 %v4289, %v4290
      %4292 = vst.msk [vmem:[%s367 + $0xc] sm:$0xf] %vm4255, %v4291
      %v4293 = vld [vmem:[%s367] sm:$0xff]
      %v4294 = vld [vmem:[%s367 + $0x8] sm:$0xff]
      %v4295 = vld [vmem:[%s5] sm:$0xf]
      %v4296 = vld [vmem:[%s6] sm:$0x1]
      %v4298 = vperm.slane %v4296, 0
      %v4301 = vsel %vm4236, %v4293, 0
      %v4304 = vsel %vm4236, %v4294, 0
      %vm4306 = vcmask 1043456
      %v4308 = vsel %vm4306, %v4295, 0
      %4310 = vmatpush.msra.mxu0 0.0
      %4311 = vmatpush.msra.mxu0 0.0
      %4312 = vmatpush.msra.mxu0 0.0
      %4313 = vmatpush.msra.mxu0 0.0
      %4314 = vmatpush.msra.mxu0 0.0
      %4315 = vmatpush.msra.mxu0 0.0
      %4316 = vmatpush.msra.mxu0 0.0
      %4317 = vmatpush.msra.mxu0 0.0
      %4318 = vmatpush.msra.mxu0 0.0
      %4319 = vmatpush.msra.mxu0 0.0
      %4320 = vmatpush.msra.mxu0 0.0
      %4321 = vmatpush.msra.mxu0 0.0
      %4322 = vmatpush.msra.mxu0 0.0
      %4323 = vmatpush.msra.mxu0 0.0
      %4324 = vmatpush.msra.mxu0 0.0
      %4325 = vmatpush.msra.mxu0 %v4308
      %4326 = vmatmul.f32.gmra.mxu0 %v4301
      %v4327 = vpop.f32.mrf.mxu0
      %v4328 = vadd.f32 %v4298, %v4327
      %4329 = vmatmul.f32.gmra.mxu0 %v4304
      %v4330 = vpop.f32.mrf.mxu0
      %v4331 = vadd.f32 %v4298, %v4330
      %4332 = vdwg.mxu0
      %v4333 = vmax.f32 %v4328, 0.0
      %v4334 = vmax.f32 %v4331, 0.0
      %4335 = vst.msk [vmem:[#allocation6] sm:$0xff] %vm3272, %v4333
      %4336 = vst.msk [vmem:[#allocation6 + $0x8] sm:$0xff] %vm3272, %v4334
      %s4337 = scalar_lea.vmem %s5, 4
      %v4338 = vld [vmem:[%s4337] sm:$0xf]
      %v4339 = vld [vmem:[%s6] sm:$0x1]
      %v4341 = vperm.slane %v4339, 0
      %v4344 = vsel %vm4306, %v4338, 0
      %4346 = vmatpush.msra.mxu0 0.0
      %4347 = vmatpush.msra.mxu0 0.0
      %4348 = vmatpush.msra.mxu0 0.0
      %4349 = vmatpush.msra.mxu0 0.0
      %4350 = vmatpush.msra.mxu0 0.0
      %4351 = vmatpush.msra.mxu0 0.0
      %4352 = vmatpush.msra.mxu0 0.0
      %4353 = vmatpush.msra.mxu0 0.0
      %4354 = vmatpush.msra.mxu0 0.0
      %4355 = vmatpush.msra.mxu0 0.0
      %4356 = vmatpush.msra.mxu0 0.0
      %4357 = vmatpush.msra.mxu0 0.0
      %4358 = vmatpush.msra.mxu0 0.0
      %4359 = vmatpush.msra.mxu0 0.0
      %4360 = vmatpush.msra.mxu0 0.0
      %4361 = vmatpush.msra.mxu0 %v4344
      %4362 = vmatmul.f32.gmra.mxu0 %v4301
      %v4363 = vpop.f32.mrf.mxu0
      %v4364 = vadd.f32 %v4341, %v4363
      %4365 = vmatmul.f32.gmra.mxu0 %v4304
      %v4366 = vpop.f32.mrf.mxu0
      %v4367 = vadd.f32 %v4341, %v4366
      %4368 = vdwg.mxu0
      %v4369 = vmax.f32 %v4364, 0.0
      %v4370 = vmax.f32 %v4367, 0.0
      %4371 = vst.msk [vmem:[#allocation6 + $0x10] sm:$0xff] %vm3272, %v4369
      %4372 = vst.msk [vmem:[#allocation6 + $0x18] sm:$0xff] %vm3272, %v4370
      %s4373 = scalar_lea.vmem %s5, 8
      %v4374 = vld [vmem:[%s4373] sm:$0xf]
      %v4375 = vld [vmem:[%s6] sm:$0x1]
      %v4377 = vperm.slane %v4375, 0
      %v4380 = vsel %vm4306, %v4374, 0
      %4382 = vmatpush.msra.mxu0 0.0
      %4383 = vmatpush.msra.mxu0 0.0
      %4384 = vmatpush.msra.mxu0 0.0
      %4385 = vmatpush.msra.mxu0 0.0
      %4386 = vmatpush.msra.mxu0 0.0
      %4387 = vmatpush.msra.mxu0 0.0
      %4388 = vmatpush.msra.mxu0 0.0
      %4389 = vmatpush.msra.mxu0 0.0
      %4390 = vmatpush.msra.mxu0 0.0
      %4391 = vmatpush.msra.mxu0 0.0
      %4392 = vmatpush.msra.mxu0 0.0
      %4393 = vmatpush.msra.mxu0 0.0
      %4394 = vmatpush.msra.mxu0 0.0
      %4395 = vmatpush.msra.mxu0 0.0
      %4396 = vmatpush.msra.mxu0 0.0
      %4397 = vmatpush.msra.mxu0 %v4380
      %4398 = vmatmul.f32.gmra.mxu0 %v4301
      %v4399 = vpop.f32.mrf.mxu0
      %v4400 = vadd.f32 %v4377, %v4399
      %4401 = vmatmul.f32.gmra.mxu0 %v4304
      %v4402 = vpop.f32.mrf.mxu0
      %v4403 = vadd.f32 %v4377, %v4402
      %4404 = vdwg.mxu0
      %v4405 = vmax.f32 %v4400, 0.0
      %v4406 = vmax.f32 %v4403, 0.0
      %4407 = vst.msk [vmem:[#allocation6 + $0x20] sm:$0xff] %vm3272, %v4405
      %4408 = vst.msk [vmem:[#allocation6 + $0x28] sm:$0xff] %vm3272, %v4406
      %s4409 = scalar_lea.vmem %s5, 12
      %v4410 = vld [vmem:[%s4409] sm:$0xf]
      %v4411 = vld [vmem:[%s6] sm:$0x1]
      %v4413 = vperm.slane %v4411, 0
      %v4416 = vsel %vm4306, %v4410, 0
      %4418 = vmatpush.msra.mxu0 0.0
      %4419 = vmatpush.msra.mxu0 0.0
      %4420 = vmatpush.msra.mxu0 0.0
      %4421 = vmatpush.msra.mxu0 0.0
      %4422 = vmatpush.msra.mxu0 0.0
      %4423 = vmatpush.msra.mxu0 0.0
      %4424 = vmatpush.msra.mxu0 0.0
      %4425 = vmatpush.msra.mxu0 0.0
      %4426 = vmatpush.msra.mxu0 0.0
      %4427 = vmatpush.msra.mxu0 0.0
      %4428 = vmatpush.msra.mxu0 0.0
      %4429 = vmatpush.msra.mxu0 0.0
      %4430 = vmatpush.msra.mxu0 0.0
      %4431 = vmatpush.msra.mxu0 0.0
      %4432 = vmatpush.msra.mxu0 0.0
      %4433 = vmatpush.msra.mxu0 %v4416
      %4434 = vmatmul.f32.gmra.mxu0 %v4301
      %v4435 = vpop.f32.mrf.mxu0
      %v4436 = vadd.f32 %v4413, %v4435
      %4437 = vmatmul.f32.gmra.mxu0 %v4304
      %v4438 = vpop.f32.mrf.mxu0
      %v4439 = vadd.f32 %v4413, %v4438
      %4440 = vdwg.mxu0
      %v4441 = vmax.f32 %v4436, 0.0
      %v4442 = vmax.f32 %v4439, 0.0
      %4443 = vst.msk [vmem:[#allocation6 + $0x30] sm:$0xff] %vm3272, %v4441
      %4444 = vst.msk [vmem:[#allocation6 + $0x38] sm:$0xff] %vm3272, %v4442
      %v4445 = vld [vmem:[#allocation6] sm:$0xff]
      %v4446 = vld [vmem:[#allocation6 + $0x8] sm:$0xff]
      %v4447 = vld [vmem:[#allocation6 + $0x10] sm:$0xff]
      %v4448 = vld [vmem:[#allocation6 + $0x18] sm:$0xff]
      %v4449 = vld [vmem:[#allocation6 + $0x20] sm:$0xff]
      %v4450 = vld [vmem:[#allocation6 + $0x28] sm:$0xff]
      %v4451 = vld [vmem:[#allocation6 + $0x30] sm:$0xff]
      %v4452 = vld [vmem:[#allocation6 + $0x38] sm:$0xff]
      %v4453 = vld [vmem:[%s7] sm:$0xff]
      %v4454 = vld [vmem:[%s7 + $0x8] sm:$0xff]
      %v4455 = vld [vmem:[%s8] sm:$0x1]
      %v4457 = vperm.slane %v4455, 0
      %v4460 = vsel %vm3272, %v4445, 0
      %v4463 = vsel %vm3272, %v4446, 0
      %v4466 = vsel %vm3272, %v4447, 0
      %v4469 = vsel %vm3272, %v4448, 0
      %v4472 = vsel %vm3272, %v4449, 0
      %v4475 = vsel %vm3272, %v4450, 0
      %v4478 = vsel %vm3272, %v4451, 0
      %v4481 = vsel %vm3272, %v4452, 0
      %4483 = vmatpush.msra.mxu0 0.0
      %4484 = vmatpush.msra.mxu0 0.0
      %4485 = vmatpush.msra.mxu0 0.0
      %4486 = vmatpush.msra.mxu0 0.0
      %4487 = vmatpush.msra.mxu0 0.0
      %4488 = vmatpush.msra.mxu0 0.0
      %4489 = vmatpush.msra.mxu0 0.0
      %4490 = vmatpush.msra.mxu0 0.0
      %4491 = vmatpush.msra.mxu0 0.0
      %4492 = vmatpush.msra.mxu0 0.0
      %4493 = vmatpush.msra.mxu0 0.0
      %4494 = vmatpush.msra.mxu0 0.0
      %4495 = vmatpush.msra.mxu0 0.0
      %4496 = vmatpush.msra.mxu0 0.0
      %4497 = vmatpush.msra.mxu0 %v4454
      %4498 = vmatpush.msra.mxu0 %v4453
      %4499 = vmatmul.f32.gmra.mxu0 %v4460
      %v4500 = vpop.f32.mrf.mxu0
      %v4501 = vadd.f32 %v4457, %v4500
      %4502 = vmatmul.f32.gmra.mxu0 %v4463
      %v4503 = vpop.f32.mrf.mxu0
      %v4504 = vadd.f32 %v4457, %v4503
      %4505 = vmatmul.f32.gmra.mxu0 %v4466
      %v4506 = vpop.f32.mrf.mxu0
      %v4507 = vadd.f32 %v4457, %v4506
      %4508 = vmatmul.f32.gmra.mxu0 %v4469
      %v4509 = vpop.f32.mrf.mxu0
      %v4510 = vadd.f32 %v4457, %v4509
      %4511 = vmatmul.f32.gmra.mxu0 %v4472
      %v4512 = vpop.f32.mrf.mxu0
      %v4513 = vadd.f32 %v4457, %v4512
      %4514 = vmatmul.f32.gmra.mxu0 %v4475
      %v4515 = vpop.f32.mrf.mxu0
      %v4516 = vadd.f32 %v4457, %v4515
      %4517 = vmatmul.f32.gmra.mxu0 %v4478
      %v4518 = vpop.f32.mrf.mxu0
      %v4519 = vadd.f32 %v4457, %v4518
      %4520 = vmatmul.f32.gmra.mxu0 %v4481
      %v4521 = vpop.f32.mrf.mxu0
      %v4522 = vadd.f32 %v4457, %v4521
      %4523 = vdwg.mxu0
      %v4524 = vsub.f32 0.0, %v4501
      %v4525 = vsub.f32 0.0, %v4504
      %v4526 = vsub.f32 0.0, %v4507
      %v4527 = vsub.f32 0.0, %v4510
      %v4528 = vsub.f32 0.0, %v4513
      %v4529 = vsub.f32 0.0, %v4516
      %v4530 = vsub.f32 0.0, %v4519
      %v4531 = vsub.f32 0.0, %v4522
      %v4532 = vmul.f32 %v4524, 1.442695
      %v4533 = vpow.pop %v4532
      %v4534 = vmul.f32 %v4525, 1.442695
      %v4535 = vpow.pop %v4534
      %v4536 = vmul.f32 %v4526, 1.442695
      %v4537 = vpow.pop %v4536
      %v4538 = vmul.f32 %v4527, 1.442695
      %v4539 = vpow.pop %v4538
      %v4540 = vmul.f32 %v4528, 1.442695
      %v4541 = vpow.pop %v4540
      %v4542 = vmul.f32 %v4529, 1.442695
      %v4543 = vpow.pop %v4542
      %v4544 = vmul.f32 %v4530, 1.442695
      %v4545 = vpow.pop %v4544
      %v4546 = vmul.f32 %v4531, 1.442695
      %v4547 = vpow.pop %v4546
      %v4548 = vadd.f32 %v4533, 1.0
      %v4549 = vadd.f32 %v4535, 1.0
      %v4550 = vadd.f32 %v4537, 1.0
      %v4551 = vadd.f32 %v4539, 1.0
      %v4552 = vadd.f32 %v4541, 1.0
      %v4553 = vadd.f32 %v4543, 1.0
      %v4554 = vadd.f32 %v4545, 1.0
      %v4555 = vadd.f32 %v4547, 1.0
      %v4556 = vrcp.pop %v4548
      %v4557 = vmul.f32 %v4548, %v4556
      %v4558 = vsub.f32 1.0, %v4557
      %v4559 = vmul.f32 %v4556, %v4558
      %v4560 = vadd.f32 %v4556, %v4559
      %vm4561 = vweird.f32 %v4548
      %vm4562 = vweird.f32 %v4556
      %vm4563 = vmor %vm4561, %vm4562
      %v4564 = vsel %vm4563, %v4556, %v4560
      %v4565 = vand.u32 2147483647, %v4548
      %vm4566 = vcmp.eq.f32.partialorder %v4565, 8.507059e+37
      %v4567 = vand.u32 %v4548, 2147483648
      %v4568 = vor.u32 1.1754944e-38, %v4567
      %v4569 = vsel %vm4566, %v4568, %v4564
      %v4570 = vmul.f32 1.0, %v4569
      %v4571 = vrcp.pop %v4549
      %v4572 = vmul.f32 %v4549, %v4571
      %v4573 = vsub.f32 1.0, %v4572
      %v4574 = vmul.f32 %v4571, %v4573
      %v4575 = vadd.f32 %v4571, %v4574
      %vm4576 = vweird.f32 %v4549
      %vm4577 = vweird.f32 %v4571
      %vm4578 = vmor %vm4576, %vm4577
      %v4579 = vsel %vm4578, %v4571, %v4575
      %v4580 = vand.u32 2147483647, %v4549
      %vm4581 = vcmp.eq.f32.partialorder %v4580, 8.507059e+37
      %v4582 = vand.u32 %v4549, 2147483648
      %v4583 = vor.u32 1.1754944e-38, %v4582
      %v4584 = vsel %vm4581, %v4583, %v4579
      %v4585 = vmul.f32 1.0, %v4584
      %v4586 = vrcp.pop %v4550
      %v4587 = vmul.f32 %v4550, %v4586
      %v4588 = vsub.f32 1.0, %v4587
      %v4589 = vmul.f32 %v4586, %v4588
      %v4590 = vadd.f32 %v4586, %v4589
      %vm4591 = vweird.f32 %v4550
      %vm4592 = vweird.f32 %v4586
      %vm4593 = vmor %vm4591, %vm4592
      %v4594 = vsel %vm4593, %v4586, %v4590
      %v4595 = vand.u32 2147483647, %v4550
      %vm4596 = vcmp.eq.f32.partialorder %v4595, 8.507059e+37
      %v4597 = vand.u32 %v4550, 2147483648
      %v4598 = vor.u32 1.1754944e-38, %v4597
      %v4599 = vsel %vm4596, %v4598, %v4594
      %v4600 = vmul.f32 1.0, %v4599
      %v4601 = vrcp.pop %v4551
      %v4602 = vmul.f32 %v4551, %v4601
      %v4603 = vsub.f32 1.0, %v4602
      %v4604 = vmul.f32 %v4601, %v4603
      %v4605 = vadd.f32 %v4601, %v4604
      %vm4606 = vweird.f32 %v4551
      %vm4607 = vweird.f32 %v4601
      %vm4608 = vmor %vm4606, %vm4607
      %v4609 = vsel %vm4608, %v4601, %v4605
      %v4610 = vand.u32 2147483647, %v4551
      %vm4611 = vcmp.eq.f32.partialorder %v4610, 8.507059e+37
      %v4612 = vand.u32 %v4551, 2147483648
      %v4613 = vor.u32 1.1754944e-38, %v4612
      %v4614 = vsel %vm4611, %v4613, %v4609
      %v4615 = vmul.f32 1.0, %v4614
      %v4616 = vrcp.pop %v4552
      %v4617 = vmul.f32 %v4552, %v4616
      %v4618 = vsub.f32 1.0, %v4617
      %v4619 = vmul.f32 %v4616, %v4618
      %v4620 = vadd.f32 %v4616, %v4619
      %vm4621 = vweird.f32 %v4552
      %vm4622 = vweird.f32 %v4616
      %vm4623 = vmor %vm4621, %vm4622
      %v4624 = vsel %vm4623, %v4616, %v4620
      %v4625 = vand.u32 2147483647, %v4552
      %vm4626 = vcmp.eq.f32.partialorder %v4625, 8.507059e+37
      %v4627 = vand.u32 %v4552, 2147483648
      %v4628 = vor.u32 1.1754944e-38, %v4627
      %v4629 = vsel %vm4626, %v4628, %v4624
      %v4630 = vmul.f32 1.0, %v4629
      %v4631 = vrcp.pop %v4553
      %v4632 = vmul.f32 %v4553, %v4631
      %v4633 = vsub.f32 1.0, %v4632
      %v4634 = vmul.f32 %v4631, %v4633
      %v4635 = vadd.f32 %v4631, %v4634
      %vm4636 = vweird.f32 %v4553
      %vm4637 = vweird.f32 %v4631
      %vm4638 = vmor %vm4636, %vm4637
      %v4639 = vsel %vm4638, %v4631, %v4635
      %v4640 = vand.u32 2147483647, %v4553
      %vm4641 = vcmp.eq.f32.partialorder %v4640, 8.507059e+37
      %v4642 = vand.u32 %v4553, 2147483648
      %v4643 = vor.u32 1.1754944e-38, %v4642
      %v4644 = vsel %vm4641, %v4643, %v4639
      %v4645 = vmul.f32 1.0, %v4644
      %v4646 = vrcp.pop %v4554
      %v4647 = vmul.f32 %v4554, %v4646
      %v4648 = vsub.f32 1.0, %v4647
      %v4649 = vmul.f32 %v4646, %v4648
      %v4650 = vadd.f32 %v4646, %v4649
      %vm4651 = vweird.f32 %v4554
      %vm4652 = vweird.f32 %v4646
      %vm4653 = vmor %vm4651, %vm4652
      %v4654 = vsel %vm4653, %v4646, %v4650
      %v4655 = vand.u32 2147483647, %v4554
      %vm4656 = vcmp.eq.f32.partialorder %v4655, 8.507059e+37
      %v4657 = vand.u32 %v4554, 2147483648
      %v4658 = vor.u32 1.1754944e-38, %v4657
      %v4659 = vsel %vm4656, %v4658, %v4654
      %v4660 = vmul.f32 1.0, %v4659
      %v4661 = vrcp.pop %v4555
      %v4662 = vmul.f32 %v4555, %v4661
      %v4663 = vsub.f32 1.0, %v4662
      %v4664 = vmul.f32 %v4661, %v4663
      %v4665 = vadd.f32 %v4661, %v4664
      %vm4666 = vweird.f32 %v4555
      %vm4667 = vweird.f32 %v4661
      %vm4668 = vmor %vm4666, %vm4667
      %v4669 = vsel %vm4668, %v4661, %v4665
      %v4670 = vand.u32 2147483647, %v4555
      %vm4671 = vcmp.eq.f32.partialorder %v4670, 8.507059e+37
      %v4672 = vand.u32 %v4555, 2147483648
      %v4673 = vor.u32 1.1754944e-38, %v4672
      %v4674 = vsel %vm4671, %v4673, %v4669
      %v4675 = vmul.f32 1.0, %v4674
      %vm4676 = vcmask 97280
      %4677 = vst.msk [vmem:[%s372] sm:$0xff] %vm4676, %v4570
      %4678 = vst.msk [vmem:[%s372 + $0x8] sm:$0xff] %vm4676, %v4585
      %4679 = vst.msk [vmem:[%s372 + $0x10] sm:$0xff] %vm4676, %v4600
      %4680 = vst.msk [vmem:[%s372 + $0x18] sm:$0xff] %vm4676, %v4615
      %4681 = vst.msk [vmem:[%s372 + $0x20] sm:$0xff] %vm4676, %v4630
      %4682 = vst.msk [vmem:[%s372 + $0x28] sm:$0xff] %vm4676, %v4645
      %4683 = vst.msk [vmem:[%s372 + $0x30] sm:$0xff] %vm4676, %v4660
      %4684 = vst.msk [vmem:[%s372 + $0x38] sm:$0xff] %vm4676, %v4675
      %p4685 = scmp.lt.s32.totalorder %s22, 1
      %s4686 = scalar_select %p4685, %s22, 1
      %s4687 = smul.addr %s4686, 2
      %s4688 = smul.addr %s4687, 8
      %s4689 = scalar_lea.vmem %s9, %s4688
      %p4690 = scmp.lt.s32.totalorder %s22, 1
      %s4691 = scalar_select %p4690, %s22, 1
      %s4692 = smul.addr %s4691, 8
      %s4693 = smul.addr %s4692, 8
      %s4694 = scalar_lea.vmem %s10, %s4693
      // Predicated region
      $region57: #{autoencoder_forward.1} parent=55 // pred_check
        %p4695 = pneg %p234
      $region58: #{autoencoder_forward.1} parent=55 // pred_check_branch
        %4697 = sbr.rel (%p4695) target = $region60
      $region59: #{autoencoder_forward.1} parent=55 // pred_region
        _
      $region60: #{autoencoder_forward.1} parent=55 // pred_fallthru
        _
      // Predicated region
      $region61: #{autoencoder_forward.1} parent=55 // pred_check
        %p4698 = pneg %p260
      $region62: #{autoencoder_forward.1} parent=55 // pred_check_branch
        %4700 = sbr.rel (%p4698) target = $region64
      $region63: #{autoencoder_forward.1} parent=55 // pred_region
        _
      $region64: #{autoencoder_forward.1} parent=55 // pred_fallthru
        _
    $region56: #{autoencoder_forward.1} parent=5 // pred_fallthru
      _
    %p4701 = scmp.le.s32.totalorder 2, %s17
    // Predicated region
    $region65: #{autoencoder_forward.1} parent=5 // pred_check
      %p4702 = pneg %p4701
    $region66: #{autoencoder_forward.1} parent=5 // pred_check_branch
      %4704 = sbr.rel (%p4702) target = $region68
    $region67: #{autoencoder_forward.1} parent=5 // pred_region
      %s4705 = ssub.s32 %s17, 2
      // Predicated region
      $region69: #{autoencoder_forward.1} parent=67 // pred_check
        %p4706 = pneg %p240
      $region70: #{autoencoder_forward.1} parent=67 // pred_check_branch
        %4708 = sbr.rel (%p4706) target = $region72
      $region71: #{autoencoder_forward.1} parent=67 // pred_region
        %p4709 = scmp.lt.s32.totalorder %s23, 1
        %s4710 = scalar_select %p4709, %s23, 1
        %s4711 = smul.addr %s4710, 2
        %s4712 = smul.addr %s4711, 8
        %s4713 = scalar_lea.vmem %s9, %s4712
      $region72: #{autoencoder_forward.1} parent=67 // pred_fallthru
        _
      // Predicated region
      $region73: #{autoencoder_forward.1} parent=67 // pred_check
        %p4714 = pneg %p266
      $region74: #{autoencoder_forward.1} parent=67 // pred_check_branch
        %4716 = sbr.rel (%p4714) target = $region76
      $region75: #{autoencoder_forward.1} parent=67 // pred_region
        %p4717 = scmp.lt.s32.totalorder %s23, 1
        %s4718 = scalar_select %p4717, %s23, 1
        %s4719 = smul.addr %s4718, 8
        %s4720 = smul.addr %s4719, 8
        %s4721 = scalar_lea.vmem %s10, %s4720
      $region76: #{autoencoder_forward.1} parent=67 // pred_fallthru
        _
    $region68: #{autoencoder_forward.1} parent=5 // pred_fallthru
      _
  $region6: #{autoencoder_forward.1} parent=0 // loop_footer
    %s21 = sadd.s32 1, %s17
  $region7: #{autoencoder_forward.1} parent=0 // loop_footer_branch
    %16 = sbr.rel target = $region3
  $region8: #{autoencoder_forward.1} parent=0 // loop_exit
    _

</llo_original>
